<compile_context>
chip_gen: v5e
topology: v5e:2x2
jax: 0.10.0
libtpu: 0.0.40
codegen_flags: <defaults>
</compile_context>

<pallas_src>
import jax
import jax.numpy as jnp
from jax.experimental import pallas as pl
from jax.experimental.pallas import tpu as pltpu

# ----------------------------- small ViViT config -----------------------------
B = 2            # batch
T = 4            # num frames
C = 3            # channels
H = W = 32       # spatial
TUBELET = (2, 16, 16)        # (kt, kh, kw)  -> stride == kernel (Conv3d patchify)
D = 32           # hidden size
NH = 4           # attention heads
DH = D // NH     # head dim
FF = 64          # intermediate (MLP) size
NUM_LAYERS = 2   # encoder layers (hidden_layers > 0 truncation analogue)
NUM_CLASSES = 1  # classifier replaced with Linear(hidden, 1)
EPS = 1e-6       # layer_norm_eps

KT, KH, KW = TUBELET
NP_T, NP_H, NP_W = T // KT, H // KH, W // KW
NUM_PATCHES = NP_T * NP_H * NP_W
SEQ = NUM_PATCHES + 1        # +1 CLS token
PATCH_DIM = C * KT * KH * KW
M_TOK = B * SEQ              # token rows in the 2-D activation slab

VMEM_SPEC = pl.BlockSpec(memory_space=pltpu.MemorySpace.VMEM)


# ----------------------------- in-kernel helpers -------------------------------
def _ln(x, g, b, eps=EPS):
    """Row-wise LayerNorm; single pass: centered values reused for variance."""
    inv_n = 1.0 / x.shape[-1]
    mean = jnp.sum(x, axis=-1, keepdims=True) * inv_n
    xc = x - mean
    var = jnp.sum(xc * xc, axis=-1, keepdims=True) * inv_n
    return xc * jax.lax.rsqrt(var + eps) * g + b


def _gelu_fast(y):
    """HF FastGELUActivation (gelu_fast), as used by ViViT."""
    return 0.5 * y * (1.0 + jnp.tanh(y * 0.7978845608028654 * (1.0 + 0.044715 * y * y)))


# ------------------------------- Pallas kernels --------------------------------
def _embed_kernel(patches_ref, w_ref, b_ref, cls_ref, pos_ref, o_ref):
    """Tubelet projection + bias + CLS token prepend + positional embedding."""
    emb = jnp.dot(patches_ref[...], w_ref[...],
                  preferred_element_type=jnp.float32) + b_ref[...]      # (B*P, D)
    emb = emb.reshape(B, NUM_PATCHES, D)
    o_ref[:, 0:1, :] = jnp.broadcast_to(cls_ref[...] + pos_ref[:, 0:1, :], (B, 1, D))
    o_ref[:, 1:, :] = emb + pos_ref[:, 1:, :]


def _encoder_kernel(h_in_ref,
                    ln1_g, ln1_b, qkv_w, qkv_b, o_w, o_b,
                    ln2_g, ln2_b, fc1_w, fc1_b, fc2_w, fc2_b,
                    h_out_ref,
                    h_s, qkv_s, ctx_s):
    """One grid step == one full pre-LN transformer layer.

    The residual stream h_s (B*SEQ, D) stays resident in VMEM across the layer
    grid axis; the HBM output is written only on the final layer.
    """
    layer = pl.program_id(0)

    @pl.when(layer == 0)
    def _():
        h_s[...] = h_in_ref[...]

    h = h_s[...]                                                        # (B*SEQ, D)

    # ---------------- self attention ----------------
    x = _ln(h, ln1_g[...], ln1_b[...])
    # Fused QKV projection: one MXU push with N = 3*D instead of three with N = D.
    qkv_s[...] = jnp.dot(x, qkv_w[...],
                         preferred_element_type=jnp.float32) + qkv_b[...]   # (B*SEQ, 3D)

    scale = 1.0 / (DH ** 0.5)
    # All (batch, head) pairs computed inside this single invocation (no grid);
    # context assembled lane-dense into ctx_s (B*SEQ, D).
    for bb in range(B):
        r0, r1 = bb * SEQ, (bb + 1) * SEQ
        for hh in range(NH):
            c0, c1 = hh * DH, (hh + 1) * DH
            q_h = qkv_s[r0:r1, c0:c1]                                   # (SEQ, DH)
            k_h = qkv_s[r0:r1, D + c0:D + c1]
            v_h = qkv_s[r0:r1, 2 * D + c0:2 * D + c1]
            # trans_b-style contraction: no explicit transpose of K.
            s = jax.lax.dot_general(q_h, k_h, (((1,), (1,)), ((), ())),
                                    preferred_element_type=jnp.float32) * scale
            s = s - jnp.max(s, axis=-1, keepdims=True)
            p = jnp.exp(s)
            p = p * pl.reciprocal(jnp.sum(p, axis=-1, keepdims=True), approx=True)
            ctx_s[r0:r1, c0:c1] = jnp.dot(p, v_h, preferred_element_type=jnp.float32)

    attn_out = jnp.dot(ctx_s[...], o_w[...],
                       preferred_element_type=jnp.float32) + o_b[...]
    h = h + attn_out                                                    # residual

    # ---------------- MLP ----------------
    x = _ln(h, ln2_g[...], ln2_b[...])
    y = jnp.dot(x, fc1_w[...], preferred_element_type=jnp.float32) + fc1_b[...]
    y = _gelu_fast(y)
    y = jnp.dot(y, fc2_w[...], preferred_element_type=jnp.float32) + fc2_b[...]
    h = h + y                                                           # residual

    h_s[...] = h
    @pl.when(layer == pl.num_programs(0) - 1)
    def _():
        h_out_ref[...] = h


def _head_kernel(cls_ref, g_ref, b_ref, w_ref, cb_ref, o_ref):
    """Final LayerNorm + classifier Linear(D, NUM_CLASSES) on the CLS rows."""
    x = _ln(cls_ref[...], g_ref[...], b_ref[...])
    o_ref[...] = jnp.dot(x, w_ref[...], preferred_element_type=jnp.float32) + cb_ref[...]


# ------------------------------ pallas_call wrappers ----------------------------
def run_embed(patches, params):
    return pl.pallas_call(
        _embed_kernel,
        out_shape=jax.ShapeDtypeStruct((B, SEQ, D), jnp.float32),
        in_specs=[VMEM_SPEC] * 5,
        out_specs=VMEM_SPEC,
    )(patches,
      params["patch_w"],
      params["patch_b"].reshape(1, D),
      params["cls_token"],
      params["pos_emb"])


_LAYER_PARAM_ORDER = ("ln1_g", "ln1_b", "qkv_w", "qkv_b", "o_w", "o_b",
                      "ln2_g", "ln2_b", "fc1_w", "fc1_b", "fc2_w", "fc2_b")


def run_encoder(h2d, layer_params):
    def stacked_spec(arr):
        _, r, c = arr.shape
        # leading layer axis squeezed out; index_map selects the current layer.
        return pl.BlockSpec((pl.Squeezed(), r, c), lambda l: (l, 0, 0))

    h_spec = pl.BlockSpec((M_TOK, D), lambda l: (0, 0))
    stacked = [layer_params[k] for k in _LAYER_PARAM_ORDER]

    # NOTE(v7x): the layer axis is sequential ("arbitrary"); a batch "parallel" axis
    # for the second TensorCore only pays off at realistic batch/model sizes.
    return pl.pallas_call(
        _encoder_kernel,
        out_shape=jax.ShapeDtypeStruct((M_TOK, D), jnp.float32),
        grid=(NUM_LAYERS,),
        in_specs=[h_spec] + [stacked_spec(a) for a in stacked],
        out_specs=h_spec,
        scratch_shapes=[
            pltpu.VMEM((M_TOK, D), jnp.float32),       # residual-stream carry
            pltpu.VMEM((M_TOK, 3 * D), jnp.float32),   # fused QKV activations
            pltpu.VMEM((M_TOK, D), jnp.float32),       # lane-dense attention context
        ],
        compiler_params=pltpu.CompilerParams(dimension_semantics=("arbitrary",)),
    )(h2d, *stacked)


def run_head(cls_tok, params):
    return pl.pallas_call(
        _head_kernel,
        out_shape=jax.ShapeDtypeStruct((B, NUM_CLASSES), jnp.float32),
        in_specs=[VMEM_SPEC] * 5,
        out_specs=VMEM_SPEC,
    )(cls_tok,
      params["ln_g"].reshape(1, D),
      params["ln_b"].reshape(1, D),
      params["cls_w"],
      params["cls_b"].reshape(1, NUM_CLASSES))


# ------------------------------ model (forward) --------------------------------
@jax.jit
def vivit_forward(pixel_values, params):
    # Tubelet (Conv3d patchify) extraction as reshape/transpose glue.
    # Flattening order per patch is (C, kt, kh, kw); a real HF Conv3d weight
    # (D, C, kt, kh, kw) maps onto patch_w via .reshape(D, -1).T.
    # TODO(synk): at production sizes move this gather into the embed kernel's
    # BlockSpec/index_map so pixel_values is not materialized twice in HBM.
    x = jnp.transpose(pixel_values, (0, 2, 1, 3, 4))                    # (B,C,T,H,W)
    x = x.reshape(B, C, NP_T, KT, NP_H, KH, NP_W, KW)
    x = jnp.transpose(x, (0, 2, 4, 6, 1, 3, 5, 7))                      # (B,T',H',W',C,kt,kh,kw)
    patches = x.reshape(B * NUM_PATCHES, PATCH_DIM)

    h3 = run_embed(patches, params)                                     # (B, SEQ, D)
    h2 = run_encoder(h3.reshape(M_TOK, D), params["layers"])            # (B*SEQ, D)

    # Final LN is row-wise, so applying it only to the CLS rows is equivalent.
    cls_tok = h2.reshape(B, SEQ, D)[:, 0, :]                            # (B, D)
    return run_head(cls_tok, params)                                    # (B, NUM_CLASSES)


# ------------------------------- parameter init --------------------------------
def init_params(key):
    keys = iter(jax.random.split(key, 16))

    def w(shape, scale=0.02):
        return jax.random.normal(next(keys), shape, jnp.float32) * scale

    L = NUM_LAYERS
    return {
        # Conv3d(C, D, kernel=stride=TUBELET) weight flattened to (C*kt*kh*kw, D).
        "patch_w": w((PATCH_DIM, D)),
        "patch_b": jnp.zeros((D,), jnp.float32),
        "cls_token": w((1, 1, D)),
        "pos_emb": w((1, SEQ, D)),
        "ln_g": jnp.ones((D,), jnp.float32),
        "ln_b": jnp.zeros((D,), jnp.float32),
        "cls_w": w((D, NUM_CLASSES)),
        "cls_b": jnp.zeros((NUM_CLASSES,), jnp.float32),
        # Per-layer weights stacked over a leading layer axis so the whole encoder
        # is one pallas_call.  QKV is packed [:, :, 0:D]=Q, [D:2D]=K, [2D:3D]=V,
        # with heads contiguous inside each block (matches HF's per-projection
        # reshape(B, S, NH, DH) head layout).
        "layers": {
            "ln1_g": jnp.ones((L, 1, D), jnp.float32),
            "ln1_b": jnp.zeros((L, 1, D), jnp.float32),
            "qkv_w": w((L, D, 3 * D)),
            "qkv_b": jnp.zeros((L, 1, 3 * D), jnp.float32),
            "o_w": w((L, D, D)),
            "o_b": jnp.zeros((L, 1, D), jnp.float32),
            "ln2_g": jnp.ones((L, 1, D), jnp.float32),
            "ln2_b": jnp.zeros((L, 1, D), jnp.float32),
            "fc1_w": w((L, D, FF)),
            "fc1_b": jnp.zeros((L, 1, FF), jnp.float32),
            "fc2_w": w((L, FF, D)),
            "fc2_b": jnp.zeros((L, 1, D), jnp.float32),
        },
    }


# ------------------------------------ main --------------------------------------
if __name__ == "__main__":
    key = jax.random.PRNGKey(0)
    k_inp, k_par = jax.random.split(key)

    pixel_values = jax.random.normal(k_inp, (B, T, C, H, W), jnp.float32)
    params = init_params(k_par)

    logits = jax.block_until_ready(vivit_forward(pixel_values, params))

    assert logits.shape == (B, NUM_CLASSES), logits.shape
    assert logits.dtype == jnp.float32
    assert bool(jnp.all(jnp.isfinite(logits)))
    print("KERNEL_OK")
</pallas_src>

<mosaic_0001>
module attributes {stable_mosaic.version = 11 : i64} {
  func.func @_embed_kernel(%arg0: memref<16x1536xf32, #tpu.memory_space<vmem>>, %arg1: memref<1536x32xf32, #tpu.memory_space<vmem>>, %arg2: memref<1x32xf32, #tpu.memory_space<vmem>>, %arg3: memref<1x1x32xf32, #tpu.memory_space<vmem>>, %arg4: memref<1x9x32xf32, #tpu.memory_space<vmem>>, %arg5: memref<2x9x32xf32, #tpu.memory_space<vmem>>) attributes {dimension_semantics = [], scalar_prefetch = 0 : i64, scratch_operands = 0 : i64, tpu.core_type = #tpu.core_type<tc>} {
    %c0 = arith.constant 0 : index
    %c0_0 = arith.constant 0 : index
    %0 = vector.load %arg0[%c0, %c0_0] : memref<16x1536xf32, #tpu.memory_space<vmem>>, vector<16x1536xf32>
    %c0_1 = arith.constant 0 : index
    %c0_2 = arith.constant 0 : index
    %1 = vector.load %arg1[%c0_1, %c0_2] : memref<1536x32xf32, #tpu.memory_space<vmem>>, vector<1536x32xf32>
    %cst = arith.constant dense<0.000000e+00> : vector<16x32xf32>
    %2 = tpu.matmul %0, %1, %cst {dimension_numbers = #tpu.dot_dimension_numbers<[1], [0], [0], [1], [0, 0, 1, 1], [], []>} : vector<16x1536xf32>, vector<1536x32xf32>, vector<16x32xf32> -> vector<16x32xf32>
    %c0_3 = arith.constant 0 : index
    %c0_4 = arith.constant 0 : index
    %3 = vector.load %arg2[%c0_3, %c0_4] : memref<1x32xf32, #tpu.memory_space<vmem>>, vector<1x32xf32>
    %4 = vector.broadcast %3 : vector<1x32xf32> to vector<16x32xf32>
    %5 = arith.addf %2, %4 : vector<16x32xf32>
    %6 = vector.shape_cast %5 : vector<16x32xf32> to vector<2x8x32xf32>
    %c0_5 = arith.constant 0 : index
    %c0_6 = arith.constant 0 : index
    %c0_7 = arith.constant 0 : index
    %7 = vector.load %arg3[%c0_5, %c0_6, %c0_7] : memref<1x1x32xf32, #tpu.memory_space<vmem>>, vector<1x1x32xf32>
    %c0_8 = arith.constant 0 : index
    %c0_9 = arith.constant 0 : index
    %c0_10 = arith.constant 0 : index
    %8 = vector.load %arg4[%c0_8, %c0_9, %c0_10] : memref<1x9x32xf32, #tpu.memory_space<vmem>>, vector<1x1x32xf32>
    %9 = arith.addf %7, %8 : vector<1x1x32xf32>
    %10 = vector.shape_cast %9 : vector<1x1x32xf32> to vector<1x1x32xf32>
    %11 = vector.broadcast %10 : vector<1x1x32xf32> to vector<2x1x32xf32>
    %c0_11 = arith.constant 0 : index
    %c0_12 = arith.constant 0 : index
    %c0_13 = arith.constant 0 : index
    %12 = vector.load %arg5[%c0_11, %c0_12, %c0_13] : memref<2x9x32xf32, #tpu.memory_space<vmem>>, vector<2x1x32xf32>
    tpu.vector_store %arg5[%c0_11, %c0_12, %c0_13], %11 {strides = array<i32>} : memref<2x9x32xf32, #tpu.memory_space<vmem>>, vector<2x1x32xf32>,
    %c0_14 = arith.constant 0 : index
    %c1 = arith.constant 1 : index
    %c0_15 = arith.constant 0 : index
    %13 = vector.load %arg4[%c0_14, %c1, %c0_15] : memref<1x9x32xf32, #tpu.memory_space<vmem>>, vector<1x8x32xf32>
    %14 = vector.broadcast %13 : vector<1x8x32xf32> to vector<2x8x32xf32>
    %15 = arith.addf %6, %14 : vector<2x8x32xf32>
    %c0_16 = arith.constant 0 : index
    %c1_17 = arith.constant 1 : index
    %c0_18 = arith.constant 0 : index
    %16 = vector.load %arg5[%c0_16, %c1_17, %c0_18] : memref<2x9x32xf32, #tpu.memory_space<vmem>>, vector<2x8x32xf32>
    tpu.vector_store %arg5[%c0_16, %c1_17, %c0_18], %15 {strides = array<i32>} : memref<2x9x32xf32, #tpu.memory_space<vmem>>, vector<2x8x32xf32>,
    return
  }
}

module attributes {stable_mosaic.version = 11 : i64} {
  func.func @_encoder_kernel(%arg0: i32, %arg1: memref<18x32xf32, #tpu.memory_space<vmem>>, %arg2: memref<1x1x32xf32, #tpu.memory_space<vmem>>, %arg3: memref<1x1x32xf32, #tpu.memory_space<vmem>>, %arg4: memref<1x32x96xf32, #tpu.memory_space<vmem>>, %arg5: memref<1x1x96xf32, #tpu.memory_space<vmem>>, %arg6: memref<1x32x32xf32, #tpu.memory_space<vmem>>, %arg7: memref<1x1x32xf32, #tpu.memory_space<vmem>>, %arg8: memref<1x1x32xf32, #tpu.memory_space<vmem>>, %arg9: memref<1x1x32xf32, #tpu.memory_space<vmem>>, %arg10: memref<1x32x64xf32, #tpu.memory_space<vmem>>, %arg11: memref<1x1x64xf32, #tpu.memory_space<vmem>>, %arg12: memref<1x64x32xf32, #tpu.memory_space<vmem>>, %arg13: memref<1x1x32xf32, #tpu.memory_space<vmem>>, %arg14: memref<18x32xf32, #tpu.memory_space<vmem>>, %arg15: memref<18x32xf32, #tpu.memory_space<vmem>>, %arg16: memref<18x96xf32, #tpu.memory_space<vmem>>, %arg17: memref<18x32xf32, #tpu.memory_space<vmem>>) attributes {dimension_semantics = [#tpu.dimension_semantics<arbitrary>], iteration_bounds = array<i64: 2>, scalar_prefetch = 0 : i64, scratch_operands = 3 : i64, tpu.core_type = #tpu.core_type<tc>, window_params = [{pipeline_mode = #tpu.pipeline_mode<synchronous>, transform_indices = @transform_0, window_bounds = array<i64: 18, 32>}, {transform_indices = @transform_1, window_bounds = array<i64: 1, 1, 32>}, {transform_indices = @transform_2, window_bounds = array<i64: 1, 1, 32>}, {transform_indices = @transform_3, window_bounds = array<i64: 1, 32, 96>}, {transform_indices = @transform_4, window_bounds = array<i64: 1, 1, 96>}, {transform_indices = @transform_5, window_bounds = array<i64: 1, 32, 32>}, {transform_indices = @transform_6, window_bounds = array<i64: 1, 1, 32>}, {transform_indices = @transform_7, window_bounds = array<i64: 1, 1, 32>}, {transform_indices = @transform_8, window_bounds = array<i64: 1, 1, 32>}, {transform_indices = @transform_9, window_bounds = array<i64: 1, 32, 64>}, {transform_indices = @transform_10, window_bounds = array<i64: 1, 1, 64>}, {transform_indices = @transform_11, window_bounds = array<i64: 1, 64, 32>}, {transform_indices = @transform_12, window_bounds = array<i64: 1, 1, 32>}, {pipeline_mode = #tpu.pipeline_mode<synchronous>, transform_indices = @transform_13, window_bounds = array<i64: 18, 32>}]} {
    %c0_i32 = arith.constant 0 : i32
    %0 = arith.cmpi eq, %arg0, %c0_i32 : i32
    %1 = arith.extui %0 : i1 to i32
    %c0_i32_0 = arith.constant 0 : i32
    %2 = arith.cmpi ne, %1, %c0_i32_0 : i32
    scf.if %2 {
      %c0_155 = arith.constant 0 : index
      %c0_156 = arith.constant 0 : index
      %246 = vector.load %arg1[%c0_155, %c0_156] : memref<18x32xf32, #tpu.memory_space<vmem>>, vector<18x32xf32>
      %c0_157 = arith.constant 0 : index
      %c0_158 = arith.constant 0 : index
      %247 = vector.load %arg15[%c0_157, %c0_158] : memref<18x32xf32, #tpu.memory_space<vmem>>, vector<18x32xf32>
      tpu.vector_store %arg15[%c0_157, %c0_158], %246 {strides = array<i32>} : memref<18x32xf32, #tpu.memory_space<vmem>>, vector<18x32xf32>,
    } else {
    }
    %c0 = arith.constant 0 : index
    %c0_1 = arith.constant 0 : index
    %3 = vector.load %arg15[%c0, %c0_1] : memref<18x32xf32, #tpu.memory_space<vmem>>, vector<18x32xf32>
    %c0_2 = arith.constant 0 : index
    %c0_3 = arith.constant 0 : index
    %c0_4 = arith.constant 0 : index
    %4 = vector.load %arg2[%c0_2, %c0_3, %c0_4] : memref<1x1x32xf32, #tpu.memory_space<vmem>>, vector<1x1x32xf32>
    %5 = vector.shape_cast %4 : vector<1x1x32xf32> to vector<1x32xf32>
    %c0_5 = arith.constant 0 : index
    %c0_6 = arith.constant 0 : index
    %c0_7 = arith.constant 0 : index
    %6 = vector.load %arg3[%c0_5, %c0_6, %c0_7] : memref<1x1x32xf32, #tpu.memory_space<vmem>>, vector<1x1x32xf32>
    %7 = vector.shape_cast %6 : vector<1x1x32xf32> to vector<1x32xf32>
    %cst = arith.constant dense<0.000000e+00> : vector<18xf32>
    %8 = vector.multi_reduction <add>, %3, %cst [1] : vector<18x32xf32> to vector<18xf32>
    %9 = vector.shape_cast %8 : vector<18xf32> to vector<18x1xf32>
    %cst_8 = arith.constant 3.125000e-02 : f32
    %10 = vector.broadcast %cst_8 : f32 to vector<18x1xf32>
    %11 = arith.mulf %9, %10 : vector<18x1xf32>
    %12 = vector.broadcast %11 : vector<18x1xf32> to vector<18x32xf32>
    %13 = arith.subf %3, %12 : vector<18x32xf32>
    %14 = arith.mulf %13, %13 : vector<18x32xf32>
    %cst_9 = arith.constant dense<0.000000e+00> : vector<18xf32>
    %15 = vector.multi_reduction <add>, %14, %cst_9 [1] : vector<18x32xf32> to vector<18xf32>
    %16 = vector.shape_cast %15 : vector<18xf32> to vector<18x1xf32>
    %cst_10 = arith.constant 3.125000e-02 : f32
    %17 = vector.broadcast %cst_10 : f32 to vector<18x1xf32>
    %18 = arith.mulf %16, %17 : vector<18x1xf32>
    %cst_11 = arith.constant 9.99999997E-7 : f32
    %19 = vector.broadcast %cst_11 : f32 to vector<18x1xf32>
    %20 = arith.addf %18, %19 : vector<18x1xf32>
    %21 = math.rsqrt %20 : vector<18x1xf32>
    %22 = vector.broadcast %21 : vector<18x1xf32> to vector<18x32xf32>
    %23 = arith.mulf %13, %22 : vector<18x32xf32>
    %24 = vector.broadcast %5 : vector<1x32xf32> to vector<18x32xf32>
    %25 = arith.mulf %23, %24 : vector<18x32xf32>
    %26 = vector.broadcast %7 : vector<1x32xf32> to vector<18x32xf32>
    %27 = arith.addf %25, %26 : vector<18x32xf32>
    %c0_12 = arith.constant 0 : index
    %c0_13 = arith.constant 0 : index
    %c0_14 = arith.constant 0 : index
    %28 = vector.load %arg4[%c0_12, %c0_13, %c0_14] : memref<1x32x96xf32, #tpu.memory_space<vmem>>, vector<1x32x96xf32>
    %29 = vector.shape_cast %28 : vector<1x32x96xf32> to vector<32x96xf32>
    %cst_15 = arith.constant dense<0.000000e+00> : vector<18x96xf32>
    %30 = tpu.matmul %27, %29, %cst_15 {dimension_numbers = #tpu.dot_dimension_numbers<[1], [0], [0], [1], [0, 0, 1, 1], [], []>} : vector<18x32xf32>, vector<32x96xf32>, vector<18x96xf32> -> vector<18x96xf32>
    %c0_16 = arith.constant 0 : index
    %c0_17 = arith.constant 0 : index
    %c0_18 = arith.constant 0 : index
    %31 = vector.load %arg5[%c0_16, %c0_17, %c0_18] : memref<1x1x96xf32, #tpu.memory_space<vmem>>, vector<1x1x96xf32>
    %32 = vector.shape_cast %31 : vector<1x1x96xf32> to vector<1x96xf32>
    %33 = vector.broadcast %32 : vector<1x96xf32> to vector<18x96xf32>
    %34 = arith.addf %30, %33 : vector<18x96xf32>
    %c0_19 = arith.constant 0 : index
    %c0_20 = arith.constant 0 : index
    %35 = vector.load %arg16[%c0_19, %c0_20] : memref<18x96xf32, #tpu.memory_space<vmem>>, vector<18x96xf32>
    tpu.vector_store %arg16[%c0_19, %c0_20], %34 {strides = array<i32>} : memref<18x96xf32, #tpu.memory_space<vmem>>, vector<18x96xf32>,
    %c0_21 = arith.constant 0 : index
    %c0_22 = arith.constant 0 : index
    %36 = vector.load %arg16[%c0_21, %c0_22] : memref<18x96xf32, #tpu.memory_space<vmem>>, vector<9x8xf32>
    %c0_23 = arith.constant 0 : index
    %c32 = arith.constant 32 : index
    %37 = vector.load %arg16[%c0_23, %c32] : memref<18x96xf32, #tpu.memory_space<vmem>>, vector<9x8xf32>
    %c0_24 = arith.constant 0 : index
    %c64 = arith.constant 64 : index
    %38 = vector.load %arg16[%c0_24, %c64] : memref<18x96xf32, #tpu.memory_space<vmem>>, vector<9x8xf32>
    %cst_25 = arith.constant dense<0.000000e+00> : vector<9x9xf32>
    %39 = tpu.matmul %36, %37, %cst_25 {dimension_numbers = #tpu.dot_dimension_numbers<[1], [1], [0], [0], [0, 0, 1, 0], [], []>} : vector<9x8xf32>, vector<9x8xf32>, vector<9x9xf32> -> vector<9x9xf32>
    %cst_26 = arith.constant 0.353553385 : f32
    %40 = vector.broadcast %cst_26 : f32 to vector<9x9xf32>
    %41 = arith.mulf %39, %40 : vector<9x9xf32>
    %cst_27 = arith.constant dense<0xFF800000> : vector<9xf32>
    %42 = vector.multi_reduction <maximumf>, %41, %cst_27 [1] : vector<9x9xf32> to vector<9xf32>
    %43 = vector.shape_cast %42 : vector<9xf32> to vector<9x1xf32>
    %44 = vector.broadcast %43 : vector<9x1xf32> to vector<9x9xf32>
    %45 = arith.subf %41, %44 : vector<9x9xf32>
    %46 = math.exp %45 : vector<9x9xf32>
    %cst_28 = arith.constant dense<0.000000e+00> : vector<9xf32>
    %47 = vector.multi_reduction <add>, %46, %cst_28 [1] : vector<9x9xf32> to vector<9xf32>
    %48 = vector.shape_cast %47 : vector<9xf32> to vector<9x1xf32>
    %49 = tpu.reciprocal %48 {approx = true} : vector<9x1xf32> -> vector<9x1xf32>
    %50 = vector.broadcast %49 : vector<9x1xf32> to vector<9x9xf32>
    %51 = arith.mulf %46, %50 : vector<9x9xf32>
    %cst_29 = arith.constant dense<0.000000e+00> : vector<9x8xf32>
    %52 = tpu.matmul %51, %38, %cst_29 {dimension_numbers = #tpu.dot_dimension_numbers<[1], [0], [0], [1], [0, 0, 1, 1], [], []>} : vector<9x9xf32>, vector<9x8xf32>, vector<9x8xf32> -> vector<9x8xf32>
    %c0_30 = arith.constant 0 : index
    %c0_31 = arith.constant 0 : index
    %53 = vector.load %arg17[%c0_30, %c0_31] : memref<18x32xf32, #tpu.memory_space<vmem>>, vector<9x8xf32>
    tpu.vector_store %arg17[%c0_30, %c0_31], %52 {strides = array<i32>} : memref<18x32xf32, #tpu.memory_space<vmem>>, vector<9x8xf32>,
    %c0_32 = arith.constant 0 : index
    %c8 = arith.constant 8 : index
    %54 = vector.load %arg16[%c0_32, %c8] : memref<18x96xf32, #tpu.memory_space<vmem>>, vector<9x8xf32>
    %c0_33 = arith.constant 0 : index
    %c40 = arith.constant 40 : index
    %55 = vector.load %arg16[%c0_33, %c40] : memref<18x96xf32, #tpu.memory_space<vmem>>, vector<9x8xf32>
    %c0_34 = arith.constant 0 : index
    %c72 = arith.constant 72 : index
    %56 = vector.load %arg16[%c0_34, %c72] : memref<18x96xf32, #tpu.memory_space<vmem>>, vector<9x8xf32>
    %cst_35 = arith.constant dense<0.000000e+00> : vector<9x9xf32>
    %57 = tpu.matmul %54, %55, %cst_35 {dimension_numbers = #tpu.dot_dimension_numbers<[1], [1], [0], [0], [0, 0, 1, 0], [], []>} : vector<9x8xf32>, vector<9x8xf32>, vector<9x9xf32> -> vector<9x9xf32>
    %cst_36 = arith.constant 0.353553385 : f32
    %58 = vector.broadcast %cst_36 : f32 to vector<9x9xf32>
    %59 = arith.mulf %57, %58 : vector<9x9xf32>
    %cst_37 = arith.constant dense<0xFF800000> : vector<9xf32>
    %60 = vector.multi_reduction <maximumf>, %59, %cst_37 [1] : vector<9x9xf32> to vector<9xf32>
    %61 = vector.shape_cast %60 : vector<9xf32> to vector<9x1xf32>
    %62 = vector.broadcast %61 : vector<9x1xf32> to vector<9x9xf32>
    %63 = arith.subf %59, %62 : vector<9x9xf32>
    %64 = math.exp %63 : vector<9x9xf32>
    %cst_38 = arith.constant dense<0.000000e+00> : vector<9xf32>
    %65 = vector.multi_reduction <add>, %64, %cst_38 [1] : vector<9x9xf32> to vector<9xf32>
    %66 = vector.shape_cast %65 : vector<9xf32> to vector<9x1xf32>
    %67 = tpu.reciprocal %66 {approx = true} : vector<9x1xf32> -> vector<9x1xf32>
    %68 = vector.broadcast %67 : vector<9x1xf32> to vector<9x9xf32>
    %69 = arith.mulf %64, %68 : vector<9x9xf32>
    %cst_39 = arith.constant dense<0.000000e+00> : vector<9x8xf32>
    %70 = tpu.matmul %69, %56, %cst_39 {dimension_numbers = #tpu.dot_dimension_numbers<[1], [0], [0], [1], [0, 0, 1, 1], [], []>} : vector<9x9xf32>, vector<9x8xf32>, vector<9x8xf32> -> vector<9x8xf32>
    %c0_40 = arith.constant 0 : index
    %c8_41 = arith.constant 8 : index
    %71 = vector.load %arg17[%c0_40, %c8_41] : memref<18x32xf32, #tpu.memory_space<vmem>>, vector<9x8xf32>
    tpu.vector_store %arg17[%c0_40, %c8_41], %70 {strides = array<i32>} : memref<18x32xf32, #tpu.memory_space<vmem>>, vector<9x8xf32>,
    %c0_42 = arith.constant 0 : index
    %c16 = arith.constant 16 : index
    %72 = vector.load %arg16[%c0_42, %c16] : memref<18x96xf32, #tpu.memory_space<vmem>>, vector<9x8xf32>
    %c0_43 = arith.constant 0 : index
    %c48 = arith.constant 48 : index
    %73 = vector.load %arg16[%c0_43, %c48] : memref<18x96xf32, #tpu.memory_space<vmem>>, vector<9x8xf32>
    %c0_44 = arith.constant 0 : index
    %c80 = arith.constant 80 : index
    %74 = vector.load %arg16[%c0_44, %c80] : memref<18x96xf32, #tpu.memory_space<vmem>>, vector<9x8xf32>
    %cst_45 = arith.constant dense<0.000000e+00> : vector<9x9xf32>
    %75 = tpu.matmul %72, %73, %cst_45 {dimension_numbers = #tpu.dot_dimension_numbers<[1], [1], [0], [0], [0, 0, 1, 0], [], []>} : vector<9x8xf32>, vector<9x8xf32>, vector<9x9xf32> -> vector<9x9xf32>
    %cst_46 = arith.constant 0.353553385 : f32
    %76 = vector.broadcast %cst_46 : f32 to vector<9x9xf32>
    %77 = arith.mulf %75, %76 : vector<9x9xf32>
    %cst_47 = arith.constant dense<0xFF800000> : vector<9xf32>
    %78 = vector.multi_reduction <maximumf>, %77, %cst_47 [1] : vector<9x9xf32> to vector<9xf32>
    %79 = vector.shape_cast %78 : vector<9xf32> to vector<9x1xf32>
    %80 = vector.broadcast %79 : vector<9x1xf32> to vector<9x9xf32>
    %81 = arith.subf %77, %80 : vector<9x9xf32>
    %82 = math.exp %81 : vector<9x9xf32>
    %cst_48 = arith.constant dense<0.000000e+00> : vector<9xf32>
    %83 = vector.multi_reduction <add>, %82, %cst_48 [1] : vector<9x9xf32> to vector<9xf32>
    %84 = vector.shape_cast %83 : vector<9xf32> to vector<9x1xf32>
    %85 = tpu.reciprocal %84 {approx = true} : vector<9x1xf32> -> vector<9x1xf32>
    %86 = vector.broadcast %85 : vector<9x1xf32> to vector<9x9xf32>
    %87 = arith.mulf %82, %86 : vector<9x9xf32>
    %cst_49 = arith.constant dense<0.000000e+00> : vector<9x8xf32>
    %88 = tpu.matmul %87, %74, %cst_49 {dimension_numbers = #tpu.dot_dimension_numbers<[1], [0], [0], [1], [0, 0, 1, 1], [], []>} : vector<9x9xf32>, vector<9x8xf32>, vector<9x8xf32> -> vector<9x8xf32>
    %c0_50 = arith.constant 0 : index
    %c16_51 = arith.constant 16 : index
    %89 = vector.load %arg17[%c0_50, %c16_51] : memref<18x32xf32, #tpu.memory_space<vmem>>, vector<9x8xf32>
    tpu.vector_store %arg17[%c0_50, %c16_51], %88 {strides = array<i32>} : memref<18x32xf32, #tpu.memory_space<vmem>>, vector<9x8xf32>,
    %c0_52 = arith.constant 0 : index
    %c24 = arith.constant 24 : index
    %90 = vector.load %arg16[%c0_52, %c24] : memref<18x96xf32, #tpu.memory_space<vmem>>, vector<9x8xf32>
    %c0_53 = arith.constant 0 : index
    %c56 = arith.constant 56 : index
    %91 = vector.load %arg16[%c0_53, %c56] : memref<18x96xf32, #tpu.memory_space<vmem>>, vector<9x8xf32>
    %c0_54 = arith.constant 0 : index
    %c88 = arith.constant 88 : index
    %92 = vector.load %arg16[%c0_54, %c88] : memref<18x96xf32, #tpu.memory_space<vmem>>, vector<9x8xf32>
    %cst_55 = arith.constant dense<0.000000e+00> : vector<9x9xf32>
    %93 = tpu.matmul %90, %91, %cst_55 {dimension_numbers = #tpu.dot_dimension_numbers<[1], [1], [0], [0], [0, 0, 1, 0], [], []>} : vector<9x8xf32>, vector<9x8xf32>, vector<9x9xf32> -> vector<9x9xf32>
    %cst_56 = arith.constant 0.353553385 : f32
    %94 = vector.broadcast %cst_56 : f32 to vector<9x9xf32>
    %95 = arith.mulf %93, %94 : vector<9x9xf32>
    %cst_57 = arith.constant dense<0xFF800000> : vector<9xf32>
    %96 = vector.multi_reduction <maximumf>, %95, %cst_57 [1] : vector<9x9xf32> to vector<9xf32>
    %97 = vector.shape_cast %96 : vector<9xf32> to vector<9x1xf32>
    %98 = vector.broadcast %97 : vector<9x1xf32> to vector<9x9xf32>
    %99 = arith.subf %95, %98 : vector<9x9xf32>
    %100 = math.exp %99 : vector<9x9xf32>
    %cst_58 = arith.constant dense<0.000000e+00> : vector<9xf32>
    %101 = vector.multi_reduction <add>, %100, %cst_58 [1] : vector<9x9xf32> to vector<9xf32>
    %102 = vector.shape_cast %101 : vector<9xf32> to vector<9x1xf32>
    %103 = tpu.reciprocal %102 {approx = true} : vector<9x1xf32> -> vector<9x1xf32>
    %104 = vector.broadcast %103 : vector<9x1xf32> to vector<9x9xf32>
    %105 = arith.mulf %100, %104 : vector<9x9xf32>
    %cst_59 = arith.constant dense<0.000000e+00> : vector<9x8xf32>
    %106 = tpu.matmul %105, %92, %cst_59 {dimension_numbers = #tpu.dot_dimension_numbers<[1], [0], [0], [1], [0, 0, 1, 1], [], []>} : vector<9x9xf32>, vector<9x8xf32>, vector<9x8xf32> -> vector<9x8xf32>
    %c0_60 = arith.constant 0 : index
    %c24_61 = arith.constant 24 : index
    %107 = vector.load %arg17[%c0_60, %c24_61] : memref<18x32xf32, #tpu.memory_space<vmem>>, vector<9x8xf32>
    tpu.vector_store %arg17[%c0_60, %c24_61], %106 {strides = array<i32>} : memref<18x32xf32, #tpu.memory_space<vmem>>, vector<9x8xf32>,
    %c9 = arith.constant 9 : index
    %c0_62 = arith.constant 0 : index
    %108 = vector.load %arg16[%c9, %c0_62] : memref<18x96xf32, #tpu.memory_space<vmem>>, vector<9x8xf32>
    %c9_63 = arith.constant 9 : index
    %c32_64 = arith.constant 32 : index
    %109 = vector.load %arg16[%c9_63, %c32_64] : memref<18x96xf32, #tpu.memory_space<vmem>>, vector<9x8xf32>
    %c9_65 = arith.constant 9 : index
    %c64_66 = arith.constant 64 : index
    %110 = vector.load %arg16[%c9_65, %c64_66] : memref<18x96xf32, #tpu.memory_space<vmem>>, vector<9x8xf32>
    %cst_67 = arith.constant dense<0.000000e+00> : vector<9x9xf32>
    %111 = tpu.matmul %108, %109, %cst_67 {dimension_numbers = #tpu.dot_dimension_numbers<[1], [1], [0], [0], [0, 0, 1, 0], [], []>} : vector<9x8xf32>, vector<9x8xf32>, vector<9x9xf32> -> vector<9x9xf32>
    %cst_68 = arith.constant 0.353553385 : f32
    %112 = vector.broadcast %cst_68 : f32 to vector<9x9xf32>
    %113 = arith.mulf %111, %112 : vector<9x9xf32>
    %cst_69 = arith.constant dense<0xFF800000> : vector<9xf32>
    %114 = vector.multi_reduction <maximumf>, %113, %cst_69 [1] : vector<9x9xf32> to vector<9xf32>
    %115 = vector.shape_cast %114 : vector<9xf32> to vector<9x1xf32>
    %116 = vector.broadcast %115 : vector<9x1xf32> to vector<9x9xf32>
    %117 = arith.subf %113, %116 : vector<9x9xf32>
    %118 = math.exp %117 : vector<9x9xf32>
    %cst_70 = arith.constant dense<0.000000e+00> : vector<9xf32>
    %119 = vector.multi_reduction <add>, %118, %cst_70 [1] : vector<9x9xf32> to vector<9xf32>
    %120 = vector.shape_cast %119 : vector<9xf32> to vector<9x1xf32>
    %121 = tpu.reciprocal %120 {approx = true} : vector<9x1xf32> -> vector<9x1xf32>
    %122 = vector.broadcast %121 : vector<9x1xf32> to vector<9x9xf32>
    %123 = arith.mulf %118, %122 : vector<9x9xf32>
    %cst_71 = arith.constant dense<0.000000e+00> : vector<9x8xf32>
    %124 = tpu.matmul %123, %110, %cst_71 {dimension_numbers = #tpu.dot_dimension_numbers<[1], [0], [0], [1], [0, 0, 1, 1], [], []>} : vector<9x9xf32>, vector<9x8xf32>, vector<9x8xf32> -> vector<9x8xf32>
    %c9_72 = arith.constant 9 : index
    %c0_73 = arith.constant 0 : index
    %125 = vector.load %arg17[%c9_72, %c0_73] : memref<18x32xf32, #tpu.memory_space<vmem>>, vector<9x8xf32>
    tpu.vector_store %arg17[%c9_72, %c0_73], %124 {strides = array<i32>} : memref<18x32xf32, #tpu.memory_space<vmem>>, vector<9x8xf32>,
    %c9_74 = arith.constant 9 : index
    %c8_75 = arith.constant 8 : index
    %126 = vector.load %arg16[%c9_74, %c8_75] : memref<18x96xf32, #tpu.memory_space<vmem>>, vector<9x8xf32>
    %c9_76 = arith.constant 9 : index
    %c40_77 = arith.constant 40 : index
    %127 = vector.load %arg16[%c9_76, %c40_77] : memref<18x96xf32, #tpu.memory_space<vmem>>, vector<9x8xf32>
    %c9_78 = arith.constant 9 : index
    %c72_79 = arith.constant 72 : index
    %128 = vector.load %arg16[%c9_78, %c72_79] : memref<18x96xf32, #tpu.memory_space<vmem>>, vector<9x8xf32>
    %cst_80 = arith.constant dense<0.000000e+00> : vector<9x9xf32>
    %129 = tpu.matmul %126, %127, %cst_80 {dimension_numbers = #tpu.dot_dimension_numbers<[1], [1], [0], [0], [0, 0, 1, 0], [], []>} : vector<9x8xf32>, vector<9x8xf32>, vector<9x9xf32> -> vector<9x9xf32>
    %cst_81 = arith.constant 0.353553385 : f32
    %130 = vector.broadcast %cst_81 : f32 to vector<9x9xf32>
    %131 = arith.mulf %129, %130 : vector<9x9xf32>
    %cst_82 = arith.constant dense<0xFF800000> : vector<9xf32>
    %132 = vector.multi_reduction <maximumf>, %131, %cst_82 [1] : vector<9x9xf32> to vector<9xf32>
    %133 = vector.shape_cast %132 : vector<9xf32> to vector<9x1xf32>
    %134 = vector.broadcast %133 : vector<9x1xf32> to vector<9x9xf32>
    %135 = arith.subf %131, %134 : vector<9x9xf32>
    %136 = math.exp %135 : vector<9x9xf32>
    %cst_83 = arith.constant dense<0.000000e+00> : vector<9xf32>
    %137 = vector.multi_reduction <add>, %136, %cst_83 [1] : vector<9x9xf32> to vector<9xf32>
    %138 = vector.shape_cast %137 : vector<9xf32> to vector<9x1xf32>
    %139 = tpu.reciprocal %138 {approx = true} : vector<9x1xf32> -> vector<9x1xf32>
    %140 = vector.broadcast %139 : vector<9x1xf32> to vector<9x9xf32>
    %141 = arith.mulf %136, %140 : vector<9x9xf32>
    %cst_84 = arith.constant dense<0.000000e+00> : vector<9x8xf32>
    %142 = tpu.matmul %141, %128, %cst_84 {dimension_numbers = #tpu.dot_dimension_numbers<[1], [0], [0], [1], [0, 0, 1, 1], [], []>} : vector<9x9xf32>, vector<9x8xf32>, vector<9x8xf32> -> vector<9x8xf32>
    %c9_85 = arith.constant 9 : index
    %c8_86 = arith.constant 8 : index
    %143 = vector.load %arg17[%c9_85, %c8_86] : memref<18x32xf32, #tpu.memory_space<vmem>>, vector<9x8xf32>
    tpu.vector_store %arg17[%c9_85, %c8_86], %142 {strides = array<i32>} : memref<18x32xf32, #tpu.memory_space<vmem>>, vector<9x8xf32>,
    %c9_87 = arith.constant 9 : index
    %c16_88 = arith.constant 16 : index
    %144 = vector.load %arg16[%c9_87, %c16_88] : memref<18x96xf32, #tpu.memory_space<vmem>>, vector<9x8xf32>
    %c9_89 = arith.constant 9 : index
    %c48_90 = arith.constant 48 : index
    %145 = vector.load %arg16[%c9_89, %c48_90] : memref<18x96xf32, #tpu.memory_space<vmem>>, vector<9x8xf32>
    %c9_91 = arith.constant 9 : index
    %c80_92 = arith.constant 80 : index
    %146 = vector.load %arg16[%c9_91, %c80_92] : memref<18x96xf32, #tpu.memory_space<vmem>>, vector<9x8xf32>
    %cst_93 = arith.constant dense<0.000000e+00> : vector<9x9xf32>
    %147 = tpu.matmul %144, %145, %cst_93 {dimension_numbers = #tpu.dot_dimension_numbers<[1], [1], [0], [0], [0, 0, 1, 0], [], []>} : vector<9x8xf32>, vector<9x8xf32>, vector<9x9xf32> -> vector<9x9xf32>
    %cst_94 = arith.constant 0.353553385 : f32
    %148 = vector.broadcast %cst_94 : f32 to vector<9x9xf32>
    %149 = arith.mulf %147, %148 : vector<9x9xf32>
    %cst_95 = arith.constant dense<0xFF800000> : vector<9xf32>
    %150 = vector.multi_reduction <maximumf>, %149, %cst_95 [1] : vector<9x9xf32> to vector<9xf32>
    %151 = vector.shape_cast %150 : vector<9xf32> to vector<9x1xf32>
    %152 = vector.broadcast %151 : vector<9x1xf32> to vector<9x9xf32>
    %153 = arith.subf %149, %152 : vector<9x9xf32>
    %154 = math.exp %153 : vector<9x9xf32>
    %cst_96 = arith.constant dense<0.000000e+00> : vector<9xf32>
    %155 = vector.multi_reduction <add>, %154, %cst_96 [1] : vector<9x9xf32> to vector<9xf32>
    %156 = vector.shape_cast %155 : vector<9xf32> to vector<9x1xf32>
    %157 = tpu.reciprocal %156 {approx = true} : vector<9x1xf32> -> vector<9x1xf32>
    %158 = vector.broadcast %157 : vector<9x1xf32> to vector<9x9xf32>
    %159 = arith.mulf %154, %158 : vector<9x9xf32>
    %cst_97 = arith.constant dense<0.000000e+00> : vector<9x8xf32>
    %160 = tpu.matmul %159, %146, %cst_97 {dimension_numbers = #tpu.dot_dimension_numbers<[1], [0], [0], [1], [0, 0, 1, 1], [], []>} : vector<9x9xf32>, vector<9x8xf32>, vector<9x8xf32> -> vector<9x8xf32>
    %c9_98 = arith.constant 9 : index
    %c16_99 = arith.constant 16 : index
    %161 = vector.load %arg17[%c9_98, %c16_99] : memref<18x32xf32, #tpu.memory_space<vmem>>, vector<9x8xf32>
    tpu.vector_store %arg17[%c9_98, %c16_99], %160 {strides = array<i32>} : memref<18x32xf32, #tpu.memory_space<vmem>>, vector<9x8xf32>,
    %c9_100 = arith.constant 9 : index
    %c24_101 = arith.constant 24 : index
    %162 = vector.load %arg16[%c9_100, %c24_101] : memref<18x96xf32, #tpu.memory_space<vmem>>, vector<9x8xf32>
    %c9_102 = arith.constant 9 : index
    %c56_103 = arith.constant 56 : index
    %163 = vector.load %arg16[%c9_102, %c56_103] : memref<18x96xf32, #tpu.memory_space<vmem>>, vector<9x8xf32>
    %c9_104 = arith.constant 9 : index
    %c88_105 = arith.constant 88 : index
    %164 = vector.load %arg16[%c9_104, %c88_105] : memref<18x96xf32, #tpu.memory_space<vmem>>, vector<9x8xf32>
    %cst_106 = arith.constant dense<0.000000e+00> : vector<9x9xf32>
    %165 = tpu.matmul %162, %163, %cst_106 {dimension_numbers = #tpu.dot_dimension_numbers<[1], [1], [0], [0], [0, 0, 1, 0], [], []>} : vector<9x8xf32>, vector<9x8xf32>, vector<9x9xf32> -> vector<9x9xf32>
    %cst_107 = arith.constant 0.353553385 : f32
    %166 = vector.broadcast %cst_107 : f32 to vector<9x9xf32>
    %167 = arith.mulf %165, %166 : vector<9x9xf32>
    %cst_108 = arith.constant dense<0xFF800000> : vector<9xf32>
    %168 = vector.multi_reduction <maximumf>, %167, %cst_108 [1] : vector<9x9xf32> to vector<9xf32>
    %169 = vector.shape_cast %168 : vector<9xf32> to vector<9x1xf32>
    %170 = vector.broadcast %169 : vector<9x1xf32> to vector<9x9xf32>
    %171 = arith.subf %167, %170 : vector<9x9xf32>
    %172 = math.exp %171 : vector<9x9xf32>
    %cst_109 = arith.constant dense<0.000000e+00> : vector<9xf32>
    %173 = vector.multi_reduction <add>, %172, %cst_109 [1] : vector<9x9xf32> to vector<9xf32>
    %174 = vector.shape_cast %173 : vector<9xf32> to vector<9x1xf32>
    %175 = tpu.reciprocal %174 {approx = true} : vector<9x1xf32> -> vector<9x1xf32>
    %176 = vector.broadcast %175 : vector<9x1xf32> to vector<9x9xf32>
    %177 = arith.mulf %172, %176 : vector<9x9xf32>
    %cst_110 = arith.constant dense<0.000000e+00> : vector<9x8xf32>
    %178 = tpu.matmul %177, %164, %cst_110 {dimension_numbers = #tpu.dot_dimension_numbers<[1], [0], [0], [1], [0, 0, 1, 1], [], []>} : vector<9x9xf32>, vector<9x8xf32>, vector<9x8xf32> -> vector<9x8xf32>
    %c9_111 = arith.constant 9 : index
    %c24_112 = arith.constant 24 : index
    %179 = vector.load %arg17[%c9_111, %c24_112] : memref<18x32xf32, #tpu.memory_space<vmem>>, vector<9x8xf32>
    tpu.vector_store %arg17[%c9_111, %c24_112], %178 {strides = array<i32>} : memref<18x32xf32, #tpu.memory_space<vmem>>, vector<9x8xf32>,
    %c0_113 = arith.constant 0 : index
    %c0_114 = arith.constant 0 : index
    %180 = vector.load %arg17[%c0_113, %c0_114] : memref<18x32xf32, #tpu.memory_space<vmem>>, vector<18x32xf32>
    %c0_115 = arith.constant 0 : index
    %c0_116 = arith.constant 0 : index
    %c0_117 = arith.constant 0 : index
    %181 = vector.load %arg6[%c0_115, %c0_116, %c0_117] : memref<1x32x32xf32, #tpu.memory_space<vmem>>, vector<1x32x32xf32>
    %182 = vector.shape_cast %181 : vector<1x32x32xf32> to vector<32x32xf32>
    %cst_118 = arith.constant dense<0.000000e+00> : vector<18x32xf32>
    %183 = tpu.matmul %180, %182, %cst_118 {dimension_numbers = #tpu.dot_dimension_numbers<[1], [0], [0], [1], [0, 0, 1, 1], [], []>} : vector<18x32xf32>, vector<32x32xf32>, vector<18x32xf32> -> vector<18x32xf32>
    %c0_119 = arith.constant 0 : index
    %c0_120 = arith.constant 0 : index
    %c0_121 = arith.constant 0 : index
    %184 = vector.load %arg7[%c0_119, %c0_120, %c0_121] : memref<1x1x32xf32, #tpu.memory_space<vmem>>, vector<1x1x32xf32>
    %185 = vector.shape_cast %184 : vector<1x1x32xf32> to vector<1x32xf32>
    %186 = vector.broadcast %185 : vector<1x32xf32> to vector<18x32xf32>
    %187 = arith.addf %183, %186 : vector<18x32xf32>
    %188 = arith.addf %3, %187 : vector<18x32xf32>
    %c0_122 = arith.constant 0 : index
    %c0_123 = arith.constant 0 : index
    %c0_124 = arith.constant 0 : index
    %189 = vector.load %arg8[%c0_122, %c0_123, %c0_124] : memref<1x1x32xf32, #tpu.memory_space<vmem>>, vector<1x1x32xf32>
    %190 = vector.shape_cast %189 : vector<1x1x32xf32> to vector<1x32xf32>
    %c0_125 = arith.constant 0 : index
    %c0_126 = arith.constant 0 : index
    %c0_127 = arith.constant 0 : index
    %191 = vector.load %arg9[%c0_125, %c0_126, %c0_127] : memref<1x1x32xf32, #tpu.memory_space<vmem>>, vector<1x1x32xf32>
    %192 = vector.shape_cast %191 : vector<1x1x32xf32> to vector<1x32xf32>
    %cst_128 = arith.constant dense<0.000000e+00> : vector<18xf32>
    %193 = vector.multi_reduction <add>, %188, %cst_128 [1] : vector<18x32xf32> to vector<18xf32>
    %194 = vector.shape_cast %193 : vector<18xf32> to vector<18x1xf32>
    %cst_129 = arith.constant 3.125000e-02 : f32
    %195 = vector.broadcast %cst_129 : f32 to vector<18x1xf32>
    %196 = arith.mulf %194, %195 : vector<18x1xf32>
    %197 = vector.broadcast %196 : vector<18x1xf32> to vector<18x32xf32>
    %198 = arith.subf %188, %197 : vector<18x32xf32>
    %199 = arith.mulf %198, %198 : vector<18x32xf32>
    %cst_130 = arith.constant dense<0.000000e+00> : vector<18xf32>
    %200 = vector.multi_reduction <add>, %199, %cst_130 [1] : vector<18x32xf32> to vector<18xf32>
    %201 = vector.shape_cast %200 : vector<18xf32> to vector<18x1xf32>
    %cst_131 = arith.constant 3.125000e-02 : f32
    %202 = vector.broadcast %cst_131 : f32 to vector<18x1xf32>
    %203 = arith.mulf %201, %202 : vector<18x1xf32>
    %cst_132 = arith.constant 9.99999997E-7 : f32
    %204 = vector.broadcast %cst_132 : f32 to vector<18x1xf32>
    %205 = arith.addf %203, %204 : vector<18x1xf32>
    %206 = math.rsqrt %205 : vector<18x1xf32>
    %207 = vector.broadcast %206 : vector<18x1xf32> to vector<18x32xf32>
    %208 = arith.mulf %198, %207 : vector<18x32xf32>
    %209 = vector.broadcast %190 : vector<1x32xf32> to vector<18x32xf32>
    %210 = arith.mulf %208, %209 : vector<18x32xf32>
    %211 = vector.broadcast %192 : vector<1x32xf32> to vector<18x32xf32>
    %212 = arith.addf %210, %211 : vector<18x32xf32>
    %c0_133 = arith.constant 0 : index
    %c0_134 = arith.constant 0 : index
    %c0_135 = arith.constant 0 : index
    %213 = vector.load %arg10[%c0_133, %c0_134, %c0_135] : memref<1x32x64xf32, #tpu.memory_space<vmem>>, vector<1x32x64xf32>
    %214 = vector.shape_cast %213 : vector<1x32x64xf32> to vector<32x64xf32>
    %cst_136 = arith.constant dense<0.000000e+00> : vector<18x64xf32>
    %215 = tpu.matmul %212, %214, %cst_136 {dimension_numbers = #tpu.dot_dimension_numbers<[1], [0], [0], [1], [0, 0, 1, 1], [], []>} : vector<18x32xf32>, vector<32x64xf32>, vector<18x64xf32> -> vector<18x64xf32>
    %c0_137 = arith.constant 0 : index
    %c0_138 = arith.constant 0 : index
    %c0_139 = arith.constant 0 : index
    %216 = vector.load %arg11[%c0_137, %c0_138, %c0_139] : memref<1x1x64xf32, #tpu.memory_space<vmem>>, vector<1x1x64xf32>
    %217 = vector.shape_cast %216 : vector<1x1x64xf32> to vector<1x64xf32>
    %218 = vector.broadcast %217 : vector<1x64xf32> to vector<18x64xf32>
    %219 = arith.addf %215, %218 : vector<18x64xf32>
    %cst_140 = arith.constant 5.000000e-01 : f32
    %220 = vector.broadcast %cst_140 : f32 to vector<18x64xf32>
    %221 = arith.mulf %220, %219 : vector<18x64xf32>
    %cst_141 = arith.constant 0.797884583 : f32
    %222 = vector.broadcast %cst_141 : f32 to vector<18x64xf32>
    %223 = arith.mulf %219, %222 : vector<18x64xf32>
    %cst_142 = arith.constant 4.471500e-02 : f32
    %224 = vector.broadcast %cst_142 : f32 to vector<18x64xf32>
    %225 = arith.mulf %224, %219 : vector<18x64xf32>
    %226 = arith.mulf %225, %219 : vector<18x64xf32>
    %cst_143 = arith.constant 1.000000e+00 : f32
    %227 = vector.broadcast %cst_143 : f32 to vector<18x64xf32>
    %228 = arith.addf %227, %226 : vector<18x64xf32>
    %229 = arith.mulf %223, %228 : vector<18x64xf32>
    %230 = math.tanh %229 : vector<18x64xf32>
    %cst_144 = arith.constant 1.000000e+00 : f32
    %231 = vector.broadcast %cst_144 : f32 to vector<18x64xf32>
    %232 = arith.addf %231, %230 : vector<18x64xf32>
    %233 = arith.mulf %221, %232 : vector<18x64xf32>
    %c0_145 = arith.constant 0 : index
    %c0_146 = arith.constant 0 : index
    %c0_147 = arith.constant 0 : index
    %234 = vector.load %arg12[%c0_145, %c0_146, %c0_147] : memref<1x64x32xf32, #tpu.memory_space<vmem>>, vector<1x64x32xf32>
    %235 = vector.shape_cast %234 : vector<1x64x32xf32> to vector<64x32xf32>
    %cst_148 = arith.constant dense<0.000000e+00> : vector<18x32xf32>
    %236 = tpu.matmul %233, %235, %cst_148 {dimension_numbers = #tpu.dot_dimension_numbers<[1], [0], [0], [1], [0, 0, 1, 1], [], []>} : vector<18x64xf32>, vector<64x32xf32>, vector<18x32xf32> -> vector<18x32xf32>
    %c0_149 = arith.constant 0 : index
    %c0_150 = arith.constant 0 : index
    %c0_151 = arith.constant 0 : index
    %237 = vector.load %arg13[%c0_149, %c0_150, %c0_151] : memref<1x1x32xf32, #tpu.memory_space<vmem>>, vector<1x1x32xf32>
    %238 = vector.shape_cast %237 : vector<1x1x32xf32> to vector<1x32xf32>
    %239 = vector.broadcast %238 : vector<1x32xf32> to vector<18x32xf32>
    %240 = arith.addf %236, %239 : vector<18x32xf32>
    %241 = arith.addf %188, %240 : vector<18x32xf32>
    %c0_152 = arith.constant 0 : index
    %c0_153 = arith.constant 0 : index
    %242 = vector.load %arg15[%c0_152, %c0_153] : memref<18x32xf32, #tpu.memory_space<vmem>>, vector<18x32xf32>
    tpu.vector_store %arg15[%c0_152, %c0_153], %241 {strides = array<i32>} : memref<18x32xf32, #tpu.memory_space<vmem>>, vector<18x32xf32>,
    %c1_i32 = arith.constant 1 : i32
    %243 = arith.cmpi eq, %arg0, %c1_i32 : i32
    %244 = arith.extui %243 : i1 to i32
    %c0_i32_154 = arith.constant 0 : i32
    %245 = arith.cmpi ne, %244, %c0_i32_154 : i32
    scf.if %245 {
      %c0_155 = arith.constant 0 : index
      %c0_156 = arith.constant 0 : index
      %246 = vector.load %arg14[%c0_155, %c0_156] : memref<18x32xf32, #tpu.memory_space<vmem>>, vector<18x32xf32>
      tpu.vector_store %arg14[%c0_155, %c0_156], %241 {strides = array<i32>} : memref<18x32xf32, #tpu.memory_space<vmem>>, vector<18x32xf32>,
    } else {
    }
    return
  }
  func.func @transform_0(%arg0: i32) -> (i32, i32) {
    %c0_i32 = arith.constant 0 : i32
    %c0_i32_0 = arith.constant 0 : i32
    %c0_i32_1 = arith.constant 0 : i32
    return %c0_i32, %c0_i32_0 : i32, i32
  }
  func.func @transform_1(%arg0: i32) -> (i32, i32, i32) {
    %c0_i32 = arith.constant 0 : i32
    %c0_i32_0 = arith.constant 0 : i32
    %c0_i32_1 = arith.constant 0 : i32
    return %arg0, %c0_i32, %c0_i32_0 : i32, i32, i32
  }
  func.func @transform_2(%arg0: i32) -> (i32, i32, i32) {
    %c0_i32 = arith.constant 0 : i32
    %c0_i32_0 = arith.constant 0 : i32
    %c0_i32_1 = arith.constant 0 : i32
    return %arg0, %c0_i32, %c0_i32_0 : i32, i32, i32
  }
  func.func @transform_3(%arg0: i32) -> (i32, i32, i32) {
    %c0_i32 = arith.constant 0 : i32
    %c0_i32_0 = arith.constant 0 : i32
    %c0_i32_1 = arith.constant 0 : i32
    return %arg0, %c0_i32, %c0_i32_0 : i32, i32, i32
  }
  func.func @transform_4(%arg0: i32) -> (i32, i32, i32) {
    %c0_i32 = arith.constant 0 : i32
    %c0_i32_0 = arith.constant 0 : i32
    %c0_i32_1 = arith.constant 0 : i32
    return %arg0, %c0_i32, %c0_i32_0 : i32, i32, i32
  }
  func.func @transform_5(%arg0: i32) -> (i32, i32, i32) {
    %c0_i32 = arith.constant 0 : i32
    %c0_i32_0 = arith.constant 0 : i32
    %c0_i32_1 = arith.constant 0 : i32
    return %arg0, %c0_i32, %c0_i32_0 : i32, i32, i32
  }
  func.func @transform_6(%arg0: i32) -> (i32, i32, i32) {
    %c0_i32 = arith.constant 0 : i32
    %c0_i32_0 = arith.constant 0 : i32
    %c0_i32_1 = arith.constant 0 : i32
    return %arg0, %c0_i32, %c0_i32_0 : i32, i32, i32
  }
  func.func @transform_7(%arg0: i32) -> (i32, i32, i32) {
    %c0_i32 = arith.constant 0 : i32
    %c0_i32_0 = arith.constant 0 : i32
    %c0_i32_1 = arith.constant 0 : i32
    return %arg0, %c0_i32, %c0_i32_0 : i32, i32, i32
  }
  func.func @transform_8(%arg0: i32) -> (i32, i32, i32) {
    %c0_i32 = arith.constant 0 : i32
    %c0_i32_0 = arith.constant 0 : i32
    %c0_i32_1 = arith.constant 0 : i32
    return %arg0, %c0_i32, %c0_i32_0 : i32, i32, i32
  }
  func.func @transform_9(%arg0: i32) -> (i32, i32, i32) {
    %c0_i32 = arith.constant 0 : i32
    %c0_i32_0 = arith.constant 0 : i32
    %c0_i32_1 = arith.constant 0 : i32
    return %arg0, %c0_i32, %c0_i32_0 : i32, i32, i32
  }
  func.func @transform_10(%arg0: i32) -> (i32, i32, i32) {
    %c0_i32 = arith.constant 0 : i32
    %c0_i32_0 = arith.constant 0 : i32
    %c0_i32_1 = arith.constant 0 : i32
    return %arg0, %c0_i32, %c0_i32_0 : i32, i32, i32
  }
  func.func @transform_11(%arg0: i32) -> (i32, i32, i32) {
    %c0_i32 = arith.constant 0 : i32
    %c0_i32_0 = arith.constant 0 : i32
    %c0_i32_1 = arith.constant 0 : i32
    return %arg0, %c0_i32, %c0_i32_0 : i32, i32, i32
  }
  func.func @transform_12(%arg0: i32) -> (i32, i32, i32) {
    %c0_i32 = arith.constant 0 : i32
    %c0_i32_0 = arith.constant 0 : i32
    %c0_i32_1 = arith.constant 0 : i32
    return %arg0, %c0_i32, %c0_i32_0 : i32, i32, i32
  }
  func.func @transform_13(%arg0: i32) -> (i32, i32) {
    %c0_i32 = arith.constant 0 : i32
    %c0_i32_0 = arith.constant 0 : i32
    %c0_i32_1 = arith.constant 0 : i32
    return %c0_i32, %c0_i32_0 : i32, i32
  }
}

module attributes {stable_mosaic.version = 11 : i64} {
  func.func @_head_kernel(%arg0: memref<2x32xf32, #tpu.memory_space<vmem>>, %arg1: memref<1x32xf32, #tpu.memory_space<vmem>>, %arg2: memref<1x32xf32, #tpu.memory_space<vmem>>, %arg3: memref<32x1xf32, #tpu.memory_space<vmem>>, %arg4: memref<1x1xf32, #tpu.memory_space<vmem>>, %arg5: memref<2x1xf32, #tpu.memory_space<vmem>>) attributes {dimension_semantics = [], scalar_prefetch = 0 : i64, scratch_operands = 0 : i64, tpu.core_type = #tpu.core_type<tc>} {
    %c0 = arith.constant 0 : index
    %c0_0 = arith.constant 0 : index
    %0 = vector.load %arg0[%c0, %c0_0] : memref<2x32xf32, #tpu.memory_space<vmem>>, vector<2x32xf32>
    %c0_1 = arith.constant 0 : index
    %c0_2 = arith.constant 0 : index
    %1 = vector.load %arg1[%c0_1, %c0_2] : memref<1x32xf32, #tpu.memory_space<vmem>>, vector<1x32xf32>
    %c0_3 = arith.constant 0 : index
    %c0_4 = arith.constant 0 : index
    %2 = vector.load %arg2[%c0_3, %c0_4] : memref<1x32xf32, #tpu.memory_space<vmem>>, vector<1x32xf32>
    %cst = arith.constant dense<0.000000e+00> : vector<2xf32>
    %3 = vector.multi_reduction <add>, %0, %cst [1] : vector<2x32xf32> to vector<2xf32>
    %4 = vector.shape_cast %3 : vector<2xf32> to vector<2x1xf32>
    %cst_5 = arith.constant 3.125000e-02 : f32
    %5 = vector.broadcast %cst_5 : f32 to vector<2x1xf32>
    %6 = arith.mulf %4, %5 : vector<2x1xf32>
    %7 = vector.broadcast %6 : vector<2x1xf32> to vector<2x32xf32>
    %8 = arith.subf %0, %7 : vector<2x32xf32>
    %9 = arith.mulf %8, %8 : vector<2x32xf32>
    %cst_6 = arith.constant dense<0.000000e+00> : vector<2xf32>
    %10 = vector.multi_reduction <add>, %9, %cst_6 [1] : vector<2x32xf32> to vector<2xf32>
    %11 = vector.shape_cast %10 : vector<2xf32> to vector<2x1xf32>
    %cst_7 = arith.constant 3.125000e-02 : f32
    %12 = vector.broadcast %cst_7 : f32 to vector<2x1xf32>
    %13 = arith.mulf %11, %12 : vector<2x1xf32>
    %cst_8 = arith.constant 9.99999997E-7 : f32
    %14 = vector.broadcast %cst_8 : f32 to vector<2x1xf32>
    %15 = arith.addf %13, %14 : vector<2x1xf32>
    %16 = math.rsqrt %15 : vector<2x1xf32>
    %17 = vector.broadcast %16 : vector<2x1xf32> to vector<2x32xf32>
    %18 = arith.mulf %8, %17 : vector<2x32xf32>
    %19 = vector.broadcast %1 : vector<1x32xf32> to vector<2x32xf32>
    %20 = arith.mulf %18, %19 : vector<2x32xf32>
    %21 = vector.broadcast %2 : vector<1x32xf32> to vector<2x32xf32>
    %22 = arith.addf %20, %21 : vector<2x32xf32>
    %c0_9 = arith.constant 0 : index
    %c0_10 = arith.constant 0 : index
    %23 = vector.load %arg3[%c0_9, %c0_10] : memref<32x1xf32, #tpu.memory_space<vmem>>, vector<32x1xf32>
    %cst_11 = arith.constant dense<0.000000e+00> : vector<2x1xf32>
    %24 = tpu.matmul %22, %23, %cst_11 {dimension_numbers = #tpu.dot_dimension_numbers<[1], [0], [0], [1], [0, 0, 1, 1], [], []>} : vector<2x32xf32>, vector<32x1xf32>, vector<2x1xf32> -> vector<2x1xf32>
    %c0_12 = arith.constant 0 : index
    %c0_13 = arith.constant 0 : index
    %25 = vector.load %arg4[%c0_12, %c0_13] : memref<1x1xf32, #tpu.memory_space<vmem>>, vector<1x1xf32>
    %26 = vector.broadcast %25 : vector<1x1xf32> to vector<2x1xf32>
    %27 = arith.addf %24, %26 : vector<2x1xf32>
    %c0_14 = arith.constant 0 : index
    %c0_15 = arith.constant 0 : index
    %28 = vector.load %arg5[%c0_14, %c0_15] : memref<2x1xf32, #tpu.memory_space<vmem>>, vector<2x1xf32>
    tpu.vector_store %arg5[%c0_14, %c0_15], %27 {strides = array<i32>} : memref<2x1xf32, #tpu.memory_space<vmem>>, vector<2x1xf32>,
    return
  }
}

</mosaic_0001>

<llo_original>
// kernel: vivit_forward.3
$region0: #{vivit_forward.3}
  #allocation0 [shape = 'u32[]', space=smem, size = 0x4, offset = 0x4, fixed_abs, tag = 'smem constant byte address 0x4 - core index']
  #allocation1 [shape = 'u32[72,128]{1,0:T(1,128)}', space=vmem, size = 0x9000, scoped, tag = 'internal scratch']
  %s0 = inlined_call_operand.vmem [shape: f32[16,1536], index: 0, kind: input, shape index: {}]
  %s1 = inlined_call_operand.vmem [shape: f32[1536,32], index: 1, kind: input, shape index: {}]
  %s2 = inlined_call_operand.vmem [shape: f32[1,32], index: 2, kind: input, shape index: {}]
  %s3 = inlined_call_operand.vmem [shape: f32[1,1,32], index: 3, kind: input, shape index: {}]
  %s4 = inlined_call_operand.vmem [shape: f32[1,9,32], index: 4, kind: input, shape index: {}]
  %s5 = inlined_call_operand.vmem [shape: f32[2,9,32], index: 5, kind: output, shape index: {}]
  %s6 = sld [smem:[#allocation0]]
  $region30: #{vivit_forward.3} parent=0
    _
  %s8 = ssub.s32 1, %s6
  %s9 = scalar_select 0, %s8, %s6
  // Predicated region
  $region2: #{vivit_forward.3} parent=0 // pred_check
    _
  $region3: #{vivit_forward.3} parent=0 // pred_check_branch
    %11 = sbr.rel (0) target = $region5
  $region4: #{vivit_forward.3} parent=0 // pred_region
    _
  $region5: #{vivit_forward.3} parent=0 // pred_fallthru
    _
  // Predicated region
  $region6: #{vivit_forward.3} parent=0 // pred_check
    _
  $region7: #{vivit_forward.3} parent=0 // pred_check_branch
    %13 = sbr.rel (0) target = $region9
  $region8: #{vivit_forward.3} parent=0 // pred_region
    _
  $region9: #{vivit_forward.3} parent=0 // pred_fallthru
    _
  // Predicated region
  $region10: #{vivit_forward.3} parent=0 // pred_check
    _
  $region11: #{vivit_forward.3} parent=0 // pred_check_branch
    %15 = sbr.rel (0) target = $region13
  $region12: #{vivit_forward.3} parent=0 // pred_region
    _
  $region13: #{vivit_forward.3} parent=0 // pred_fallthru
    _
  // Predicated region
  $region14: #{vivit_forward.3} parent=0 // pred_check
    _
  $region15: #{vivit_forward.3} parent=0 // pred_check_branch
    %17 = sbr.rel (0) target = $region17
  $region16: #{vivit_forward.3} parent=0 // pred_region
    _
  $region17: #{vivit_forward.3} parent=0 // pred_fallthru
    _
  // Predicated region
  $region18: #{vivit_forward.3} parent=0 // pred_check
    _
  $region19: #{vivit_forward.3} parent=0 // pred_check_branch
    %19 = sbr.rel (0) target = $region21
  $region20: #{vivit_forward.3} parent=0 // pred_region
    _
  $region21: #{vivit_forward.3} parent=0 // pred_fallthru
    _
  %v20 = vld [vmem:[%s0] sm:$0xff]
  %v21 = vld [vmem:[%s0 + $0x8] sm:$0xff]
  %v22 = vld [vmem:[%s0 + $0x10] sm:$0xff]
  %v23 = vld [vmem:[%s0 + $0x18] sm:$0xff]
  %v24 = vld [vmem:[%s0 + $0x20] sm:$0xff]
  %v25 = vld [vmem:[%s0 + $0x28] sm:$0xff]
  %v26 = vld [vmem:[%s0 + $0x30] sm:$0xff]
  %v27 = vld [vmem:[%s0 + $0x38] sm:$0xff]
  %v28 = vld [vmem:[%s0 + $0x40] sm:$0xff]
  %v29 = vld [vmem:[%s0 + $0x48] sm:$0xff]
  %v30 = vld [vmem:[%s0 + $0x50] sm:$0xff]
  %v31 = vld [vmem:[%s0 + $0x58] sm:$0xff]
  %v32 = vld [vmem:[%s0 + $0x60] sm:$0xff]
  %v33 = vld [vmem:[%s0 + $0x68] sm:$0xff]
  %v34 = vld [vmem:[%s0 + $0x70] sm:$0xff]
  %v35 = vld [vmem:[%s0 + $0x78] sm:$0xff]
  %v36 = vld [vmem:[%s0 + $0x80] sm:$0xff]
  %v37 = vld [vmem:[%s0 + $0x88] sm:$0xff]
  %v38 = vld [vmem:[%s0 + $0x90] sm:$0xff]
  %v39 = vld [vmem:[%s0 + $0x98] sm:$0xff]
  %v40 = vld [vmem:[%s0 + $0xa0] sm:$0xff]
  %v41 = vld [vmem:[%s0 + $0xa8] sm:$0xff]
  %v42 = vld [vmem:[%s0 + $0xb0] sm:$0xff]
  %v43 = vld [vmem:[%s0 + $0xb8] sm:$0xff]
  %v44 = vld [vmem:[%s1] sm:$0xff]
  %v45 = vld [vmem:[%s1 + $0x8] sm:$0xff]
  %v46 = vld [vmem:[%s1 + $0x10] sm:$0xff]
  %v47 = vld [vmem:[%s1 + $0x18] sm:$0xff]
  %v48 = vld [vmem:[%s1 + $0x20] sm:$0xff]
  %v49 = vld [vmem:[%s1 + $0x28] sm:$0xff]
  %v50 = vld [vmem:[%s1 + $0x30] sm:$0xff]
  %v51 = vld [vmem:[%s1 + $0x38] sm:$0xff]
  %v52 = vld [vmem:[%s1 + $0x40] sm:$0xff]
  %v53 = vld [vmem:[%s1 + $0x48] sm:$0xff]
  %v54 = vld [vmem:[%s1 + $0x50] sm:$0xff]
  %v55 = vld [vmem:[%s1 + $0x58] sm:$0xff]
  %v56 = vld [vmem:[%s1 + $0x60] sm:$0xff]
  %v57 = vld [vmem:[%s1 + $0x68] sm:$0xff]
  %v58 = vld [vmem:[%s1 + $0x70] sm:$0xff]
  %v59 = vld [vmem:[%s1 + $0x78] sm:$0xff]
  %v60 = vld [vmem:[%s1 + $0x80] sm:$0xff]
  %v61 = vld [vmem:[%s1 + $0x88] sm:$0xff]
  %v62 = vld [vmem:[%s1 + $0x90] sm:$0xff]
  %v63 = vld [vmem:[%s1 + $0x98] sm:$0xff]
  %v64 = vld [vmem:[%s1 + $0xa0] sm:$0xff]
  %v65 = vld [vmem:[%s1 + $0xa8] sm:$0xff]
  %v66 = vld [vmem:[%s1 + $0xb0] sm:$0xff]
  %v67 = vld [vmem:[%s1 + $0xb8] sm:$0xff]
  %v68 = vld [vmem:[%s1 + $0xc0] sm:$0xff]
  %v69 = vld [vmem:[%s1 + $0xc8] sm:$0xff]
  %v70 = vld [vmem:[%s1 + $0xd0] sm:$0xff]
  %v71 = vld [vmem:[%s1 + $0xd8] sm:$0xff]
  %v72 = vld [vmem:[%s1 + $0xe0] sm:$0xff]
  %v73 = vld [vmem:[%s1 + $0xe8] sm:$0xff]
  %v74 = vld [vmem:[%s1 + $0xf0] sm:$0xff]
  %v75 = vld [vmem:[%s1 + $0xf8] sm:$0xff]
  %v76 = vld [vmem:[%s1 + $0x100] sm:$0xff]
  %v77 = vld [vmem:[%s1 + $0x108] sm:$0xff]
  %v78 = vld [vmem:[%s1 + $0x110] sm:$0xff]
  %v79 = vld [vmem:[%s1 + $0x118] sm:$0xff]
  %v80 = vld [vmem:[%s1 + $0x120] sm:$0xff]
  %v81 = vld [vmem:[%s1 + $0x128] sm:$0xff]
  %v82 = vld [vmem:[%s1 + $0x130] sm:$0xff]
  %v83 = vld [vmem:[%s1 + $0x138] sm:$0xff]
  %v84 = vld [vmem:[%s1 + $0x140] sm:$0xff]
  %v85 = vld [vmem:[%s1 + $0x148] sm:$0xff]
  %v86 = vld [vmem:[%s1 + $0x150] sm:$0xff]
  %v87 = vld [vmem:[%s1 + $0x158] sm:$0xff]
  %v88 = vld [vmem:[%s1 + $0x160] sm:$0xff]
  %v89 = vld [vmem:[%s1 + $0x168] sm:$0xff]
  %v90 = vld [vmem:[%s1 + $0x170] sm:$0xff]
  %v91 = vld [vmem:[%s1 + $0x178] sm:$0xff]
  %v92 = vld [vmem:[%s1 + $0x180] sm:$0xff]
  %v93 = vld [vmem:[%s1 + $0x188] sm:$0xff]
  %v94 = vld [vmem:[%s1 + $0x190] sm:$0xff]
  %v95 = vld [vmem:[%s1 + $0x198] sm:$0xff]
  %v96 = vld [vmem:[%s1 + $0x1a0] sm:$0xff]
  %v97 = vld [vmem:[%s1 + $0x1a8] sm:$0xff]
  %v98 = vld [vmem:[%s1 + $0x1b0] sm:$0xff]
  %v99 = vld [vmem:[%s1 + $0x1b8] sm:$0xff]
  %v100 = vld [vmem:[%s1 + $0x1c0] sm:$0xff]
  %v101 = vld [vmem:[%s1 + $0x1c8] sm:$0xff]
  %v102 = vld [vmem:[%s1 + $0x1d0] sm:$0xff]
  %v103 = vld [vmem:[%s1 + $0x1d8] sm:$0xff]
  %v104 = vld [vmem:[%s1 + $0x1e0] sm:$0xff]
  %v105 = vld [vmem:[%s1 + $0x1e8] sm:$0xff]
  %v106 = vld [vmem:[%s1 + $0x1f0] sm:$0xff]
  %v107 = vld [vmem:[%s1 + $0x1f8] sm:$0xff]
  %v108 = vld [vmem:[%s1 + $0x200] sm:$0xff]
  %v109 = vld [vmem:[%s1 + $0x208] sm:$0xff]
  %v110 = vld [vmem:[%s1 + $0x210] sm:$0xff]
  %v111 = vld [vmem:[%s1 + $0x218] sm:$0xff]
  %v112 = vld [vmem:[%s1 + $0x220] sm:$0xff]
  %v113 = vld [vmem:[%s1 + $0x228] sm:$0xff]
  %v114 = vld [vmem:[%s1 + $0x230] sm:$0xff]
  %v115 = vld [vmem:[%s1 + $0x238] sm:$0xff]
  %v116 = vld [vmem:[%s1 + $0x240] sm:$0xff]
  %v117 = vld [vmem:[%s1 + $0x248] sm:$0xff]
  %v118 = vld [vmem:[%s1 + $0x250] sm:$0xff]
  %v119 = vld [vmem:[%s1 + $0x258] sm:$0xff]
  %v120 = vld [vmem:[%s1 + $0x260] sm:$0xff]
  %v121 = vld [vmem:[%s1 + $0x268] sm:$0xff]
  %v122 = vld [vmem:[%s1 + $0x270] sm:$0xff]
  %v123 = vld [vmem:[%s1 + $0x278] sm:$0xff]
  %v124 = vld [vmem:[%s1 + $0x280] sm:$0xff]
  %v125 = vld [vmem:[%s1 + $0x288] sm:$0xff]
  %v126 = vld [vmem:[%s1 + $0x290] sm:$0xff]
  %v127 = vld [vmem:[%s1 + $0x298] sm:$0xff]
  %v128 = vld [vmem:[%s1 + $0x2a0] sm:$0xff]
  %v129 = vld [vmem:[%s1 + $0x2a8] sm:$0xff]
  %v130 = vld [vmem:[%s1 + $0x2b0] sm:$0xff]
  %v131 = vld [vmem:[%s1 + $0x2b8] sm:$0xff]
  %v132 = vld [vmem:[%s1 + $0x2c0] sm:$0xff]
  %v133 = vld [vmem:[%s1 + $0x2c8] sm:$0xff]
  %v134 = vld [vmem:[%s1 + $0x2d0] sm:$0xff]
  %v135 = vld [vmem:[%s1 + $0x2d8] sm:$0xff]
  %v136 = vld [vmem:[%s1 + $0x2e0] sm:$0xff]
  %v137 = vld [vmem:[%s1 + $0x2e8] sm:$0xff]
  %v138 = vld [vmem:[%s1 + $0x2f0] sm:$0xff]
  %v139 = vld [vmem:[%s1 + $0x2f8] sm:$0xff]
  %v140 = vld [vmem:[%s1 + $0x300] sm:$0xff]
  %v141 = vld [vmem:[%s1 + $0x308] sm:$0xff]
  %v142 = vld [vmem:[%s1 + $0x310] sm:$0xff]
  %v143 = vld [vmem:[%s1 + $0x318] sm:$0xff]
  %v144 = vld [vmem:[%s1 + $0x320] sm:$0xff]
  %v145 = vld [vmem:[%s1 + $0x328] sm:$0xff]
  %v146 = vld [vmem:[%s1 + $0x330] sm:$0xff]
  %v147 = vld [vmem:[%s1 + $0x338] sm:$0xff]
  %v148 = vld [vmem:[%s1 + $0x340] sm:$0xff]
  %v149 = vld [vmem:[%s1 + $0x348] sm:$0xff]
  %v150 = vld [vmem:[%s1 + $0x350] sm:$0xff]
  %v151 = vld [vmem:[%s1 + $0x358] sm:$0xff]
  %v152 = vld [vmem:[%s1 + $0x360] sm:$0xff]
  %v153 = vld [vmem:[%s1 + $0x368] sm:$0xff]
  %v154 = vld [vmem:[%s1 + $0x370] sm:$0xff]
  %v155 = vld [vmem:[%s1 + $0x378] sm:$0xff]
  %v156 = vld [vmem:[%s1 + $0x380] sm:$0xff]
  %v157 = vld [vmem:[%s1 + $0x388] sm:$0xff]
  %v158 = vld [vmem:[%s1 + $0x390] sm:$0xff]
  %v159 = vld [vmem:[%s1 + $0x398] sm:$0xff]
  %v160 = vld [vmem:[%s1 + $0x3a0] sm:$0xff]
  %v161 = vld [vmem:[%s1 + $0x3a8] sm:$0xff]
  %v162 = vld [vmem:[%s1 + $0x3b0] sm:$0xff]
  %v163 = vld [vmem:[%s1 + $0x3b8] sm:$0xff]
  %v164 = vld [vmem:[%s1 + $0x3c0] sm:$0xff]
  %v165 = vld [vmem:[%s1 + $0x3c8] sm:$0xff]
  %v166 = vld [vmem:[%s1 + $0x3d0] sm:$0xff]
  %v167 = vld [vmem:[%s1 + $0x3d8] sm:$0xff]
  %v168 = vld [vmem:[%s1 + $0x3e0] sm:$0xff]
  %v169 = vld [vmem:[%s1 + $0x3e8] sm:$0xff]
  %v170 = vld [vmem:[%s1 + $0x3f0] sm:$0xff]
  %v171 = vld [vmem:[%s1 + $0x3f8] sm:$0xff]
  %v172 = vld [vmem:[%s1 + $0x400] sm:$0xff]
  %v173 = vld [vmem:[%s1 + $0x408] sm:$0xff]
  %v174 = vld [vmem:[%s1 + $0x410] sm:$0xff]
  %v175 = vld [vmem:[%s1 + $0x418] sm:$0xff]
  %v176 = vld [vmem:[%s1 + $0x420] sm:$0xff]
  %v177 = vld [vmem:[%s1 + $0x428] sm:$0xff]
  %v178 = vld [vmem:[%s1 + $0x430] sm:$0xff]
  %v179 = vld [vmem:[%s1 + $0x438] sm:$0xff]
  %v180 = vld [vmem:[%s1 + $0x440] sm:$0xff]
  %v181 = vld [vmem:[%s1 + $0x448] sm:$0xff]
  %v182 = vld [vmem:[%s1 + $0x450] sm:$0xff]
  %v183 = vld [vmem:[%s1 + $0x458] sm:$0xff]
  %v184 = vld [vmem:[%s1 + $0x460] sm:$0xff]
  %v185 = vld [vmem:[%s1 + $0x468] sm:$0xff]
  %v186 = vld [vmem:[%s1 + $0x470] sm:$0xff]
  %v187 = vld [vmem:[%s1 + $0x478] sm:$0xff]
  %v188 = vld [vmem:[%s1 + $0x480] sm:$0xff]
  %v189 = vld [vmem:[%s1 + $0x488] sm:$0xff]
  %v190 = vld [vmem:[%s1 + $0x490] sm:$0xff]
  %v191 = vld [vmem:[%s1 + $0x498] sm:$0xff]
  %v192 = vld [vmem:[%s1 + $0x4a0] sm:$0xff]
  %v193 = vld [vmem:[%s1 + $0x4a8] sm:$0xff]
  %v194 = vld [vmem:[%s1 + $0x4b0] sm:$0xff]
  %v195 = vld [vmem:[%s1 + $0x4b8] sm:$0xff]
  %v196 = vld [vmem:[%s1 + $0x4c0] sm:$0xff]
  %v197 = vld [vmem:[%s1 + $0x4c8] sm:$0xff]
  %v198 = vld [vmem:[%s1 + $0x4d0] sm:$0xff]
  %v199 = vld [vmem:[%s1 + $0x4d8] sm:$0xff]
  %v200 = vld [vmem:[%s1 + $0x4e0] sm:$0xff]
  %v201 = vld [vmem:[%s1 + $0x4e8] sm:$0xff]
  %v202 = vld [vmem:[%s1 + $0x4f0] sm:$0xff]
  %v203 = vld [vmem:[%s1 + $0x4f8] sm:$0xff]
  %v204 = vld [vmem:[%s1 + $0x500] sm:$0xff]
  %v205 = vld [vmem:[%s1 + $0x508] sm:$0xff]
  %v206 = vld [vmem:[%s1 + $0x510] sm:$0xff]
  %v207 = vld [vmem:[%s1 + $0x518] sm:$0xff]
  %v208 = vld [vmem:[%s1 + $0x520] sm:$0xff]
  %v209 = vld [vmem:[%s1 + $0x528] sm:$0xff]
  %v210 = vld [vmem:[%s1 + $0x530] sm:$0xff]
  %v211 = vld [vmem:[%s1 + $0x538] sm:$0xff]
  %v212 = vld [vmem:[%s1 + $0x540] sm:$0xff]
  %v213 = vld [vmem:[%s1 + $0x548] sm:$0xff]
  %v214 = vld [vmem:[%s1 + $0x550] sm:$0xff]
  %v215 = vld [vmem:[%s1 + $0x558] sm:$0xff]
  %v216 = vld [vmem:[%s1 + $0x560] sm:$0xff]
  %v217 = vld [vmem:[%s1 + $0x568] sm:$0xff]
  %v218 = vld [vmem:[%s1 + $0x570] sm:$0xff]
  %v219 = vld [vmem:[%s1 + $0x578] sm:$0xff]
  %v220 = vld [vmem:[%s1 + $0x580] sm:$0xff]
  %v221 = vld [vmem:[%s1 + $0x588] sm:$0xff]
  %v222 = vld [vmem:[%s1 + $0x590] sm:$0xff]
  %v223 = vld [vmem:[%s1 + $0x598] sm:$0xff]
  %v224 = vld [vmem:[%s1 + $0x5a0] sm:$0xff]
  %v225 = vld [vmem:[%s1 + $0x5a8] sm:$0xff]
  %v226 = vld [vmem:[%s1 + $0x5b0] sm:$0xff]
  %v227 = vld [vmem:[%s1 + $0x5b8] sm:$0xff]
  %v228 = vld [vmem:[%s1 + $0x5c0] sm:$0xff]
  %v229 = vld [vmem:[%s1 + $0x5c8] sm:$0xff]
  %v230 = vld [vmem:[%s1 + $0x5d0] sm:$0xff]
  %v231 = vld [vmem:[%s1 + $0x5d8] sm:$0xff]
  %v232 = vld [vmem:[%s1 + $0x5e0] sm:$0xff]
  %v233 = vld [vmem:[%s1 + $0x5e8] sm:$0xff]
  %v234 = vld [vmem:[%s1 + $0x5f0] sm:$0xff]
  %v235 = vld [vmem:[%s1 + $0x5f8] sm:$0xff]
  %v236 = vld [vmem:[%s2] sm:$0x1]
  %v238 = vperm.slane %v236, 0
  %240 = vmatpush.msra.mxu0 %v59
  %241 = vmatpush.msra.mxu0 %v58
  %242 = vmatpush.msra.mxu0 %v57
  %243 = vmatpush.msra.mxu0 %v56
  %244 = vmatpush.msra.mxu0 %v55
  %245 = vmatpush.msra.mxu0 %v54
  %246 = vmatpush.msra.mxu0 %v53
  %247 = vmatpush.msra.mxu0 %v52
  %248 = vmatpush.msra.mxu0 %v51
  %249 = vmatpush.msra.mxu0 %v50
  %250 = vmatpush.msra.mxu0 %v49
  %251 = vmatpush.msra.mxu0 %v48
  %252 = vmatpush.msra.mxu0 %v47
  %253 = vmatpush.msra.mxu0 %v46
  %254 = vmatpush.msra.mxu0 %v45
  %255 = vmatpush.msra.mxu0 %v44
  %256 = vmatmul.f32.gmra.mxu0 %v20
  %v257 = vpop.f32.mrf.mxu0
  %v258 = vadd.f32 %v238, %v257
  %259 = vmatmul.f32.gmra.mxu0 %v32
  %v260 = vpop.f32.mrf.mxu0
  %v261 = vadd.f32 %v238, %v260
  %262 = vdwg.mxu0
  %263 = vmatpush.msra.mxu0 %v75
  %264 = vmatpush.msra.mxu0 %v74
  %265 = vmatpush.msra.mxu0 %v73
  %266 = vmatpush.msra.mxu0 %v72
  %267 = vmatpush.msra.mxu0 %v71
  %268 = vmatpush.msra.mxu0 %v70
  %269 = vmatpush.msra.mxu0 %v69
  %270 = vmatpush.msra.mxu0 %v68
  %271 = vmatpush.msra.mxu0 %v67
  %272 = vmatpush.msra.mxu0 %v66
  %273 = vmatpush.msra.mxu0 %v65
  %274 = vmatpush.msra.mxu0 %v64
  %275 = vmatpush.msra.mxu0 %v63
  %276 = vmatpush.msra.mxu0 %v62
  %277 = vmatpush.msra.mxu0 %v61
  %278 = vmatpush.msra.mxu0 %v60
  %279 = vmatmul.f32.gmra.mxu0 %v21
  %v280 = vpop.f32.mrf.mxu0
  %v281 = vadd.f32 %v258, %v280
  %282 = vmatmul.f32.gmra.mxu0 %v33
  %v283 = vpop.f32.mrf.mxu0
  %v284 = vadd.f32 %v261, %v283
  %285 = vdwg.mxu0
  %286 = vmatpush.msra.mxu0 %v91
  %287 = vmatpush.msra.mxu0 %v90
  %288 = vmatpush.msra.mxu0 %v89
  %289 = vmatpush.msra.mxu0 %v88
  %290 = vmatpush.msra.mxu0 %v87
  %291 = vmatpush.msra.mxu0 %v86
  %292 = vmatpush.msra.mxu0 %v85
  %293 = vmatpush.msra.mxu0 %v84
  %294 = vmatpush.msra.mxu0 %v83
  %295 = vmatpush.msra.mxu0 %v82
  %296 = vmatpush.msra.mxu0 %v81
  %297 = vmatpush.msra.mxu0 %v80
  %298 = vmatpush.msra.mxu0 %v79
  %299 = vmatpush.msra.mxu0 %v78
  %300 = vmatpush.msra.mxu0 %v77
  %301 = vmatpush.msra.mxu0 %v76
  %302 = vmatmul.f32.gmra.mxu0 %v22
  %v303 = vpop.f32.mrf.mxu0
  %v304 = vadd.f32 %v281, %v303
  %305 = vmatmul.f32.gmra.mxu0 %v34
  %v306 = vpop.f32.mrf.mxu0
  %v307 = vadd.f32 %v284, %v306
  %308 = vdwg.mxu0
  %309 = vmatpush.msra.mxu0 %v107
  %310 = vmatpush.msra.mxu0 %v106
  %311 = vmatpush.msra.mxu0 %v105
  %312 = vmatpush.msra.mxu0 %v104
  %313 = vmatpush.msra.mxu0 %v103
  %314 = vmatpush.msra.mxu0 %v102
  %315 = vmatpush.msra.mxu0 %v101
  %316 = vmatpush.msra.mxu0 %v100
  %317 = vmatpush.msra.mxu0 %v99
  %318 = vmatpush.msra.mxu0 %v98
  %319 = vmatpush.msra.mxu0 %v97
  %320 = vmatpush.msra.mxu0 %v96
  %321 = vmatpush.msra.mxu0 %v95
  %322 = vmatpush.msra.mxu0 %v94
  %323 = vmatpush.msra.mxu0 %v93
  %324 = vmatpush.msra.mxu0 %v92
  %325 = vmatmul.f32.gmra.mxu0 %v23
  %v326 = vpop.f32.mrf.mxu0
  %v327 = vadd.f32 %v304, %v326
  %328 = vmatmul.f32.gmra.mxu0 %v35
  %v329 = vpop.f32.mrf.mxu0
  %v330 = vadd.f32 %v307, %v329
  %331 = vdwg.mxu0
  %332 = vmatpush.msra.mxu0 %v123
  %333 = vmatpush.msra.mxu0 %v122
  %334 = vmatpush.msra.mxu0 %v121
  %335 = vmatpush.msra.mxu0 %v120
  %336 = vmatpush.msra.mxu0 %v119
  %337 = vmatpush.msra.mxu0 %v118
  %338 = vmatpush.msra.mxu0 %v117
  %339 = vmatpush.msra.mxu0 %v116
  %340 = vmatpush.msra.mxu0 %v115
  %341 = vmatpush.msra.mxu0 %v114
  %342 = vmatpush.msra.mxu0 %v113
  %343 = vmatpush.msra.mxu0 %v112
  %344 = vmatpush.msra.mxu0 %v111
  %345 = vmatpush.msra.mxu0 %v110
  %346 = vmatpush.msra.mxu0 %v109
  %347 = vmatpush.msra.mxu0 %v108
  %348 = vmatmul.f32.gmra.mxu0 %v24
  %v349 = vpop.f32.mrf.mxu0
  %v350 = vadd.f32 %v327, %v349
  %351 = vmatmul.f32.gmra.mxu0 %v36
  %v352 = vpop.f32.mrf.mxu0
  %v353 = vadd.f32 %v330, %v352
  %354 = vdwg.mxu0
  %355 = vmatpush.msra.mxu0 %v139
  %356 = vmatpush.msra.mxu0 %v138
  %357 = vmatpush.msra.mxu0 %v137
  %358 = vmatpush.msra.mxu0 %v136
  %359 = vmatpush.msra.mxu0 %v135
  %360 = vmatpush.msra.mxu0 %v134
  %361 = vmatpush.msra.mxu0 %v133
  %362 = vmatpush.msra.mxu0 %v132
  %363 = vmatpush.msra.mxu0 %v131
  %364 = vmatpush.msra.mxu0 %v130
  %365 = vmatpush.msra.mxu0 %v129
  %366 = vmatpush.msra.mxu0 %v128
  %367 = vmatpush.msra.mxu0 %v127
  %368 = vmatpush.msra.mxu0 %v126
  %369 = vmatpush.msra.mxu0 %v125
  %370 = vmatpush.msra.mxu0 %v124
  %371 = vmatmul.f32.gmra.mxu0 %v25
  %v372 = vpop.f32.mrf.mxu0
  %v373 = vadd.f32 %v350, %v372
  %374 = vmatmul.f32.gmra.mxu0 %v37
  %v375 = vpop.f32.mrf.mxu0
  %v376 = vadd.f32 %v353, %v375
  %377 = vdwg.mxu0
  %378 = vmatpush.msra.mxu0 %v155
  %379 = vmatpush.msra.mxu0 %v154
  %380 = vmatpush.msra.mxu0 %v153
  %381 = vmatpush.msra.mxu0 %v152
  %382 = vmatpush.msra.mxu0 %v151
  %383 = vmatpush.msra.mxu0 %v150
  %384 = vmatpush.msra.mxu0 %v149
  %385 = vmatpush.msra.mxu0 %v148
  %386 = vmatpush.msra.mxu0 %v147
  %387 = vmatpush.msra.mxu0 %v146
  %388 = vmatpush.msra.mxu0 %v145
  %389 = vmatpush.msra.mxu0 %v144
  %390 = vmatpush.msra.mxu0 %v143
  %391 = vmatpush.msra.mxu0 %v142
  %392 = vmatpush.msra.mxu0 %v141
  %393 = vmatpush.msra.mxu0 %v140
  %394 = vmatmul.f32.gmra.mxu0 %v26
  %v395 = vpop.f32.mrf.mxu0
  %v396 = vadd.f32 %v373, %v395
  %397 = vmatmul.f32.gmra.mxu0 %v38
  %v398 = vpop.f32.mrf.mxu0
  %v399 = vadd.f32 %v376, %v398
  %400 = vdwg.mxu0
  %401 = vmatpush.msra.mxu0 %v171
  %402 = vmatpush.msra.mxu0 %v170
  %403 = vmatpush.msra.mxu0 %v169
  %404 = vmatpush.msra.mxu0 %v168
  %405 = vmatpush.msra.mxu0 %v167
  %406 = vmatpush.msra.mxu0 %v166
  %407 = vmatpush.msra.mxu0 %v165
  %408 = vmatpush.msra.mxu0 %v164
  %409 = vmatpush.msra.mxu0 %v163
  %410 = vmatpush.msra.mxu0 %v162
  %411 = vmatpush.msra.mxu0 %v161
  %412 = vmatpush.msra.mxu0 %v160
  %413 = vmatpush.msra.mxu0 %v159
  %414 = vmatpush.msra.mxu0 %v158
  %415 = vmatpush.msra.mxu0 %v157
  %416 = vmatpush.msra.mxu0 %v156
  %417 = vmatmul.f32.gmra.mxu0 %v27
  %v418 = vpop.f32.mrf.mxu0
  %v419 = vadd.f32 %v396, %v418
  %420 = vmatmul.f32.gmra.mxu0 %v39
  %v421 = vpop.f32.mrf.mxu0
  %v422 = vadd.f32 %v399, %v421
  %423 = vdwg.mxu0
  %424 = vmatpush.msra.mxu0 %v187
  %425 = vmatpush.msra.mxu0 %v186
  %426 = vmatpush.msra.mxu0 %v185
  %427 = vmatpush.msra.mxu0 %v184
  %428 = vmatpush.msra.mxu0 %v183
  %429 = vmatpush.msra.mxu0 %v182
  %430 = vmatpush.msra.mxu0 %v181
  %431 = vmatpush.msra.mxu0 %v180
  %432 = vmatpush.msra.mxu0 %v179
  %433 = vmatpush.msra.mxu0 %v178
  %434 = vmatpush.msra.mxu0 %v177
  %435 = vmatpush.msra.mxu0 %v176
  %436 = vmatpush.msra.mxu0 %v175
  %437 = vmatpush.msra.mxu0 %v174
  %438 = vmatpush.msra.mxu0 %v173
  %439 = vmatpush.msra.mxu0 %v172
  %440 = vmatmul.f32.gmra.mxu0 %v28
  %v441 = vpop.f32.mrf.mxu0
  %v442 = vadd.f32 %v419, %v441
  %443 = vmatmul.f32.gmra.mxu0 %v40
  %v444 = vpop.f32.mrf.mxu0
  %v445 = vadd.f32 %v422, %v444
  %446 = vdwg.mxu0
  %447 = vmatpush.msra.mxu0 %v203
  %448 = vmatpush.msra.mxu0 %v202
  %449 = vmatpush.msra.mxu0 %v201
  %450 = vmatpush.msra.mxu0 %v200
  %451 = vmatpush.msra.mxu0 %v199
  %452 = vmatpush.msra.mxu0 %v198
  %453 = vmatpush.msra.mxu0 %v197
  %454 = vmatpush.msra.mxu0 %v196
  %455 = vmatpush.msra.mxu0 %v195
  %456 = vmatpush.msra.mxu0 %v194
  %457 = vmatpush.msra.mxu0 %v193
  %458 = vmatpush.msra.mxu0 %v192
  %459 = vmatpush.msra.mxu0 %v191
  %460 = vmatpush.msra.mxu0 %v190
  %461 = vmatpush.msra.mxu0 %v189
  %462 = vmatpush.msra.mxu0 %v188
  %463 = vmatmul.f32.gmra.mxu0 %v29
  %v464 = vpop.f32.mrf.mxu0
  %v465 = vadd.f32 %v442, %v464
  %466 = vmatmul.f32.gmra.mxu0 %v41
  %v467 = vpop.f32.mrf.mxu0
  %v468 = vadd.f32 %v445, %v467
  %469 = vdwg.mxu0
  %470 = vmatpush.msra.mxu0 %v219
  %471 = vmatpush.msra.mxu0 %v218
  %472 = vmatpush.msra.mxu0 %v217
  %473 = vmatpush.msra.mxu0 %v216
  %474 = vmatpush.msra.mxu0 %v215
  %475 = vmatpush.msra.mxu0 %v214
  %476 = vmatpush.msra.mxu0 %v213
  %477 = vmatpush.msra.mxu0 %v212
  %478 = vmatpush.msra.mxu0 %v211
  %479 = vmatpush.msra.mxu0 %v210
  %480 = vmatpush.msra.mxu0 %v209
  %481 = vmatpush.msra.mxu0 %v208
  %482 = vmatpush.msra.mxu0 %v207
  %483 = vmatpush.msra.mxu0 %v206
  %484 = vmatpush.msra.mxu0 %v205
  %485 = vmatpush.msra.mxu0 %v204
  %486 = vmatmul.f32.gmra.mxu0 %v30
  %v487 = vpop.f32.mrf.mxu0
  %v488 = vadd.f32 %v465, %v487
  %489 = vmatmul.f32.gmra.mxu0 %v42
  %v490 = vpop.f32.mrf.mxu0
  %v491 = vadd.f32 %v468, %v490
  %492 = vdwg.mxu0
  %493 = vmatpush.msra.mxu0 %v235
  %494 = vmatpush.msra.mxu0 %v234
  %495 = vmatpush.msra.mxu0 %v233
  %496 = vmatpush.msra.mxu0 %v232
  %497 = vmatpush.msra.mxu0 %v231
  %498 = vmatpush.msra.mxu0 %v230
  %499 = vmatpush.msra.mxu0 %v229
  %500 = vmatpush.msra.mxu0 %v228
  %501 = vmatpush.msra.mxu0 %v227
  %502 = vmatpush.msra.mxu0 %v226
  %503 = vmatpush.msra.mxu0 %v225
  %504 = vmatpush.msra.mxu0 %v224
  %505 = vmatpush.msra.mxu0 %v223
  %506 = vmatpush.msra.mxu0 %v222
  %507 = vmatpush.msra.mxu0 %v221
  %508 = vmatpush.msra.mxu0 %v220
  %509 = vmatmul.f32.gmra.mxu0 %v31
  %v510 = vpop.f32.mrf.mxu0
  %v511 = vadd.f32 %v488, %v510
  %512 = vmatmul.f32.gmra.mxu0 %v43
  %v513 = vpop.f32.mrf.mxu0
  %v514 = vadd.f32 %v491, %v513
  %515 = vdwg.mxu0
  %v516 = vld [vmem:[%s3] sm:$0x1]
  %v517 = vld [vmem:[%s4] sm:$0x1]
  %v518 = vadd.f32 %v516, %v517
  %vm519 = vcmask 253952
  %520 = vst.msk [vmem:[%s5] sm:$0x1] %vm519, %v518
  %521 = vst.msk [vmem:[%s5 + $0x10] sm:$0x1] %vm519, %v518
  %v522 = vld [vmem:[%s4 + $0x1] sm:$0xff]
  %v523 = vadd.f32 %v511, %v522
  %v524 = vadd.f32 %v514, %v522
  %vm525 = vcmask 261120
  %526 = vst.msk [vmem:[%s5 + $0x1] sm:$0xff] %vm525, %v523
  %527 = vst.msk [vmem:[%s5 + $0x11] sm:$0xff] %vm525, %v524
  // Predicated region
  $region22: #{vivit_forward.3} parent=0 // pred_check
    _
  $region23: #{vivit_forward.3} parent=0 // pred_check_branch
    %529 = sbr.rel (0) target = $region25
  $region24: #{vivit_forward.3} parent=0 // pred_region
    _
  $region25: #{vivit_forward.3} parent=0 // pred_fallthru
    _
  // Predicated region
  $region26: #{vivit_forward.3} parent=0 // pred_check
    _
  $region27: #{vivit_forward.3} parent=0 // pred_check_branch
    %531 = sbr.rel (0) target = $region29
  $region28: #{vivit_forward.3} parent=0 // pred_region
    _
  $region29: #{vivit_forward.3} parent=0 // pred_fallthru
    _

// kernel: vivit_forward.4
$region0: #{vivit_forward.4}
  #allocation0 [shape = 'u32[]', space=smem, size = 0x4, offset = 0x4, fixed_abs, tag = 'smem constant byte address 0x4 - core index']
  #allocation1 [shape = 'u32[72,128]{1,0:T(1,128)}', space=vmem, size = 0x9000, scoped, tag = 'internal scratch']
  #allocation2 [shape = 'f32[18,32]{1,0:T(8,128)}', space=vmem, size = 0x3000, scoped, tag = 'scratch operand']
  #allocation3 [shape = 'f32[18,96]{1,0:T(8,128)}', space=vmem, size = 0x3000, scoped, tag = 'scratch operand']
  #allocation4 [shape = 'f32[18,32]{1,0:T(8,128)}', space=vmem, size = 0x3000, scoped, tag = 'scratch operand']
  %s0 = inlined_call_operand.vmem [shape: f32[18,32], index: 0, kind: input, shape index: {}]
  %s1 = inlined_call_operand.vmem [shape: f32[2,1,32], index: 1, kind: input, shape index: {}]
  %s2 = inlined_call_operand.vmem [shape: f32[2,1,32], index: 2, kind: input, shape index: {}]
  %s3 = inlined_call_operand.vmem [shape: f32[2,32,96], index: 3, kind: input, shape index: {}]
  %s4 = inlined_call_operand.vmem [shape: f32[2,1,96], index: 4, kind: input, shape index: {}]
  %s5 = inlined_call_operand.vmem [shape: f32[2,32,32], index: 5, kind: input, shape index: {}]
  %s6 = inlined_call_operand.vmem [shape: f32[2,1,32], index: 6, kind: input, shape index: {}]
  %s7 = inlined_call_operand.vmem [shape: f32[2,1,32], index: 7, kind: input, shape index: {}]
  %s8 = inlined_call_operand.vmem [shape: f32[2,1,32], index: 8, kind: input, shape index: {}]
  %s9 = inlined_call_operand.vmem [shape: f32[2,32,64], index: 9, kind: input, shape index: {}]
  %s10 = inlined_call_operand.vmem [shape: f32[2,1,64], index: 10, kind: input, shape index: {}]
  %s11 = inlined_call_operand.vmem [shape: f32[2,64,32], index: 11, kind: input, shape index: {}]
  %s12 = inlined_call_operand.vmem [shape: f32[2,1,32], index: 12, kind: input, shape index: {}]
  %s13 = inlined_call_operand.vmem [shape: f32[18,32], index: 13, kind: output, shape index: {}]
  %s14 = sld [smem:[#allocation0]]
  $region93: #{vivit_forward.4} parent=0
    _
  %s16 = ssub.s32 1, %s14
  %s17 = scalar_select 0, %s16, %s14
  loop: start=0, step=1, limit=4
  $region2: #{vivit_forward.4} parent=0 // loop_pre_header
    _
  $region3: #{vivit_forward.4} parent=0 // loop_header
    %s19 = sphi 0, %s23
    %p20 = scmp.ge.s32.totalorder %s19, 4
    %s27 = sphi 0, %s27
    %s29 = sphi 0, %s27
    %s30 = sphi 0, %s29
    %s44 = sphi 0, %s30
    %s50 = sphi 0, %s52
    %s53 = sphi 0, %s50
    %s54 = sphi 0, %s53
    %s70 = sphi 0, %s54
    %s76 = sphi 0, %s78
    %s79 = sphi 0, %s76
    %s80 = sphi 0, %s79
    %s96 = sphi 0, %s80
    %s102 = sphi 0, %s104
    %s105 = sphi 0, %s102
    %s106 = sphi 0, %s105
    %s122 = sphi 0, %s106
    %s128 = sphi 0, %s130
    %s131 = sphi 0, %s128
    %s132 = sphi 0, %s131
    %s148 = sphi 0, %s132
    %s154 = sphi 0, %s156
    %s157 = sphi 0, %s154
    %s158 = sphi 0, %s157
    %s174 = sphi 0, %s158
    %s180 = sphi 0, %s182
    %s183 = sphi 0, %s180
    %s184 = sphi 0, %s183
    %s200 = sphi 0, %s184
    %s206 = sphi 0, %s208
    %s209 = sphi 0, %s206
    %s210 = sphi 0, %s209
    %s226 = sphi 0, %s210
    %s232 = sphi 0, %s234
    %s235 = sphi 0, %s232
    %s236 = sphi 0, %s235
    %s252 = sphi 0, %s236
    %s258 = sphi 0, %s260
    %s261 = sphi 0, %s258
    %s262 = sphi 0, %s261
    %s278 = sphi 0, %s262
    %s284 = sphi 0, %s286
    %s287 = sphi 0, %s284
    %s288 = sphi 0, %s287
    %s304 = sphi 0, %s288
    %s310 = sphi 0, %s312
    %s313 = sphi 0, %s310
    %s314 = sphi 0, %s313
    %s330 = sphi 0, %s314
    %s336 = sphi 0, %s338
    %s339 = sphi 0, %s336
    %s340 = sphi 0, %s339
    %s356 = sphi 0, %s340
    %s360 = sphi 0, %s360
    %s362 = sphi 0, %s360
    %s363 = sphi 0, %s362
    %s377 = sphi 0, %s363
  $region4: #{vivit_forward.4} parent=0 // loop_header_branch
    %22 = sbr.rel (%p20) target = $region8
  $region5: #{vivit_forward.4} parent=0 // loop_body
    %s24 = ssub.s32 %s19, 1
    %s25 = ssub.s32 %s19, 2
    %s26 = sadd.s32 %s19, 1
    %s28 = sadd.s32 %s27, 1
    %p31 = scmp.eq.s32.totalorder %s19, 1
    %p32 = scmp.ne.s32.totalorder %s27, %s29
    %p33 = scmp.eq.s32.totalorder %s19, 0
    %p34 = por %p32, %p33
    %p35 = scmp.ne.s32.totalorder %s27, %s29
    %p36 = scmp.eq.s32.totalorder %s24, 1
    %p37 = por %p35, %p36
    %p38 = scmp.ne.s32.totalorder %s29, %s30
    %p39 = scmp.eq.s32.totalorder %s24, 0
    %p40 = por %p38, %p39
    %p41 = scmp.ne.s32.totalorder %s29, %s30
    %p42 = scmp.eq.s32.totalorder %s25, 1
    %p43 = por %p41, %p42
    %p45 = scmp.ne.s32.totalorder %s30, %s44
    %p46 = scmp.eq.s32.totalorder %s25, 0
    %p47 = por %p45, %p46
    %s48 = ssub.s32 %s19, %s26
    %p49 = scmp.eq.s32.totalorder %s48, 0
    %s51 = sadd.s32 %s50, 1
    %s52 = scalar_select %p49, %s50, %s51
    %p55 = pneg %p49
    %p56 = scmp.eq.s32.totalorder %s19, 1
    %p57 = por %p55, %p56
    %p58 = scmp.ne.s32.totalorder %s50, %s53
    %p59 = scmp.eq.s32.totalorder %s19, 0
    %p60 = por %p58, %p59
    %p61 = scmp.ne.s32.totalorder %s50, %s53
    %p62 = scmp.eq.s32.totalorder %s24, 1
    %p63 = por %p61, %p62
    %p64 = scmp.ne.s32.totalorder %s53, %s54
    %p65 = scmp.eq.s32.totalorder %s24, 0
    %p66 = por %p64, %p65
    %p67 = scmp.ne.s32.totalorder %s53, %s54
    %p68 = scmp.eq.s32.totalorder %s25, 1
    %p69 = por %p67, %p68
    %p71 = scmp.ne.s32.totalorder %s54, %s70
    %p72 = scmp.eq.s32.totalorder %s25, 0
    %p73 = por %p71, %p72
    %s74 = ssub.s32 %s19, %s26
    %p75 = scmp.eq.s32.totalorder %s74, 0
    %s77 = sadd.s32 %s76, 1
    %s78 = scalar_select %p75, %s76, %s77
    %p81 = pneg %p75
    %p82 = scmp.eq.s32.totalorder %s19, 1
    %p83 = por %p81, %p82
    %p84 = scmp.ne.s32.totalorder %s76, %s79
    %p85 = scmp.eq.s32.totalorder %s19, 0
    %p86 = por %p84, %p85
    %p87 = scmp.ne.s32.totalorder %s76, %s79
    %p88 = scmp.eq.s32.totalorder %s24, 1
    %p89 = por %p87, %p88
    %p90 = scmp.ne.s32.totalorder %s79, %s80
    %p91 = scmp.eq.s32.totalorder %s24, 0
    %p92 = por %p90, %p91
    %p93 = scmp.ne.s32.totalorder %s79, %s80
    %p94 = scmp.eq.s32.totalorder %s25, 1
    %p95 = por %p93, %p94
    %p97 = scmp.ne.s32.totalorder %s80, %s96
    %p98 = scmp.eq.s32.totalorder %s25, 0
    %p99 = por %p97, %p98
    %s100 = ssub.s32 %s19, %s26
    %p101 = scmp.eq.s32.totalorder %s100, 0
    %s103 = sadd.s32 %s102, 1
    %s104 = scalar_select %p101, %s102, %s103
    %p107 = pneg %p101
    %p108 = scmp.eq.s32.totalorder %s19, 1
    %p109 = por %p107, %p108
    %p110 = scmp.ne.s32.totalorder %s102, %s105
    %p111 = scmp.eq.s32.totalorder %s19, 0
    %p112 = por %p110, %p111
    %p113 = scmp.ne.s32.totalorder %s102, %s105
    %p114 = scmp.eq.s32.totalorder %s24, 1
    %p115 = por %p113, %p114
    %p116 = scmp.ne.s32.totalorder %s105, %s106
    %p117 = scmp.eq.s32.totalorder %s24, 0
    %p118 = por %p116, %p117
    %p119 = scmp.ne.s32.totalorder %s105, %s106
    %p120 = scmp.eq.s32.totalorder %s25, 1
    %p121 = por %p119, %p120
    %p123 = scmp.ne.s32.totalorder %s106, %s122
    %p124 = scmp.eq.s32.totalorder %s25, 0
    %p125 = por %p123, %p124
    %s126 = ssub.s32 %s19, %s26
    %p127 = scmp.eq.s32.totalorder %s126, 0
    %s129 = sadd.s32 %s128, 1
    %s130 = scalar_select %p127, %s128, %s129
    %p133 = pneg %p127
    %p134 = scmp.eq.s32.totalorder %s19, 1
    %p135 = por %p133, %p134
    %p136 = scmp.ne.s32.totalorder %s128, %s131
    %p137 = scmp.eq.s32.totalorder %s19, 0
    %p138 = por %p136, %p137
    %p139 = scmp.ne.s32.totalorder %s128, %s131
    %p140 = scmp.eq.s32.totalorder %s24, 1
    %p141 = por %p139, %p140
    %p142 = scmp.ne.s32.totalorder %s131, %s132
    %p143 = scmp.eq.s32.totalorder %s24, 0
    %p144 = por %p142, %p143
    %p145 = scmp.ne.s32.totalorder %s131, %s132
    %p146 = scmp.eq.s32.totalorder %s25, 1
    %p147 = por %p145, %p146
    %p149 = scmp.ne.s32.totalorder %s132, %s148
    %p150 = scmp.eq.s32.totalorder %s25, 0
    %p151 = por %p149, %p150
    %s152 = ssub.s32 %s19, %s26
    %p153 = scmp.eq.s32.totalorder %s152, 0
    %s155 = sadd.s32 %s154, 1
    %s156 = scalar_select %p153, %s154, %s155
    %p159 = pneg %p153
    %p160 = scmp.eq.s32.totalorder %s19, 1
    %p161 = por %p159, %p160
    %p162 = scmp.ne.s32.totalorder %s154, %s157
    %p163 = scmp.eq.s32.totalorder %s19, 0
    %p164 = por %p162, %p163
    %p165 = scmp.ne.s32.totalorder %s154, %s157
    %p166 = scmp.eq.s32.totalorder %s24, 1
    %p167 = por %p165, %p166
    %p168 = scmp.ne.s32.totalorder %s157, %s158
    %p169 = scmp.eq.s32.totalorder %s24, 0
    %p170 = por %p168, %p169
    %p171 = scmp.ne.s32.totalorder %s157, %s158
    %p172 = scmp.eq.s32.totalorder %s25, 1
    %p173 = por %p171, %p172
    %p175 = scmp.ne.s32.totalorder %s158, %s174
    %p176 = scmp.eq.s32.totalorder %s25, 0
    %p177 = por %p175, %p176
    %s178 = ssub.s32 %s19, %s26
    %p179 = scmp.eq.s32.totalorder %s178, 0
    %s181 = sadd.s32 %s180, 1
    %s182 = scalar_select %p179, %s180, %s181
    %p185 = pneg %p179
    %p186 = scmp.eq.s32.totalorder %s19, 1
    %p187 = por %p185, %p186
    %p188 = scmp.ne.s32.totalorder %s180, %s183
    %p189 = scmp.eq.s32.totalorder %s19, 0
    %p190 = por %p188, %p189
    %p191 = scmp.ne.s32.totalorder %s180, %s183
    %p192 = scmp.eq.s32.totalorder %s24, 1
    %p193 = por %p191, %p192
    %p194 = scmp.ne.s32.totalorder %s183, %s184
    %p195 = scmp.eq.s32.totalorder %s24, 0
    %p196 = por %p194, %p195
    %p197 = scmp.ne.s32.totalorder %s183, %s184
    %p198 = scmp.eq.s32.totalorder %s25, 1
    %p199 = por %p197, %p198
    %p201 = scmp.ne.s32.totalorder %s184, %s200
    %p202 = scmp.eq.s32.totalorder %s25, 0
    %p203 = por %p201, %p202
    %s204 = ssub.s32 %s19, %s26
    %p205 = scmp.eq.s32.totalorder %s204, 0
    %s207 = sadd.s32 %s206, 1
    %s208 = scalar_select %p205, %s206, %s207
    %p211 = pneg %p205
    %p212 = scmp.eq.s32.totalorder %s19, 1
    %p213 = por %p211, %p212
    %p214 = scmp.ne.s32.totalorder %s206, %s209
    %p215 = scmp.eq.s32.totalorder %s19, 0
    %p216 = por %p214, %p215
    %p217 = scmp.ne.s32.totalorder %s206, %s209
    %p218 = scmp.eq.s32.totalorder %s24, 1
    %p219 = por %p217, %p218
    %p220 = scmp.ne.s32.totalorder %s209, %s210
    %p221 = scmp.eq.s32.totalorder %s24, 0
    %p222 = por %p220, %p221
    %p223 = scmp.ne.s32.totalorder %s209, %s210
    %p224 = scmp.eq.s32.totalorder %s25, 1
    %p225 = por %p223, %p224
    %p227 = scmp.ne.s32.totalorder %s210, %s226
    %p228 = scmp.eq.s32.totalorder %s25, 0
    %p229 = por %p227, %p228
    %s230 = ssub.s32 %s19, %s26
    %p231 = scmp.eq.s32.totalorder %s230, 0
    %s233 = sadd.s32 %s232, 1
    %s234 = scalar_select %p231, %s232, %s233
    %p237 = pneg %p231
    %p238 = scmp.eq.s32.totalorder %s19, 1
    %p239 = por %p237, %p238
    %p240 = scmp.ne.s32.totalorder %s232, %s235
    %p241 = scmp.eq.s32.totalorder %s19, 0
    %p242 = por %p240, %p241
    %p243 = scmp.ne.s32.totalorder %s232, %s235
    %p244 = scmp.eq.s32.totalorder %s24, 1
    %p245 = por %p243, %p244
    %p246 = scmp.ne.s32.totalorder %s235, %s236
    %p247 = scmp.eq.s32.totalorder %s24, 0
    %p248 = por %p246, %p247
    %p249 = scmp.ne.s32.totalorder %s235, %s236
    %p250 = scmp.eq.s32.totalorder %s25, 1
    %p251 = por %p249, %p250
    %p253 = scmp.ne.s32.totalorder %s236, %s252
    %p254 = scmp.eq.s32.totalorder %s25, 0
    %p255 = por %p253, %p254
    %s256 = ssub.s32 %s19, %s26
    %p257 = scmp.eq.s32.totalorder %s256, 0
    %s259 = sadd.s32 %s258, 1
    %s260 = scalar_select %p257, %s258, %s259
    %p263 = pneg %p257
    %p264 = scmp.eq.s32.totalorder %s19, 1
    %p265 = por %p263, %p264
    %p266 = scmp.ne.s32.totalorder %s258, %s261
    %p267 = scmp.eq.s32.totalorder %s19, 0
    %p268 = por %p266, %p267
    %p269 = scmp.ne.s32.totalorder %s258, %s261
    %p270 = scmp.eq.s32.totalorder %s24, 1
    %p271 = por %p269, %p270
    %p272 = scmp.ne.s32.totalorder %s261, %s262
    %p273 = scmp.eq.s32.totalorder %s24, 0
    %p274 = por %p272, %p273
    %p275 = scmp.ne.s32.totalorder %s261, %s262
    %p276 = scmp.eq.s32.totalorder %s25, 1
    %p277 = por %p275, %p276
    %p279 = scmp.ne.s32.totalorder %s262, %s278
    %p280 = scmp.eq.s32.totalorder %s25, 0
    %p281 = por %p279, %p280
    %s282 = ssub.s32 %s19, %s26
    %p283 = scmp.eq.s32.totalorder %s282, 0
    %s285 = sadd.s32 %s284, 1
    %s286 = scalar_select %p283, %s284, %s285
    %p289 = pneg %p283
    %p290 = scmp.eq.s32.totalorder %s19, 1
    %p291 = por %p289, %p290
    %p292 = scmp.ne.s32.totalorder %s284, %s287
    %p293 = scmp.eq.s32.totalorder %s19, 0
    %p294 = por %p292, %p293
    %p295 = scmp.ne.s32.totalorder %s284, %s287
    %p296 = scmp.eq.s32.totalorder %s24, 1
    %p297 = por %p295, %p296
    %p298 = scmp.ne.s32.totalorder %s287, %s288
    %p299 = scmp.eq.s32.totalorder %s24, 0
    %p300 = por %p298, %p299
    %p301 = scmp.ne.s32.totalorder %s287, %s288
    %p302 = scmp.eq.s32.totalorder %s25, 1
    %p303 = por %p301, %p302
    %p305 = scmp.ne.s32.totalorder %s288, %s304
    %p306 = scmp.eq.s32.totalorder %s25, 0
    %p307 = por %p305, %p306
    %s308 = ssub.s32 %s19, %s26
    %p309 = scmp.eq.s32.totalorder %s308, 0
    %s311 = sadd.s32 %s310, 1
    %s312 = scalar_select %p309, %s310, %s311
    %p315 = pneg %p309
    %p316 = scmp.eq.s32.totalorder %s19, 1
    %p317 = por %p315, %p316
    %p318 = scmp.ne.s32.totalorder %s310, %s313
    %p319 = scmp.eq.s32.totalorder %s19, 0
    %p320 = por %p318, %p319
    %p321 = scmp.ne.s32.totalorder %s310, %s313
    %p322 = scmp.eq.s32.totalorder %s24, 1
    %p323 = por %p321, %p322
    %p324 = scmp.ne.s32.totalorder %s313, %s314
    %p325 = scmp.eq.s32.totalorder %s24, 0
    %p326 = por %p324, %p325
    %p327 = scmp.ne.s32.totalorder %s313, %s314
    %p328 = scmp.eq.s32.totalorder %s25, 1
    %p329 = por %p327, %p328
    %p331 = scmp.ne.s32.totalorder %s314, %s330
    %p332 = scmp.eq.s32.totalorder %s25, 0
    %p333 = por %p331, %p332
    %s334 = ssub.s32 %s19, %s26
    %p335 = scmp.eq.s32.totalorder %s334, 0
    %s337 = sadd.s32 %s336, 1
    %s338 = scalar_select %p335, %s336, %s337
    %p341 = pneg %p335
    %p342 = scmp.eq.s32.totalorder %s19, 1
    %p343 = por %p341, %p342
    %p344 = scmp.ne.s32.totalorder %s336, %s339
    %p345 = scmp.eq.s32.totalorder %s19, 0
    %p346 = por %p344, %p345
    %p347 = scmp.ne.s32.totalorder %s336, %s339
    %p348 = scmp.eq.s32.totalorder %s24, 1
    %p349 = por %p347, %p348
    %p350 = scmp.ne.s32.totalorder %s339, %s340
    %p351 = scmp.eq.s32.totalorder %s24, 0
    %p352 = por %p350, %p351
    %p353 = scmp.ne.s32.totalorder %s339, %s340
    %p354 = scmp.eq.s32.totalorder %s25, 1
    %p355 = por %p353, %p354
    %p357 = scmp.ne.s32.totalorder %s340, %s356
    %p358 = scmp.eq.s32.totalorder %s25, 0
    %p359 = por %p357, %p358
    %s361 = sadd.s32 %s360, 1
    %p364 = scmp.eq.s32.totalorder %s19, 1
    %p365 = scmp.ne.s32.totalorder %s360, %s362
    %p366 = scmp.eq.s32.totalorder %s19, 0
    %p367 = por %p365, %p366
    %p368 = scmp.ne.s32.totalorder %s360, %s362
    %p369 = scmp.eq.s32.totalorder %s24, 1
    %p370 = por %p368, %p369
    %p371 = scmp.ne.s32.totalorder %s362, %s363
    %p372 = scmp.eq.s32.totalorder %s24, 0
    %p373 = por %p371, %p372
    %p374 = scmp.ne.s32.totalorder %s362, %s363
    %p375 = scmp.eq.s32.totalorder %s25, 1
    %p376 = por %p374, %p375
    %p378 = scmp.ne.s32.totalorder %s363, %s377
    %p379 = scmp.eq.s32.totalorder %s25, 0
    %p380 = por %p378, %p379
    %p381 = scmp.le.s32.totalorder 1, %s19
    %p382 = scmp.lt.s32.totalorder %s19, 3
    %p383 = pnand %p381, %p382
    %p384 = pneg %p383
    // Predicated region
    $region9: #{vivit_forward.4} parent=5 // pred_check
      _
    $region10: #{vivit_forward.4} parent=5 // pred_check_branch
      %386 = sbr.rel (%p383) target = $region12
    $region11: #{vivit_forward.4} parent=5 // pred_region
      %s387 = ssub.s32 %s19, 1
      // Predicated region
      $region13: #{vivit_forward.4} parent=11 // pred_check
        %p388 = pneg %p40
      $region14: #{vivit_forward.4} parent=11 // pred_check_branch
        %390 = sbr.rel (%p388) target = $region16
      $region15: #{vivit_forward.4} parent=11 // pred_region
        _
      $region16: #{vivit_forward.4} parent=11 // pred_fallthru
        _
    $region12: #{vivit_forward.4} parent=5 // pred_fallthru
      _
    %p391 = scmp.lt.s32.totalorder %s19, 2
    // Predicated region
    $region17: #{vivit_forward.4} parent=5 // pred_check
      %p392 = pneg %p391
    $region18: #{vivit_forward.4} parent=5 // pred_check_branch
      %394 = sbr.rel (%p392) target = $region20
    $region19: #{vivit_forward.4} parent=5 // pred_region
      // Predicated region
      $region21: #{vivit_forward.4} parent=19 // pred_check
        %p395 = pneg %p60
      $region22: #{vivit_forward.4} parent=19 // pred_check_branch
        %397 = sbr.rel (%p395) target = $region24
      $region23: #{vivit_forward.4} parent=19 // pred_region
        %p398 = scmp.lt.s32.totalorder %s19, 1
        %s399 = scalar_select %p398, %s19, 1
        %s400 = scalar_lea.vmem %s1, %s399
      $region24: #{vivit_forward.4} parent=19 // pred_fallthru
        _
      // Predicated region
      $region25: #{vivit_forward.4} parent=19 // pred_check
        %p401 = pneg %p86
      $region26: #{vivit_forward.4} parent=19 // pred_check_branch
        %403 = sbr.rel (%p401) target = $region28
      $region27: #{vivit_forward.4} parent=19 // pred_region
        %p404 = scmp.lt.s32.totalorder %s19, 1
        %s405 = scalar_select %p404, %s19, 1
        %s406 = scalar_lea.vmem %s2, %s405
      $region28: #{vivit_forward.4} parent=19 // pred_fallthru
        _
      // Predicated region
      $region29: #{vivit_forward.4} parent=19 // pred_check
        %p407 = pneg %p112
      $region30: #{vivit_forward.4} parent=19 // pred_check_branch
        %409 = sbr.rel (%p407) target = $region32
      $region31: #{vivit_forward.4} parent=19 // pred_region
        %p410 = scmp.lt.s32.totalorder %s19, 1
        %s411 = scalar_select %p410, %s19, 1
        %s412 = smul.addr %s411, 4
        %s413 = smul.addr %s412, 8
        %s414 = scalar_lea.vmem %s3, %s413
      $region32: #{vivit_forward.4} parent=19 // pred_fallthru
        _
      // Predicated region
      $region33: #{vivit_forward.4} parent=19 // pred_check
        %p415 = pneg %p138
      $region34: #{vivit_forward.4} parent=19 // pred_check_branch
        %417 = sbr.rel (%p415) target = $region36
      $region35: #{vivit_forward.4} parent=19 // pred_region
        %p418 = scmp.lt.s32.totalorder %s19, 1
        %s419 = scalar_select %p418, %s19, 1
        %s420 = scalar_lea.vmem %s4, %s419
      $region36: #{vivit_forward.4} parent=19 // pred_fallthru
        _
      // Predicated region
      $region37: #{vivit_forward.4} parent=19 // pred_check
        %p421 = pneg %p164
      $region38: #{vivit_forward.4} parent=19 // pred_check_branch
        %423 = sbr.rel (%p421) target = $region40
      $region39: #{vivit_forward.4} parent=19 // pred_region
        %p424 = scmp.lt.s32.totalorder %s19, 1
        %s425 = scalar_select %p424, %s19, 1
        %s426 = smul.addr %s425, 4
        %s427 = smul.addr %s426, 8
        %s428 = scalar_lea.vmem %s5, %s427
      $region40: #{vivit_forward.4} parent=19 // pred_fallthru
        _
      // Predicated region
      $region41: #{vivit_forward.4} parent=19 // pred_check
        %p429 = pneg %p190
      $region42: #{vivit_forward.4} parent=19 // pred_check_branch
        %431 = sbr.rel (%p429) target = $region44
      $region43: #{vivit_forward.4} parent=19 // pred_region
        %p432 = scmp.lt.s32.totalorder %s19, 1
        %s433 = scalar_select %p432, %s19, 1
        %s434 = scalar_lea.vmem %s6, %s433
      $region44: #{vivit_forward.4} parent=19 // pred_fallthru
        _
      // Predicated region
      $region45: #{vivit_forward.4} parent=19 // pred_check
        %p435 = pneg %p216
      $region46: #{vivit_forward.4} parent=19 // pred_check_branch
        %437 = sbr.rel (%p435) target = $region48
      $region47: #{vivit_forward.4} parent=19 // pred_region
        %p438 = scmp.lt.s32.totalorder %s19, 1
        %s439 = scalar_select %p438, %s19, 1
        %s440 = scalar_lea.vmem %s7, %s439
      $region48: #{vivit_forward.4} parent=19 // pred_fallthru
        _
      // Predicated region
      $region49: #{vivit_forward.4} parent=19 // pred_check
        %p441 = pneg %p242
      $region50: #{vivit_forward.4} parent=19 // pred_check_branch
        %443 = sbr.rel (%p441) target = $region52
      $region51: #{vivit_forward.4} parent=19 // pred_region
        %p444 = scmp.lt.s32.totalorder %s19, 1
        %s445 = scalar_select %p444, %s19, 1
        %s446 = scalar_lea.vmem %s8, %s445
      $region52: #{vivit_forward.4} parent=19 // pred_fallthru
        _
      // Predicated region
      $region53: #{vivit_forward.4} parent=19 // pred_check
        %p447 = pneg %p268
      $region54: #{vivit_forward.4} parent=19 // pred_check_branch
        %449 = sbr.rel (%p447) target = $region56
      $region55: #{vivit_forward.4} parent=19 // pred_region
        %p450 = scmp.lt.s32.totalorder %s19, 1
        %s451 = scalar_select %p450, %s19, 1
        %s452 = smul.addr %s451, 4
        %s453 = smul.addr %s452, 8
        %s454 = scalar_lea.vmem %s9, %s453
      $region56: #{vivit_forward.4} parent=19 // pred_fallthru
        _
      // Predicated region
      $region57: #{vivit_forward.4} parent=19 // pred_check
        %p455 = pneg %p294
      $region58: #{vivit_forward.4} parent=19 // pred_check_branch
        %457 = sbr.rel (%p455) target = $region60
      $region59: #{vivit_forward.4} parent=19 // pred_region
        %p458 = scmp.lt.s32.totalorder %s19, 1
        %s459 = scalar_select %p458, %s19, 1
        %s460 = scalar_lea.vmem %s10, %s459
      $region60: #{vivit_forward.4} parent=19 // pred_fallthru
        _
      // Predicated region
      $region61: #{vivit_forward.4} parent=19 // pred_check
        %p461 = pneg %p320
      $region62: #{vivit_forward.4} parent=19 // pred_check_branch
        %463 = sbr.rel (%p461) target = $region64
      $region63: #{vivit_forward.4} parent=19 // pred_region
        %p464 = scmp.lt.s32.totalorder %s19, 1
        %s465 = scalar_select %p464, %s19, 1
        %s466 = smul.addr %s465, 8
        %s467 = smul.addr %s466, 8
        %s468 = scalar_lea.vmem %s11, %s467
      $region64: #{vivit_forward.4} parent=19 // pred_fallthru
        _
      // Predicated region
      $region65: #{vivit_forward.4} parent=19 // pred_check
        %p469 = pneg %p346
      $region66: #{vivit_forward.4} parent=19 // pred_check_branch
        %471 = sbr.rel (%p469) target = $region68
      $region67: #{vivit_forward.4} parent=19 // pred_region
        %p472 = scmp.lt.s32.totalorder %s19, 1
        %s473 = scalar_select %p472, %s19, 1
        %s474 = scalar_lea.vmem %s12, %s473
      $region68: #{vivit_forward.4} parent=19 // pred_fallthru
        _
    $region20: #{vivit_forward.4} parent=5 // pred_fallthru
      _
    %p475 = scmp.le.s32.totalorder 1, %s19
    %p476 = scmp.lt.s32.totalorder %s19, 3
    %p477 = pnand %p475, %p476
    %p478 = pneg %p477
    // Predicated region
    $region69: #{vivit_forward.4} parent=5 // pred_check
      _
    $region70: #{vivit_forward.4} parent=5 // pred_check_branch
      %480 = sbr.rel (%p477) target = $region72
    $region71: #{vivit_forward.4} parent=5 // pred_region
      %s481 = ssub.s32 %s19, 1
      %p482 = pneg %p40
      %p483 = pneg %p37
      %p484 = scmp.lt.s32.totalorder %s24, 1
      %s485 = scalar_select %p484, %s24, 1
      %s486 = scalar_lea.vmem %s1, %s485
      %p487 = pneg %p66
      %p488 = pneg %p63
      %p489 = scmp.lt.s32.totalorder %s24, 1
      %s490 = scalar_select %p489, %s24, 1
      %s491 = scalar_lea.vmem %s2, %s490
      %p492 = pneg %p92
      %p493 = pneg %p89
      %p494 = scmp.lt.s32.totalorder %s24, 1
      %s495 = scalar_select %p494, %s24, 1
      %s496 = smul.addr %s495, 4
      %s497 = smul.addr %s496, 8
      %s498 = scalar_lea.vmem %s3, %s497
      %p499 = pneg %p118
      %p500 = pneg %p115
      %p501 = scmp.lt.s32.totalorder %s24, 1
      %s502 = scalar_select %p501, %s24, 1
      %s503 = scalar_lea.vmem %s4, %s502
      %p504 = pneg %p144
      %p505 = pneg %p141
      %p506 = scmp.lt.s32.totalorder %s24, 1
      %s507 = scalar_select %p506, %s24, 1
      %s508 = smul.addr %s507, 4
      %s509 = smul.addr %s508, 8
      %s510 = scalar_lea.vmem %s5, %s509
      %p511 = pneg %p170
      %p512 = pneg %p167
      %p513 = scmp.lt.s32.totalorder %s24, 1
      %s514 = scalar_select %p513, %s24, 1
      %s515 = scalar_lea.vmem %s6, %s514
      %p516 = pneg %p196
      %p517 = pneg %p193
      %p518 = scmp.lt.s32.totalorder %s24, 1
      %s519 = scalar_select %p518, %s24, 1
      %s520 = scalar_lea.vmem %s7, %s519
      %p521 = pneg %p222
      %p522 = pneg %p219
      %p523 = scmp.lt.s32.totalorder %s24, 1
      %s524 = scalar_select %p523, %s24, 1
      %s525 = scalar_lea.vmem %s8, %s524
      %p526 = pneg %p248
      %p527 = pneg %p245
      %p528 = scmp.lt.s32.totalorder %s24, 1
      %s529 = scalar_select %p528, %s24, 1
      %s530 = smul.addr %s529, 4
      %s531 = smul.addr %s530, 8
      %s532 = scalar_lea.vmem %s9, %s531
      %p533 = pneg %p274
      %p534 = pneg %p271
      %p535 = scmp.lt.s32.totalorder %s24, 1
      %s536 = scalar_select %p535, %s24, 1
      %s537 = scalar_lea.vmem %s10, %s536
      %p538 = pneg %p300
      %p539 = pneg %p297
      %p540 = scmp.lt.s32.totalorder %s24, 1
      %s541 = scalar_select %p540, %s24, 1
      %s542 = smul.addr %s541, 8
      %s543 = smul.addr %s542, 8
      %s544 = scalar_lea.vmem %s11, %s543
      %p545 = pneg %p326
      %p546 = pneg %p323
      %p547 = scmp.lt.s32.totalorder %s24, 1
      %s548 = scalar_select %p547, %s24, 1
      %s549 = scalar_lea.vmem %s12, %s548
      %p550 = pneg %p352
      %p551 = pneg %p349
      %p552 = pneg %p373
      %p553 = pneg %p370
      %p554 = scmp.lt.s32.totalorder %s24, 1
      %s555 = scalar_select %p554, %s24, 1
      %s556 = scalar_lea.vmem %s1, %s555
      %p557 = scmp.lt.s32.totalorder %s24, 1
      %s558 = scalar_select %p557, %s24, 1
      %s559 = scalar_lea.vmem %s2, %s558
      %p560 = scmp.lt.s32.totalorder %s24, 1
      %s561 = scalar_select %p560, %s24, 1
      %s562 = smul.addr %s561, 4
      %s563 = smul.addr %s562, 8
      %s564 = scalar_lea.vmem %s3, %s563
      %p565 = scmp.lt.s32.totalorder %s24, 1
      %s566 = scalar_select %p565, %s24, 1
      %s567 = scalar_lea.vmem %s4, %s566
      %p568 = scmp.lt.s32.totalorder %s24, 1
      %s569 = scalar_select %p568, %s24, 1
      %s570 = smul.addr %s569, 4
      %s571 = smul.addr %s570, 8
      %s572 = scalar_lea.vmem %s5, %s571
      %p573 = scmp.lt.s32.totalorder %s24, 1
      %s574 = scalar_select %p573, %s24, 1
      %s575 = scalar_lea.vmem %s6, %s574
      %p576 = scmp.lt.s32.totalorder %s24, 1
      %s577 = scalar_select %p576, %s24, 1
      %s578 = scalar_lea.vmem %s7, %s577
      %p579 = scmp.lt.s32.totalorder %s24, 1
      %s580 = scalar_select %p579, %s24, 1
      %s581 = scalar_lea.vmem %s8, %s580
      %p582 = scmp.lt.s32.totalorder %s24, 1
      %s583 = scalar_select %p582, %s24, 1
      %s584 = smul.addr %s583, 4
      %s585 = smul.addr %s584, 8
      %s586 = scalar_lea.vmem %s9, %s585
      %p587 = scmp.lt.s32.totalorder %s24, 1
      %s588 = scalar_select %p587, %s24, 1
      %s589 = scalar_lea.vmem %s10, %s588
      %p590 = scmp.lt.s32.totalorder %s24, 1
      %s591 = scalar_select %p590, %s24, 1
      %s592 = smul.addr %s591, 8
      %s593 = smul.addr %s592, 8
      %s594 = scalar_lea.vmem %s11, %s593
      %p595 = scmp.lt.s32.totalorder %s24, 1
      %s596 = scalar_select %p595, %s24, 1
      %s597 = scalar_lea.vmem %s12, %s596
      %p598 = scmp.eq.s32.totalorder %s24, 0
      // Predicated region
      $region73: #{vivit_forward.4} parent=71 // pred_check
        %p599 = pneg %p598
      $region74: #{vivit_forward.4} parent=71 // pred_check_branch
        %601 = sbr.rel (%p599) target = $region76
      $region75: #{vivit_forward.4} parent=71 // pred_region
        %v602 = vld [vmem:[%s0] sm:$0xff]
        %v603 = vld [vmem:[%s0 + $0x8] sm:$0xff]
        %v604 = vld [vmem:[%s0 + $0x10] sm:$0x3]
        %vm605 = vcmask 261120
        %606 = vst.msk [vmem:[#allocation2] sm:$0xff] %vm605, %v602
        %607 = vst.msk [vmem:[#allocation2 + $0x8] sm:$0xff] %vm605, %v603
        %vm608 = vcmask 254976
        %609 = vst.msk [vmem:[#allocation2 + $0x10] sm:$0x3] %vm608, %v604
      $region76: #{vivit_forward.4} parent=71 // pred_fallthru
        _
      %v610 = vld [vmem:[#allocation2] sm:$0xff]
      %v611 = vld [vmem:[#allocation2 + $0x8] sm:$0xff]
      %v612 = vld [vmem:[#allocation2 + $0x10] sm:$0x3]
      %v613 = vld [vmem:[%s556] sm:$0x1]
      %v614 = vld [vmem:[%s559] sm:$0x1]
      %vm615 = vcmask 261120
      %v616 = vsel %vm615, %v610, 0.0
      %617 = vadd.xlane.f32.xlu0 %v616
      %v618 = vpop.xlane.xlu0 %617
      %v619 = vsel %vm615, %v611, 0.0
      %620 = vadd.xlane.f32.xlu0 %v619
      %v621 = vpop.xlane.xlu0 %620
      %vm622 = vcmask 254976
      %v623 = vsel %vm622, %v612, 0.0
      %624 = vadd.xlane.f32.xlu0 %v623
      %v625 = vpop.xlane.xlu0 %624
      %v626 = vmul.f32 %v618, 0.03125
      %v627 = vmul.f32 %v621, 0.03125
      %v628 = vmul.f32 %v625, 0.03125
      %v629 = vsub.f32 %v610, %v626
      %v630 = vsub.f32 %v611, %v627
      %v631 = vsub.f32 %v612, %v628
      %v632 = vmul.f32 %v629, %v629
      %v633 = vmul.f32 %v630, %v630
      %v634 = vmul.f32 %v631, %v631
      %v635 = vsel %vm615, %v632, 0.0
      %636 = vadd.xlane.f32.xlu0 %v635
      %v637 = vpop.xlane.xlu0 %636
      %v638 = vsel %vm615, %v633, 0.0
      %639 = vadd.xlane.f32.xlu0 %v638
      %v640 = vpop.xlane.xlu0 %639
      %v641 = vsel %vm622, %v634, 0.0
      %642 = vadd.xlane.f32.xlu0 %v641
      %v643 = vpop.xlane.xlu0 %642
      %v644 = vmul.f32 %v637, 0.03125
      %v645 = vmul.f32 %v640, 0.03125
      %v646 = vmul.f32 %v643, 0.03125
      %v647 = vadd.f32 %v644, 1e-06
      %v648 = vadd.f32 %v645, 1e-06
      %v649 = vadd.f32 %v646, 1e-06
      %v650 = vrsqrt.pop %v647
      %v651 = vmul.f32 %v650, %v647
      %v652 = vmul.f32 %v651, %v650
      %v653 = vmul.f32 0.5, %v652
      %v654 = vsub.f32 1.5, %v653
      %v655 = vmul.f32 %v650, %v654
      %vm656 = vweird.f32 %v647
      %vm657 = vweird.f32 %v650
      %vm658 = vmor %vm656, %vm657
      %v659 = vsel %vm658, %v650, %v655
      %v660 = vrsqrt.pop %v648
      %v661 = vmul.f32 %v660, %v648
      %v662 = vmul.f32 %v661, %v660
      %v663 = vmul.f32 0.5, %v662
      %v664 = vsub.f32 1.5, %v663
      %v665 = vmul.f32 %v660, %v664
      %vm666 = vweird.f32 %v648
      %vm667 = vweird.f32 %v660
      %vm668 = vmor %vm666, %vm667
      %v669 = vsel %vm668, %v660, %v665
      %v670 = vrsqrt.pop %v649
      %v671 = vmul.f32 %v670, %v649
      %v672 = vmul.f32 %v671, %v670
      %v673 = vmul.f32 0.5, %v672
      %v674 = vsub.f32 1.5, %v673
      %v675 = vmul.f32 %v670, %v674
      %vm676 = vweird.f32 %v649
      %vm677 = vweird.f32 %v670
      %vm678 = vmor %vm676, %vm677
      %v679 = vsel %vm678, %v670, %v675
      %v680 = vmul.f32 %v629, %v659
      %v681 = vmul.f32 %v630, %v669
      %v682 = vmul.f32 %v631, %v679
      %v684 = vperm.slane %v613, 0
      %v686 = vmul.f32 %v680, %v684
      %v687 = vmul.f32 %v681, %v684
      %v688 = vmul.f32 %v682, %v684
      %v690 = vperm.slane %v614, 0
      %v692 = vadd.f32 %v686, %v690
      %v693 = vadd.f32 %v687, %v690
      %v694 = vadd.f32 %v688, %v690
      %v695 = vld [vmem:[%s564] sm:$0xff]
      %v696 = vld [vmem:[%s564 + $0x8] sm:$0xff]
      %v697 = vld [vmem:[%s564 + $0x10] sm:$0xff]
      %v698 = vld [vmem:[%s564 + $0x18] sm:$0xff]
      %v699 = vld [vmem:[%s567] sm:$0x1]
      %v701 = vperm.slane %v699, 0
      %v704 = vsel %vm615, %v692, 0
      %v707 = vsel %vm615, %v693, 0
      %v710 = vsel %vm615, %v694, 0
      %712 = vmatpush.msra.mxu0 0.0
      %713 = vmatpush.msra.mxu0 0.0
      %714 = vmatpush.msra.mxu0 0.0
      %715 = vmatpush.msra.mxu0 0.0
      %716 = vmatpush.msra.mxu0 0.0
      %717 = vmatpush.msra.mxu0 0.0
      %718 = vmatpush.msra.mxu0 0.0
      %719 = vmatpush.msra.mxu0 0.0
      %720 = vmatpush.msra.mxu0 0.0
      %721 = vmatpush.msra.mxu0 0.0
      %722 = vmatpush.msra.mxu0 0.0
      %723 = vmatpush.msra.mxu0 0.0
      %724 = vmatpush.msra.mxu0 %v698
      %725 = vmatpush.msra.mxu0 %v697
      %726 = vmatpush.msra.mxu0 %v696
      %727 = vmatpush.msra.mxu0 %v695
      %728 = vmatmul.f32.gmra.mxu0 %v704
      %v729 = vpop.f32.mrf.mxu0
      %v730 = vadd.f32 %v701, %v729
      %731 = vmatmul.f32.gmra.mxu0 %v707
      %v732 = vpop.f32.mrf.mxu0
      %v733 = vadd.f32 %v701, %v732
      %734 = vmatmul.f32.gmra.mxu0 %v710
      %v735 = vpop.f32.mrf.mxu0
      %v736 = vadd.f32 %v701, %v735
      %737 = vdwg.mxu0
      %vm738 = vcmask 785408
      %739 = vst.msk [vmem:[#allocation3] sm:$0xff] %vm738, %v730
      %740 = vst.msk [vmem:[#allocation3 + $0x8] sm:$0xff] %vm738, %v733
      %vm741 = vcmask 779264
      %742 = vst.msk [vmem:[#allocation3 + $0x10] sm:$0x3] %vm741, %v736
      %v743 = vld [vmem:[#allocation3] sm:$0xff]
      %v744 = vld [vmem:[#allocation3 + $0x8] sm:$0x1]
      %747 = vrot.lane.b32.xlu0 %v743, 96
      %v748 = vpop.permute.xlu0 %747
      %749 = vrot.lane.b32.xlu0 %v744, 96
      %v750 = vpop.permute.xlu0 %749
      %vm751 = vcmask 64512
      %v752 = vsel %vm751, %v743, 0
      %v754 = vsel %vm751, %v744, 0
      %v756 = vsel %vm751, %v748, 0
      %v758 = vsel %vm751, %v750, 0
      %760 = vmatpush.xpose.msra.mxu0 0.0
      %761 = vmatpush.xpose.msra.mxu0 0.0
      %762 = vmatpush.xpose.msra.mxu0 0.0
      %763 = vmatpush.xpose.msra.mxu0 0.0
      %764 = vmatpush.xpose.msra.mxu0 0.0
      %765 = vmatpush.xpose.msra.mxu0 0.0
      %766 = vmatpush.xpose.msra.mxu0 0.0
      %767 = vmatpush.xpose.msra.mxu0 0.0
      %768 = vmatpush.xpose.msra.mxu0 0.0
      %769 = vmatpush.xpose.msra.mxu0 0.0
      %770 = vmatpush.xpose.msra.mxu0 0.0
      %771 = vmatpush.xpose.msra.mxu0 0.0
      %772 = vmatpush.xpose.msra.mxu0 0.0
      %773 = vmatpush.xpose.msra.mxu0 0.0
      %774 = vmatpush.xpose.msra.mxu0 %v758
      %775 = vmatpush.xpose.msra.mxu0 %v756
      %776 = vmatmul.f32.gmra.mxu0 %v752
      %v777 = vpop.f32.mrf.mxu0
      %v778 = vadd.f32 0.0, %v777
      %779 = vmatmul.f32.gmra.mxu0 %v754
      %v780 = vpop.f32.mrf.mxu0
      %v781 = vadd.f32 0.0, %v780
      %782 = vdwg.mxu0
      %v783 = vmul.f32 %v778, 0.35355338
      %v784 = vmul.f32 %v781, 0.35355338
      %vm785 = vcmask 72704
      %v786 = vsel %vm785, %v783, -inf
      %787 = vmax.xlane.f32.xlu0 %v786
      %v788 = vpop.xlane.xlu0 %787
      %vm789 = vcmask 65536
      %v790 = vsel %vm789, %v784, -inf
      %791 = vmax.xlane.f32.xlu0 %v790
      %v792 = vpop.xlane.xlu0 %791
      %v793 = vsub.f32 %v783, %v788
      %v794 = vsub.f32 %v784, %v792
      %v795 = vmul.f32 %v793, 1.442695
      %v796 = vpow.pop %v795
      %v797 = vmul.f32 %v794, 1.442695
      %v798 = vpow.pop %v797
      %v799 = vsel %vm785, %v796, 0.0
      %800 = vadd.xlane.f32.xlu0 %v799
      %v801 = vpop.xlane.xlu0 %800
      %v802 = vsel %vm789, %v798, 0.0
      %803 = vadd.xlane.f32.xlu0 %v802
      %v804 = vpop.xlane.xlu0 %803
      %v805 = vrcp.pop %v801
      %v806 = vrcp.pop %v804
      %v807 = vmul.f32 %v796, %v805
      %v808 = vmul.f32 %v798, %v806
      %809 = vrot.lane.b32.xlu0 %v743, 64
      %v810 = vpop.permute.xlu0 %809
      %811 = vrot.lane.b32.xlu0 %v744, 64
      %v812 = vpop.permute.xlu0 %811
      %v815 = vsel %vm785, %v807, 0
      %v818 = vsel %vm785, %v808, 0
      %vm820 = vcmask 1040384
      %v821 = vsel %vm820, %v812, 0
      %823 = vmatpush.msra.mxu0 0.0
      %824 = vmatpush.msra.mxu0 0.0
      %825 = vmatpush.msra.mxu0 0.0
      %826 = vmatpush.msra.mxu0 0.0
      %827 = vmatpush.msra.mxu0 0.0
      %828 = vmatpush.msra.mxu0 0.0
      %829 = vmatpush.msra.mxu0 0.0
      %830 = vmatpush.msra.mxu0 0.0
      %831 = vmatpush.msra.mxu0 0.0
      %832 = vmatpush.msra.mxu0 0.0
      %833 = vmatpush.msra.mxu0 0.0
      %834 = vmatpush.msra.mxu0 0.0
      %835 = vmatpush.msra.mxu0 0.0
      %836 = vmatpush.msra.mxu0 0.0
      %837 = vmatpush.msra.mxu0 %v821
      %838 = vmatpush.msra.mxu0 %v810
      %839 = vmatmul.f32.gmra.mxu0 %v815
      %v840 = vpop.f32.mrf.mxu0
      %v841 = vadd.f32 0.0, %v840
      %842 = vmatmul.f32.gmra.mxu0 %v818
      %v843 = vpop.f32.mrf.mxu0
      %v844 = vadd.f32 0.0, %v843
      %845 = vdwg.mxu0
      %846 = vst.msk [vmem:[#allocation4] sm:$0xff] %vm751, %v841
      %vm847 = vcmask 57344
      %848 = vst.msk [vmem:[#allocation4 + $0x8] sm:$0x1] %vm847, %v844
      %v849 = vld [vmem:[#allocation3] sm:$0xff]
      %v850 = vld [vmem:[#allocation3 + $0x8] sm:$0x1]
      %853 = vrot.lane.b32.xlu0 %v849, 120
      %v854 = vpop.permute.xlu0 %853
      %855 = vrot.lane.b32.xlu0 %v850, 120
      %v856 = vpop.permute.xlu0 %855
      %857 = vrot.lane.b32.xlu0 %v849, 88
      %v858 = vpop.permute.xlu0 %857
      %859 = vrot.lane.b32.xlu0 %v850, 88
      %v860 = vpop.permute.xlu0 %859
      %v861 = vsel %vm751, %v854, 0
      %v863 = vsel %vm751, %v856, 0
      %v865 = vsel %vm751, %v858, 0
      %v867 = vsel %vm751, %v860, 0
      %869 = vmatpush.xpose.msra.mxu0 0.0
      %870 = vmatpush.xpose.msra.mxu0 0.0
      %871 = vmatpush.xpose.msra.mxu0 0.0
      %872 = vmatpush.xpose.msra.mxu0 0.0
      %873 = vmatpush.xpose.msra.mxu0 0.0
      %874 = vmatpush.xpose.msra.mxu0 0.0
      %875 = vmatpush.xpose.msra.mxu0 0.0
      %876 = vmatpush.xpose.msra.mxu0 0.0
      %877 = vmatpush.xpose.msra.mxu0 0.0
      %878 = vmatpush.xpose.msra.mxu0 0.0
      %879 = vmatpush.xpose.msra.mxu0 0.0
      %880 = vmatpush.xpose.msra.mxu0 0.0
      %881 = vmatpush.xpose.msra.mxu0 0.0
      %882 = vmatpush.xpose.msra.mxu0 0.0
      %883 = vmatpush.xpose.msra.mxu0 %v867
      %884 = vmatpush.xpose.msra.mxu0 %v865
      %885 = vmatmul.f32.gmra.mxu0 %v861
      %v886 = vpop.f32.mrf.mxu0
      %v887 = vadd.f32 0.0, %v886
      %888 = vmatmul.f32.gmra.mxu0 %v863
      %v889 = vpop.f32.mrf.mxu0
      %v890 = vadd.f32 0.0, %v889
      %891 = vdwg.mxu0
      %v892 = vmul.f32 %v887, 0.35355338
      %v893 = vmul.f32 %v890, 0.35355338
      %v894 = vsel %vm785, %v892, -inf
      %895 = vmax.xlane.f32.xlu0 %v894
      %v896 = vpop.xlane.xlu0 %895
      %v897 = vsel %vm789, %v893, -inf
      %898 = vmax.xlane.f32.xlu0 %v897
      %v899 = vpop.xlane.xlu0 %898
      %v900 = vsub.f32 %v892, %v896
      %v901 = vsub.f32 %v893, %v899
      %v902 = vmul.f32 %v900, 1.442695
      %v903 = vpow.pop %v902
      %v904 = vmul.f32 %v901, 1.442695
      %v905 = vpow.pop %v904
      %v906 = vsel %vm785, %v903, 0.0
      %907 = vadd.xlane.f32.xlu0 %v906
      %v908 = vpop.xlane.xlu0 %907
      %v909 = vsel %vm789, %v905, 0.0
      %910 = vadd.xlane.f32.xlu0 %v909
      %v911 = vpop.xlane.xlu0 %910
      %v912 = vrcp.pop %v908
      %v913 = vrcp.pop %v911
      %v914 = vmul.f32 %v903, %v912
      %v915 = vmul.f32 %v905, %v913
      %916 = vrot.lane.b32.xlu0 %v849, 56
      %v917 = vpop.permute.xlu0 %916
      %918 = vrot.lane.b32.xlu0 %v850, 56
      %v919 = vpop.permute.xlu0 %918
      %v922 = vsel %vm785, %v914, 0
      %v925 = vsel %vm785, %v915, 0
      %v927 = vsel %vm820, %v919, 0
      %929 = vmatpush.msra.mxu0 0.0
      %930 = vmatpush.msra.mxu0 0.0
      %931 = vmatpush.msra.mxu0 0.0
      %932 = vmatpush.msra.mxu0 0.0
      %933 = vmatpush.msra.mxu0 0.0
      %934 = vmatpush.msra.mxu0 0.0
      %935 = vmatpush.msra.mxu0 0.0
      %936 = vmatpush.msra.mxu0 0.0
      %937 = vmatpush.msra.mxu0 0.0
      %938 = vmatpush.msra.mxu0 0.0
      %939 = vmatpush.msra.mxu0 0.0
      %940 = vmatpush.msra.mxu0 0.0
      %941 = vmatpush.msra.mxu0 0.0
      %942 = vmatpush.msra.mxu0 0.0
      %943 = vmatpush.msra.mxu0 %v927
      %944 = vmatpush.msra.mxu0 %v917
      %945 = vmatmul.f32.gmra.mxu0 %v922
      %v946 = vpop.f32.mrf.mxu0
      %v947 = vadd.f32 0.0, %v946
      %948 = vmatmul.f32.gmra.mxu0 %v925
      %v949 = vpop.f32.mrf.mxu0
      %v950 = vadd.f32 0.0, %v949
      %951 = vdwg.mxu0
      %954 = vrot.lane.b32.xlu0 %v947, 8
      %v955 = vpop.permute.xlu0 %954
      %956 = vrot.lane.b32.xlu0 %v950, 8
      %v957 = vpop.permute.xlu0 %956
      %vm960 = vcmask 130112
      %961 = vst.msk [vmem:[#allocation4] sm:$0xff] %vm960, %v955
      %vm962 = vcmask 122944
      %963 = vst.msk [vmem:[#allocation4 + $0x8] sm:$0x1] %vm962, %v957
      %v964 = vld [vmem:[#allocation3] sm:$0xff]
      %v965 = vld [vmem:[#allocation3 + $0x8] sm:$0x1]
      %968 = vrot.lane.b32.xlu0 %v964, 112
      %v969 = vpop.permute.xlu0 %968
      %970 = vrot.lane.b32.xlu0 %v965, 112
      %v971 = vpop.permute.xlu0 %970
      %972 = vrot.lane.b32.xlu0 %v964, 80
      %v973 = vpop.permute.xlu0 %972
      %974 = vrot.lane.b32.xlu0 %v965, 80
      %v975 = vpop.permute.xlu0 %974
      %v976 = vsel %vm751, %v969, 0
      %v978 = vsel %vm751, %v971, 0
      %v980 = vsel %vm751, %v973, 0
      %v982 = vsel %vm751, %v975, 0
      %984 = vmatpush.xpose.msra.mxu0 0.0
      %985 = vmatpush.xpose.msra.mxu0 0.0
      %986 = vmatpush.xpose.msra.mxu0 0.0
      %987 = vmatpush.xpose.msra.mxu0 0.0
      %988 = vmatpush.xpose.msra.mxu0 0.0
      %989 = vmatpush.xpose.msra.mxu0 0.0
      %990 = vmatpush.xpose.msra.mxu0 0.0
      %991 = vmatpush.xpose.msra.mxu0 0.0
      %992 = vmatpush.xpose.msra.mxu0 0.0
      %993 = vmatpush.xpose.msra.mxu0 0.0
      %994 = vmatpush.xpose.msra.mxu0 0.0
      %995 = vmatpush.xpose.msra.mxu0 0.0
      %996 = vmatpush.xpose.msra.mxu0 0.0
      %997 = vmatpush.xpose.msra.mxu0 0.0
      %998 = vmatpush.xpose.msra.mxu0 %v982
      %999 = vmatpush.xpose.msra.mxu0 %v980
      %1000 = vmatmul.f32.gmra.mxu0 %v976
      %v1001 = vpop.f32.mrf.mxu0
      %v1002 = vadd.f32 0.0, %v1001
      %1003 = vmatmul.f32.gmra.mxu0 %v978
      %v1004 = vpop.f32.mrf.mxu0
      %v1005 = vadd.f32 0.0, %v1004
      %1006 = vdwg.mxu0
      %v1007 = vmul.f32 %v1002, 0.35355338
      %v1008 = vmul.f32 %v1005, 0.35355338
      %v1009 = vsel %vm785, %v1007, -inf
      %1010 = vmax.xlane.f32.xlu0 %v1009
      %v1011 = vpop.xlane.xlu0 %1010
      %v1012 = vsel %vm789, %v1008, -inf
      %1013 = vmax.xlane.f32.xlu0 %v1012
      %v1014 = vpop.xlane.xlu0 %1013
      %v1015 = vsub.f32 %v1007, %v1011
      %v1016 = vsub.f32 %v1008, %v1014
      %v1017 = vmul.f32 %v1015, 1.442695
      %v1018 = vpow.pop %v1017
      %v1019 = vmul.f32 %v1016, 1.442695
      %v1020 = vpow.pop %v1019
      %v1021 = vsel %vm785, %v1018, 0.0
      %1022 = vadd.xlane.f32.xlu0 %v1021
      %v1023 = vpop.xlane.xlu0 %1022
      %v1024 = vsel %vm789, %v1020, 0.0
      %1025 = vadd.xlane.f32.xlu0 %v1024
      %v1026 = vpop.xlane.xlu0 %1025
      %v1027 = vrcp.pop %v1023
      %v1028 = vrcp.pop %v1026
      %v1029 = vmul.f32 %v1018, %v1027
      %v1030 = vmul.f32 %v1020, %v1028
      %1031 = vrot.lane.b32.xlu0 %v964, 48
      %v1032 = vpop.permute.xlu0 %1031
      %1033 = vrot.lane.b32.xlu0 %v965, 48
      %v1034 = vpop.permute.xlu0 %1033
      %v1037 = vsel %vm785, %v1029, 0
      %v1040 = vsel %vm785, %v1030, 0
      %v1042 = vsel %vm820, %v1034, 0
      %1044 = vmatpush.msra.mxu0 0.0
      %1045 = vmatpush.msra.mxu0 0.0
      %1046 = vmatpush.msra.mxu0 0.0
      %1047 = vmatpush.msra.mxu0 0.0
      %1048 = vmatpush.msra.mxu0 0.0
      %1049 = vmatpush.msra.mxu0 0.0
      %1050 = vmatpush.msra.mxu0 0.0
      %1051 = vmatpush.msra.mxu0 0.0
      %1052 = vmatpush.msra.mxu0 0.0
      %1053 = vmatpush.msra.mxu0 0.0
      %1054 = vmatpush.msra.mxu0 0.0
      %1055 = vmatpush.msra.mxu0 0.0
      %1056 = vmatpush.msra.mxu0 0.0
      %1057 = vmatpush.msra.mxu0 0.0
      %1058 = vmatpush.msra.mxu0 %v1042
      %1059 = vmatpush.msra.mxu0 %v1032
      %1060 = vmatmul.f32.gmra.mxu0 %v1037
      %v1061 = vpop.f32.mrf.mxu0
      %v1062 = vadd.f32 0.0, %v1061
      %1063 = vmatmul.f32.gmra.mxu0 %v1040
      %v1064 = vpop.f32.mrf.mxu0
      %v1065 = vadd.f32 0.0, %v1064
      %1066 = vdwg.mxu0
      %1069 = vrot.lane.b32.xlu0 %v1062, 16
      %v1070 = vpop.permute.xlu0 %1069
      %1071 = vrot.lane.b32.xlu0 %v1065, 16
      %v1072 = vpop.permute.xlu0 %1071
      %vm1075 = vcmask 195712
      %1076 = vst.msk [vmem:[#allocation4] sm:$0xff] %vm1075, %v1070
      %vm1077 = vcmask 188544
      %1078 = vst.msk [vmem:[#allocation4 + $0x8] sm:$0x1] %vm1077, %v1072
      %v1079 = vld [vmem:[#allocation3] sm:$0xff]
      %v1080 = vld [vmem:[#allocation3 + $0x8] sm:$0x1]
      %1083 = vrot.lane.b32.xlu0 %v1079, 104
      %v1084 = vpop.permute.xlu0 %1083
      %1085 = vrot.lane.b32.xlu0 %v1080, 104
      %v1086 = vpop.permute.xlu0 %1085
      %1087 = vrot.lane.b32.xlu0 %v1079, 72
      %v1088 = vpop.permute.xlu0 %1087
      %1089 = vrot.lane.b32.xlu0 %v1080, 72
      %v1090 = vpop.permute.xlu0 %1089
      %v1091 = vsel %vm751, %v1084, 0
      %v1093 = vsel %vm751, %v1086, 0
      %v1095 = vsel %vm751, %v1088, 0
      %v1097 = vsel %vm751, %v1090, 0
      %1099 = vmatpush.xpose.msra.mxu0 0.0
      %1100 = vmatpush.xpose.msra.mxu0 0.0
      %1101 = vmatpush.xpose.msra.mxu0 0.0
      %1102 = vmatpush.xpose.msra.mxu0 0.0
      %1103 = vmatpush.xpose.msra.mxu0 0.0
      %1104 = vmatpush.xpose.msra.mxu0 0.0
      %1105 = vmatpush.xpose.msra.mxu0 0.0
      %1106 = vmatpush.xpose.msra.mxu0 0.0
      %1107 = vmatpush.xpose.msra.mxu0 0.0
      %1108 = vmatpush.xpose.msra.mxu0 0.0
      %1109 = vmatpush.xpose.msra.mxu0 0.0
      %1110 = vmatpush.xpose.msra.mxu0 0.0
      %1111 = vmatpush.xpose.msra.mxu0 0.0
      %1112 = vmatpush.xpose.msra.mxu0 0.0
      %1113 = vmatpush.xpose.msra.mxu0 %v1097
      %1114 = vmatpush.xpose.msra.mxu0 %v1095
      %1115 = vmatmul.f32.gmra.mxu0 %v1091
      %v1116 = vpop.f32.mrf.mxu0
      %v1117 = vadd.f32 0.0, %v1116
      %1118 = vmatmul.f32.gmra.mxu0 %v1093
      %v1119 = vpop.f32.mrf.mxu0
      %v1120 = vadd.f32 0.0, %v1119
      %1121 = vdwg.mxu0
      %v1122 = vmul.f32 %v1117, 0.35355338
      %v1123 = vmul.f32 %v1120, 0.35355338
      %v1124 = vsel %vm785, %v1122, -inf
      %1125 = vmax.xlane.f32.xlu0 %v1124
      %v1126 = vpop.xlane.xlu0 %1125
      %v1127 = vsel %vm789, %v1123, -inf
      %1128 = vmax.xlane.f32.xlu0 %v1127
      %v1129 = vpop.xlane.xlu0 %1128
      %v1130 = vsub.f32 %v1122, %v1126
      %v1131 = vsub.f32 %v1123, %v1129
      %v1132 = vmul.f32 %v1130, 1.442695
      %v1133 = vpow.pop %v1132
      %v1134 = vmul.f32 %v1131, 1.442695
      %v1135 = vpow.pop %v1134
      %v1136 = vsel %vm785, %v1133, 0.0
      %1137 = vadd.xlane.f32.xlu0 %v1136
      %v1138 = vpop.xlane.xlu0 %1137
      %v1139 = vsel %vm789, %v1135, 0.0
      %1140 = vadd.xlane.f32.xlu0 %v1139
      %v1141 = vpop.xlane.xlu0 %1140
      %v1142 = vrcp.pop %v1138
      %v1143 = vrcp.pop %v1141
      %v1144 = vmul.f32 %v1133, %v1142
      %v1145 = vmul.f32 %v1135, %v1143
      %1146 = vrot.lane.b32.xlu0 %v1079, 40
      %v1147 = vpop.permute.xlu0 %1146
      %1148 = vrot.lane.b32.xlu0 %v1080, 40
      %v1149 = vpop.permute.xlu0 %1148
      %v1152 = vsel %vm785, %v1144, 0
      %v1155 = vsel %vm785, %v1145, 0
      %v1157 = vsel %vm820, %v1149, 0
      %1159 = vmatpush.msra.mxu0 0.0
      %1160 = vmatpush.msra.mxu0 0.0
      %1161 = vmatpush.msra.mxu0 0.0
      %1162 = vmatpush.msra.mxu0 0.0
      %1163 = vmatpush.msra.mxu0 0.0
      %1164 = vmatpush.msra.mxu0 0.0
      %1165 = vmatpush.msra.mxu0 0.0
      %1166 = vmatpush.msra.mxu0 0.0
      %1167 = vmatpush.msra.mxu0 0.0
      %1168 = vmatpush.msra.mxu0 0.0
      %1169 = vmatpush.msra.mxu0 0.0
      %1170 = vmatpush.msra.mxu0 0.0
      %1171 = vmatpush.msra.mxu0 0.0
      %1172 = vmatpush.msra.mxu0 0.0
      %1173 = vmatpush.msra.mxu0 %v1157
      %1174 = vmatpush.msra.mxu0 %v1147
      %1175 = vmatmul.f32.gmra.mxu0 %v1152
      %v1176 = vpop.f32.mrf.mxu0
      %v1177 = vadd.f32 0.0, %v1176
      %1178 = vmatmul.f32.gmra.mxu0 %v1155
      %v1179 = vpop.f32.mrf.mxu0
      %v1180 = vadd.f32 0.0, %v1179
      %1181 = vdwg.mxu0
      %1184 = vrot.lane.b32.xlu0 %v1177, 24
      %v1185 = vpop.permute.xlu0 %1184
      %1186 = vrot.lane.b32.xlu0 %v1180, 24
      %v1187 = vpop.permute.xlu0 %1186
      %vm1190 = vcmask 261312
      %1191 = vst.msk [vmem:[#allocation4] sm:$0xff] %vm1190, %v1185
      %vm1192 = vcmask 254144
      %1193 = vst.msk [vmem:[#allocation4 + $0x8] sm:$0x1] %vm1192, %v1187
      %v1194 = vld [vmem:[#allocation3 + $0x9] sm:$0xff]
      %v1195 = vld [vmem:[#allocation3 + $0x11] sm:$0x1]
      %1198 = vrot.lane.b32.xlu0 %v1194, 96
      %v1199 = vpop.permute.xlu0 %1198
      %1200 = vrot.lane.b32.xlu0 %v1195, 96
      %v1201 = vpop.permute.xlu0 %1200
      %v1202 = vsel %vm751, %v1194, 0
      %v1204 = vsel %vm751, %v1195, 0
      %v1206 = vsel %vm751, %v1199, 0
      %v1208 = vsel %vm751, %v1201, 0
      %1210 = vmatpush.xpose.msra.mxu0 0.0
      %1211 = vmatpush.xpose.msra.mxu0 0.0
      %1212 = vmatpush.xpose.msra.mxu0 0.0
      %1213 = vmatpush.xpose.msra.mxu0 0.0
      %1214 = vmatpush.xpose.msra.mxu0 0.0
      %1215 = vmatpush.xpose.msra.mxu0 0.0
      %1216 = vmatpush.xpose.msra.mxu0 0.0
      %1217 = vmatpush.xpose.msra.mxu0 0.0
      %1218 = vmatpush.xpose.msra.mxu0 0.0
      %1219 = vmatpush.xpose.msra.mxu0 0.0
      %1220 = vmatpush.xpose.msra.mxu0 0.0
      %1221 = vmatpush.xpose.msra.mxu0 0.0
      %1222 = vmatpush.xpose.msra.mxu0 0.0
      %1223 = vmatpush.xpose.msra.mxu0 0.0
      %1224 = vmatpush.xpose.msra.mxu0 %v1208
      %1225 = vmatpush.xpose.msra.mxu0 %v1206
      %1226 = vmatmul.f32.gmra.mxu0 %v1202
      %v1227 = vpop.f32.mrf.mxu0
      %v1228 = vadd.f32 0.0, %v1227
      %1229 = vmatmul.f32.gmra.mxu0 %v1204
      %v1230 = vpop.f32.mrf.mxu0
      %v1231 = vadd.f32 0.0, %v1230
      %1232 = vdwg.mxu0
      %v1233 = vmul.f32 %v1228, 0.35355338
      %v1234 = vmul.f32 %v1231, 0.35355338
      %v1235 = vsel %vm785, %v1233, -inf
      %1236 = vmax.xlane.f32.xlu0 %v1235
      %v1237 = vpop.xlane.xlu0 %1236
      %v1238 = vsel %vm789, %v1234, -inf
      %1239 = vmax.xlane.f32.xlu0 %v1238
      %v1240 = vpop.xlane.xlu0 %1239
      %v1241 = vsub.f32 %v1233, %v1237
      %v1242 = vsub.f32 %v1234, %v1240
      %v1243 = vmul.f32 %v1241, 1.442695
      %v1244 = vpow.pop %v1243
      %v1245 = vmul.f32 %v1242, 1.442695
      %v1246 = vpow.pop %v1245
      %v1247 = vsel %vm785, %v1244, 0.0
      %1248 = vadd.xlane.f32.xlu0 %v1247
      %v1249 = vpop.xlane.xlu0 %1248
      %v1250 = vsel %vm789, %v1246, 0.0
      %1251 = vadd.xlane.f32.xlu0 %v1250
      %v1252 = vpop.xlane.xlu0 %1251
      %v1253 = vrcp.pop %v1249
      %v1254 = vrcp.pop %v1252
      %v1255 = vmul.f32 %v1244, %v1253
      %v1256 = vmul.f32 %v1246, %v1254
      %1257 = vrot.lane.b32.xlu0 %v1194, 64
      %v1258 = vpop.permute.xlu0 %1257
      %1259 = vrot.lane.b32.xlu0 %v1195, 64
      %v1260 = vpop.permute.xlu0 %1259
      %v1263 = vsel %vm785, %v1255, 0
      %v1266 = vsel %vm785, %v1256, 0
      %v1268 = vsel %vm820, %v1260, 0
      %1270 = vmatpush.msra.mxu0 0.0
      %1271 = vmatpush.msra.mxu0 0.0
      %1272 = vmatpush.msra.mxu0 0.0
      %1273 = vmatpush.msra.mxu0 0.0
      %1274 = vmatpush.msra.mxu0 0.0
      %1275 = vmatpush.msra.mxu0 0.0
      %1276 = vmatpush.msra.mxu0 0.0
      %1277 = vmatpush.msra.mxu0 0.0
      %1278 = vmatpush.msra.mxu0 0.0
      %1279 = vmatpush.msra.mxu0 0.0
      %1280 = vmatpush.msra.mxu0 0.0
      %1281 = vmatpush.msra.mxu0 0.0
      %1282 = vmatpush.msra.mxu0 0.0
      %1283 = vmatpush.msra.mxu0 0.0
      %1284 = vmatpush.msra.mxu0 %v1268
      %1285 = vmatpush.msra.mxu0 %v1258
      %1286 = vmatmul.f32.gmra.mxu0 %v1263
      %v1287 = vpop.f32.mrf.mxu0
      %v1288 = vadd.f32 0.0, %v1287
      %1289 = vmatmul.f32.gmra.mxu0 %v1266
      %v1290 = vpop.f32.mrf.mxu0
      %v1291 = vadd.f32 0.0, %v1290
      %1292 = vdwg.mxu0
      %1293 = vst.msk [vmem:[#allocation4 + $0x9] sm:$0xff] %vm751, %v1288
      %1294 = vst.msk [vmem:[#allocation4 + $0x11] sm:$0x1] %vm847, %v1291
      %v1295 = vld [vmem:[#allocation3 + $0x9] sm:$0xff]
      %v1296 = vld [vmem:[#allocation3 + $0x11] sm:$0x1]
      %1299 = vrot.lane.b32.xlu0 %v1295, 120
      %v1300 = vpop.permute.xlu0 %1299
      %1301 = vrot.lane.b32.xlu0 %v1296, 120
      %v1302 = vpop.permute.xlu0 %1301
      %1303 = vrot.lane.b32.xlu0 %v1295, 88
      %v1304 = vpop.permute.xlu0 %1303
      %1305 = vrot.lane.b32.xlu0 %v1296, 88
      %v1306 = vpop.permute.xlu0 %1305
      %v1307 = vsel %vm751, %v1300, 0
      %v1309 = vsel %vm751, %v1302, 0
      %v1311 = vsel %vm751, %v1304, 0
      %v1313 = vsel %vm751, %v1306, 0
      %1315 = vmatpush.xpose.msra.mxu0 0.0
      %1316 = vmatpush.xpose.msra.mxu0 0.0
      %1317 = vmatpush.xpose.msra.mxu0 0.0
      %1318 = vmatpush.xpose.msra.mxu0 0.0
      %1319 = vmatpush.xpose.msra.mxu0 0.0
      %1320 = vmatpush.xpose.msra.mxu0 0.0
      %1321 = vmatpush.xpose.msra.mxu0 0.0
      %1322 = vmatpush.xpose.msra.mxu0 0.0
      %1323 = vmatpush.xpose.msra.mxu0 0.0
      %1324 = vmatpush.xpose.msra.mxu0 0.0
      %1325 = vmatpush.xpose.msra.mxu0 0.0
      %1326 = vmatpush.xpose.msra.mxu0 0.0
      %1327 = vmatpush.xpose.msra.mxu0 0.0
      %1328 = vmatpush.xpose.msra.mxu0 0.0
      %1329 = vmatpush.xpose.msra.mxu0 %v1313
      %1330 = vmatpush.xpose.msra.mxu0 %v1311
      %1331 = vmatmul.f32.gmra.mxu0 %v1307
      %v1332 = vpop.f32.mrf.mxu0
      %v1333 = vadd.f32 0.0, %v1332
      %1334 = vmatmul.f32.gmra.mxu0 %v1309
      %v1335 = vpop.f32.mrf.mxu0
      %v1336 = vadd.f32 0.0, %v1335
      %1337 = vdwg.mxu0
      %v1338 = vmul.f32 %v1333, 0.35355338
      %v1339 = vmul.f32 %v1336, 0.35355338
      %v1340 = vsel %vm785, %v1338, -inf
      %1341 = vmax.xlane.f32.xlu0 %v1340
      %v1342 = vpop.xlane.xlu0 %1341
      %v1343 = vsel %vm789, %v1339, -inf
      %1344 = vmax.xlane.f32.xlu0 %v1343
      %v1345 = vpop.xlane.xlu0 %1344
      %v1346 = vsub.f32 %v1338, %v1342
      %v1347 = vsub.f32 %v1339, %v1345
      %v1348 = vmul.f32 %v1346, 1.442695
      %v1349 = vpow.pop %v1348
      %v1350 = vmul.f32 %v1347, 1.442695
      %v1351 = vpow.pop %v1350
      %v1352 = vsel %vm785, %v1349, 0.0
      %1353 = vadd.xlane.f32.xlu0 %v1352
      %v1354 = vpop.xlane.xlu0 %1353
      %v1355 = vsel %vm789, %v1351, 0.0
      %1356 = vadd.xlane.f32.xlu0 %v1355
      %v1357 = vpop.xlane.xlu0 %1356
      %v1358 = vrcp.pop %v1354
      %v1359 = vrcp.pop %v1357
      %v1360 = vmul.f32 %v1349, %v1358
      %v1361 = vmul.f32 %v1351, %v1359
      %1362 = vrot.lane.b32.xlu0 %v1295, 56
      %v1363 = vpop.permute.xlu0 %1362
      %1364 = vrot.lane.b32.xlu0 %v1296, 56
      %v1365 = vpop.permute.xlu0 %1364
      %v1368 = vsel %vm785, %v1360, 0
      %v1371 = vsel %vm785, %v1361, 0
      %v1373 = vsel %vm820, %v1365, 0
      %1375 = vmatpush.msra.mxu0 0.0
      %1376 = vmatpush.msra.mxu0 0.0
      %1377 = vmatpush.msra.mxu0 0.0
      %1378 = vmatpush.msra.mxu0 0.0
      %1379 = vmatpush.msra.mxu0 0.0
      %1380 = vmatpush.msra.mxu0 0.0
      %1381 = vmatpush.msra.mxu0 0.0
      %1382 = vmatpush.msra.mxu0 0.0
      %1383 = vmatpush.msra.mxu0 0.0
      %1384 = vmatpush.msra.mxu0 0.0
      %1385 = vmatpush.msra.mxu0 0.0
      %1386 = vmatpush.msra.mxu0 0.0
      %1387 = vmatpush.msra.mxu0 0.0
      %1388 = vmatpush.msra.mxu0 0.0
      %1389 = vmatpush.msra.mxu0 %v1373
      %1390 = vmatpush.msra.mxu0 %v1363
      %1391 = vmatmul.f32.gmra.mxu0 %v1368
      %v1392 = vpop.f32.mrf.mxu0
      %v1393 = vadd.f32 0.0, %v1392
      %1394 = vmatmul.f32.gmra.mxu0 %v1371
      %v1395 = vpop.f32.mrf.mxu0
      %v1396 = vadd.f32 0.0, %v1395
      %1397 = vdwg.mxu0
      %1400 = vrot.lane.b32.xlu0 %v1393, 8
      %v1401 = vpop.permute.xlu0 %1400
      %1402 = vrot.lane.b32.xlu0 %v1396, 8
      %v1403 = vpop.permute.xlu0 %1402
      %1406 = vst.msk [vmem:[#allocation4 + $0x9] sm:$0xff] %vm960, %v1401
      %1407 = vst.msk [vmem:[#allocation4 + $0x11] sm:$0x1] %vm962, %v1403
      %v1408 = vld [vmem:[#allocation3 + $0x9] sm:$0xff]
      %v1409 = vld [vmem:[#allocation3 + $0x11] sm:$0x1]
      %1412 = vrot.lane.b32.xlu0 %v1408, 112
      %v1413 = vpop.permute.xlu0 %1412
      %1414 = vrot.lane.b32.xlu0 %v1409, 112
      %v1415 = vpop.permute.xlu0 %1414
      %1416 = vrot.lane.b32.xlu0 %v1408, 80
      %v1417 = vpop.permute.xlu0 %1416
      %1418 = vrot.lane.b32.xlu0 %v1409, 80
      %v1419 = vpop.permute.xlu0 %1418
      %v1420 = vsel %vm751, %v1413, 0
      %v1422 = vsel %vm751, %v1415, 0
      %v1424 = vsel %vm751, %v1417, 0
      %v1426 = vsel %vm751, %v1419, 0
      %1428 = vmatpush.xpose.msra.mxu0 0.0
      %1429 = vmatpush.xpose.msra.mxu0 0.0
      %1430 = vmatpush.xpose.msra.mxu0 0.0
      %1431 = vmatpush.xpose.msra.mxu0 0.0
      %1432 = vmatpush.xpose.msra.mxu0 0.0
      %1433 = vmatpush.xpose.msra.mxu0 0.0
      %1434 = vmatpush.xpose.msra.mxu0 0.0
      %1435 = vmatpush.xpose.msra.mxu0 0.0
      %1436 = vmatpush.xpose.msra.mxu0 0.0
      %1437 = vmatpush.xpose.msra.mxu0 0.0
      %1438 = vmatpush.xpose.msra.mxu0 0.0
      %1439 = vmatpush.xpose.msra.mxu0 0.0
      %1440 = vmatpush.xpose.msra.mxu0 0.0
      %1441 = vmatpush.xpose.msra.mxu0 0.0
      %1442 = vmatpush.xpose.msra.mxu0 %v1426
      %1443 = vmatpush.xpose.msra.mxu0 %v1424
      %1444 = vmatmul.f32.gmra.mxu0 %v1420
      %v1445 = vpop.f32.mrf.mxu0
      %v1446 = vadd.f32 0.0, %v1445
      %1447 = vmatmul.f32.gmra.mxu0 %v1422
      %v1448 = vpop.f32.mrf.mxu0
      %v1449 = vadd.f32 0.0, %v1448
      %1450 = vdwg.mxu0
      %v1451 = vmul.f32 %v1446, 0.35355338
      %v1452 = vmul.f32 %v1449, 0.35355338
      %v1453 = vsel %vm785, %v1451, -inf
      %1454 = vmax.xlane.f32.xlu0 %v1453
      %v1455 = vpop.xlane.xlu0 %1454
      %v1456 = vsel %vm789, %v1452, -inf
      %1457 = vmax.xlane.f32.xlu0 %v1456
      %v1458 = vpop.xlane.xlu0 %1457
      %v1459 = vsub.f32 %v1451, %v1455
      %v1460 = vsub.f32 %v1452, %v1458
      %v1461 = vmul.f32 %v1459, 1.442695
      %v1462 = vpow.pop %v1461
      %v1463 = vmul.f32 %v1460, 1.442695
      %v1464 = vpow.pop %v1463
      %v1465 = vsel %vm785, %v1462, 0.0
      %1466 = vadd.xlane.f32.xlu0 %v1465
      %v1467 = vpop.xlane.xlu0 %1466
      %v1468 = vsel %vm789, %v1464, 0.0
      %1469 = vadd.xlane.f32.xlu0 %v1468
      %v1470 = vpop.xlane.xlu0 %1469
      %v1471 = vrcp.pop %v1467
      %v1472 = vrcp.pop %v1470
      %v1473 = vmul.f32 %v1462, %v1471
      %v1474 = vmul.f32 %v1464, %v1472
      %1475 = vrot.lane.b32.xlu0 %v1408, 48
      %v1476 = vpop.permute.xlu0 %1475
      %1477 = vrot.lane.b32.xlu0 %v1409, 48
      %v1478 = vpop.permute.xlu0 %1477
      %v1481 = vsel %vm785, %v1473, 0
      %v1484 = vsel %vm785, %v1474, 0
      %v1486 = vsel %vm820, %v1478, 0
      %1488 = vmatpush.msra.mxu0 0.0
      %1489 = vmatpush.msra.mxu0 0.0
      %1490 = vmatpush.msra.mxu0 0.0
      %1491 = vmatpush.msra.mxu0 0.0
      %1492 = vmatpush.msra.mxu0 0.0
      %1493 = vmatpush.msra.mxu0 0.0
      %1494 = vmatpush.msra.mxu0 0.0
      %1495 = vmatpush.msra.mxu0 0.0
      %1496 = vmatpush.msra.mxu0 0.0
      %1497 = vmatpush.msra.mxu0 0.0
      %1498 = vmatpush.msra.mxu0 0.0
      %1499 = vmatpush.msra.mxu0 0.0
      %1500 = vmatpush.msra.mxu0 0.0
      %1501 = vmatpush.msra.mxu0 0.0
      %1502 = vmatpush.msra.mxu0 %v1486
      %1503 = vmatpush.msra.mxu0 %v1476
      %1504 = vmatmul.f32.gmra.mxu0 %v1481
      %v1505 = vpop.f32.mrf.mxu0
      %v1506 = vadd.f32 0.0, %v1505
      %1507 = vmatmul.f32.gmra.mxu0 %v1484
      %v1508 = vpop.f32.mrf.mxu0
      %v1509 = vadd.f32 0.0, %v1508
      %1510 = vdwg.mxu0
      %1513 = vrot.lane.b32.xlu0 %v1506, 16
      %v1514 = vpop.permute.xlu0 %1513
      %1515 = vrot.lane.b32.xlu0 %v1509, 16
      %v1516 = vpop.permute.xlu0 %1515
      %1519 = vst.msk [vmem:[#allocation4 + $0x9] sm:$0xff] %vm1075, %v1514
      %1520 = vst.msk [vmem:[#allocation4 + $0x11] sm:$0x1] %vm1077, %v1516
      %v1521 = vld [vmem:[#allocation3 + $0x9] sm:$0xff]
      %v1522 = vld [vmem:[#allocation3 + $0x11] sm:$0x1]
      %1525 = vrot.lane.b32.xlu0 %v1521, 104
      %v1526 = vpop.permute.xlu0 %1525
      %1527 = vrot.lane.b32.xlu0 %v1522, 104
      %v1528 = vpop.permute.xlu0 %1527
      %1529 = vrot.lane.b32.xlu0 %v1521, 72
      %v1530 = vpop.permute.xlu0 %1529
      %1531 = vrot.lane.b32.xlu0 %v1522, 72
      %v1532 = vpop.permute.xlu0 %1531
      %v1533 = vsel %vm751, %v1526, 0
      %v1535 = vsel %vm751, %v1528, 0
      %v1537 = vsel %vm751, %v1530, 0
      %v1539 = vsel %vm751, %v1532, 0
      %1541 = vmatpush.xpose.msra.mxu0 0.0
      %1542 = vmatpush.xpose.msra.mxu0 0.0
      %1543 = vmatpush.xpose.msra.mxu0 0.0
      %1544 = vmatpush.xpose.msra.mxu0 0.0
      %1545 = vmatpush.xpose.msra.mxu0 0.0
      %1546 = vmatpush.xpose.msra.mxu0 0.0
      %1547 = vmatpush.xpose.msra.mxu0 0.0
      %1548 = vmatpush.xpose.msra.mxu0 0.0
      %1549 = vmatpush.xpose.msra.mxu0 0.0
      %1550 = vmatpush.xpose.msra.mxu0 0.0
      %1551 = vmatpush.xpose.msra.mxu0 0.0
      %1552 = vmatpush.xpose.msra.mxu0 0.0
      %1553 = vmatpush.xpose.msra.mxu0 0.0
      %1554 = vmatpush.xpose.msra.mxu0 0.0
      %1555 = vmatpush.xpose.msra.mxu0 %v1539
      %1556 = vmatpush.xpose.msra.mxu0 %v1537
      %1557 = vmatmul.f32.gmra.mxu0 %v1533
      %v1558 = vpop.f32.mrf.mxu0
      %v1559 = vadd.f32 0.0, %v1558
      %1560 = vmatmul.f32.gmra.mxu0 %v1535
      %v1561 = vpop.f32.mrf.mxu0
      %v1562 = vadd.f32 0.0, %v1561
      %1563 = vdwg.mxu0
      %v1564 = vmul.f32 %v1559, 0.35355338
      %v1565 = vmul.f32 %v1562, 0.35355338
      %v1566 = vsel %vm785, %v1564, -inf
      %1567 = vmax.xlane.f32.xlu0 %v1566
      %v1568 = vpop.xlane.xlu0 %1567
      %v1569 = vsel %vm789, %v1565, -inf
      %1570 = vmax.xlane.f32.xlu0 %v1569
      %v1571 = vpop.xlane.xlu0 %1570
      %v1572 = vsub.f32 %v1564, %v1568
      %v1573 = vsub.f32 %v1565, %v1571
      %v1574 = vmul.f32 %v1572, 1.442695
      %v1575 = vpow.pop %v1574
      %v1576 = vmul.f32 %v1573, 1.442695
      %v1577 = vpow.pop %v1576
      %v1578 = vsel %vm785, %v1575, 0.0
      %1579 = vadd.xlane.f32.xlu0 %v1578
      %v1580 = vpop.xlane.xlu0 %1579
      %v1581 = vsel %vm789, %v1577, 0.0
      %1582 = vadd.xlane.f32.xlu0 %v1581
      %v1583 = vpop.xlane.xlu0 %1582
      %v1584 = vrcp.pop %v1580
      %v1585 = vrcp.pop %v1583
      %v1586 = vmul.f32 %v1575, %v1584
      %v1587 = vmul.f32 %v1577, %v1585
      %1588 = vrot.lane.b32.xlu0 %v1521, 40
      %v1589 = vpop.permute.xlu0 %1588
      %1590 = vrot.lane.b32.xlu0 %v1522, 40
      %v1591 = vpop.permute.xlu0 %1590
      %v1594 = vsel %vm785, %v1586, 0
      %v1597 = vsel %vm785, %v1587, 0
      %v1599 = vsel %vm820, %v1591, 0
      %1601 = vmatpush.msra.mxu0 0.0
      %1602 = vmatpush.msra.mxu0 0.0
      %1603 = vmatpush.msra.mxu0 0.0
      %1604 = vmatpush.msra.mxu0 0.0
      %1605 = vmatpush.msra.mxu0 0.0
      %1606 = vmatpush.msra.mxu0 0.0
      %1607 = vmatpush.msra.mxu0 0.0
      %1608 = vmatpush.msra.mxu0 0.0
      %1609 = vmatpush.msra.mxu0 0.0
      %1610 = vmatpush.msra.mxu0 0.0
      %1611 = vmatpush.msra.mxu0 0.0
      %1612 = vmatpush.msra.mxu0 0.0
      %1613 = vmatpush.msra.mxu0 0.0
      %1614 = vmatpush.msra.mxu0 0.0
      %1615 = vmatpush.msra.mxu0 %v1599
      %1616 = vmatpush.msra.mxu0 %v1589
      %1617 = vmatmul.f32.gmra.mxu0 %v1594
      %v1618 = vpop.f32.mrf.mxu0
      %v1619 = vadd.f32 0.0, %v1618
      %1620 = vmatmul.f32.gmra.mxu0 %v1597
      %v1621 = vpop.f32.mrf.mxu0
      %v1622 = vadd.f32 0.0, %v1621
      %1623 = vdwg.mxu0
      %1626 = vrot.lane.b32.xlu0 %v1619, 24
      %v1627 = vpop.permute.xlu0 %1626
      %1628 = vrot.lane.b32.xlu0 %v1622, 24
      %v1629 = vpop.permute.xlu0 %1628
      %1632 = vst.msk [vmem:[#allocation4 + $0x9] sm:$0xff] %vm1190, %v1627
      %1633 = vst.msk [vmem:[#allocation4 + $0x11] sm:$0x1] %vm1192, %v1629
      %v1634 = vld [vmem:[#allocation4] sm:$0xff]
      %v1635 = vld [vmem:[#allocation4 + $0x8] sm:$0xff]
      %v1636 = vld [vmem:[#allocation4 + $0x10] sm:$0x3]
      %v1637 = vld [vmem:[%s572] sm:$0xff]
      %v1638 = vld [vmem:[%s572 + $0x8] sm:$0xff]
      %v1639 = vld [vmem:[%s572 + $0x10] sm:$0xff]
      %v1640 = vld [vmem:[%s572 + $0x18] sm:$0xff]
      %v1641 = vld [vmem:[%s575] sm:$0x1]
      %v1643 = vperm.slane %v1641, 0
      %v1646 = vsel %vm615, %v1634, 0
      %v1649 = vsel %vm615, %v1635, 0
      %v1652 = vsel %vm615, %v1636, 0
      %1654 = vmatpush.msra.mxu0 0.0
      %1655 = vmatpush.msra.mxu0 0.0
      %1656 = vmatpush.msra.mxu0 0.0
      %1657 = vmatpush.msra.mxu0 0.0
      %1658 = vmatpush.msra.mxu0 0.0
      %1659 = vmatpush.msra.mxu0 0.0
      %1660 = vmatpush.msra.mxu0 0.0
      %1661 = vmatpush.msra.mxu0 0.0
      %1662 = vmatpush.msra.mxu0 0.0
      %1663 = vmatpush.msra.mxu0 0.0
      %1664 = vmatpush.msra.mxu0 0.0
      %1665 = vmatpush.msra.mxu0 0.0
      %1666 = vmatpush.msra.mxu0 %v1640
      %1667 = vmatpush.msra.mxu0 %v1639
      %1668 = vmatpush.msra.mxu0 %v1638
      %1669 = vmatpush.msra.mxu0 %v1637
      %1670 = vmatmul.f32.gmra.mxu0 %v1646
      %v1671 = vpop.f32.mrf.mxu0
      %v1672 = vadd.f32 %v1643, %v1671
      %1673 = vmatmul.f32.gmra.mxu0 %v1649
      %v1674 = vpop.f32.mrf.mxu0
      %v1675 = vadd.f32 %v1643, %v1674
      %1676 = vmatmul.f32.gmra.mxu0 %v1652
      %v1677 = vpop.f32.mrf.mxu0
      %v1678 = vadd.f32 %v1643, %v1677
      %1679 = vdwg.mxu0
      %v1680 = vadd.f32 %v610, %v1672
      %v1681 = vadd.f32 %v611, %v1675
      %v1682 = vadd.f32 %v612, %v1678
      %v1683 = vld [vmem:[%s578] sm:$0x1]
      %v1684 = vld [vmem:[%s581] sm:$0x1]
      %v1685 = vsel %vm615, %v1680, 0.0
      %1686 = vadd.xlane.f32.xlu0 %v1685
      %v1687 = vpop.xlane.xlu0 %1686
      %v1688 = vsel %vm615, %v1681, 0.0
      %1689 = vadd.xlane.f32.xlu0 %v1688
      %v1690 = vpop.xlane.xlu0 %1689
      %v1691 = vsel %vm622, %v1682, 0.0
      %1692 = vadd.xlane.f32.xlu0 %v1691
      %v1693 = vpop.xlane.xlu0 %1692
      %v1694 = vmul.f32 %v1687, 0.03125
      %v1695 = vmul.f32 %v1690, 0.03125
      %v1696 = vmul.f32 %v1693, 0.03125
      %v1697 = vsub.f32 %v1680, %v1694
      %v1698 = vsub.f32 %v1681, %v1695
      %v1699 = vsub.f32 %v1682, %v1696
      %v1700 = vmul.f32 %v1697, %v1697
      %v1701 = vmul.f32 %v1698, %v1698
      %v1702 = vmul.f32 %v1699, %v1699
      %v1703 = vsel %vm615, %v1700, 0.0
      %1704 = vadd.xlane.f32.xlu0 %v1703
      %v1705 = vpop.xlane.xlu0 %1704
      %v1706 = vsel %vm615, %v1701, 0.0
      %1707 = vadd.xlane.f32.xlu0 %v1706
      %v1708 = vpop.xlane.xlu0 %1707
      %v1709 = vsel %vm622, %v1702, 0.0
      %1710 = vadd.xlane.f32.xlu0 %v1709
      %v1711 = vpop.xlane.xlu0 %1710
      %v1712 = vmul.f32 %v1705, 0.03125
      %v1713 = vmul.f32 %v1708, 0.03125
      %v1714 = vmul.f32 %v1711, 0.03125
      %v1715 = vadd.f32 %v1712, 1e-06
      %v1716 = vadd.f32 %v1713, 1e-06
      %v1717 = vadd.f32 %v1714, 1e-06
      %v1718 = vrsqrt.pop %v1715
      %v1719 = vmul.f32 %v1718, %v1715
      %v1720 = vmul.f32 %v1719, %v1718
      %v1721 = vmul.f32 0.5, %v1720
      %v1722 = vsub.f32 1.5, %v1721
      %v1723 = vmul.f32 %v1718, %v1722
      %vm1724 = vweird.f32 %v1715
      %vm1725 = vweird.f32 %v1718
      %vm1726 = vmor %vm1724, %vm1725
      %v1727 = vsel %vm1726, %v1718, %v1723
      %v1728 = vrsqrt.pop %v1716
      %v1729 = vmul.f32 %v1728, %v1716
      %v1730 = vmul.f32 %v1729, %v1728
      %v1731 = vmul.f32 0.5, %v1730
      %v1732 = vsub.f32 1.5, %v1731
      %v1733 = vmul.f32 %v1728, %v1732
      %vm1734 = vweird.f32 %v1716
      %vm1735 = vweird.f32 %v1728
      %vm1736 = vmor %vm1734, %vm1735
      %v1737 = vsel %vm1736, %v1728, %v1733
      %v1738 = vrsqrt.pop %v1717
      %v1739 = vmul.f32 %v1738, %v1717
      %v1740 = vmul.f32 %v1739, %v1738
      %v1741 = vmul.f32 0.5, %v1740
      %v1742 = vsub.f32 1.5, %v1741
      %v1743 = vmul.f32 %v1738, %v1742
      %vm1744 = vweird.f32 %v1717
      %vm1745 = vweird.f32 %v1738
      %vm1746 = vmor %vm1744, %vm1745
      %v1747 = vsel %vm1746, %v1738, %v1743
      %v1748 = vmul.f32 %v1697, %v1727
      %v1749 = vmul.f32 %v1698, %v1737
      %v1750 = vmul.f32 %v1699, %v1747
      %v1752 = vperm.slane %v1683, 0
      %v1754 = vmul.f32 %v1748, %v1752
      %v1755 = vmul.f32 %v1749, %v1752
      %v1756 = vmul.f32 %v1750, %v1752
      %v1758 = vperm.slane %v1684, 0
      %v1760 = vadd.f32 %v1754, %v1758
      %v1761 = vadd.f32 %v1755, %v1758
      %v1762 = vadd.f32 %v1756, %v1758
      %v1763 = vld [vmem:[%s586] sm:$0xff]
      %v1764 = vld [vmem:[%s586 + $0x8] sm:$0xff]
      %v1765 = vld [vmem:[%s586 + $0x10] sm:$0xff]
      %v1766 = vld [vmem:[%s586 + $0x18] sm:$0xff]
      %v1767 = vld [vmem:[%s589] sm:$0x1]
      %v1769 = vperm.slane %v1767, 0
      %v1772 = vsel %vm615, %v1760, 0
      %v1775 = vsel %vm615, %v1761, 0
      %v1778 = vsel %vm615, %v1762, 0
      %1780 = vmatpush.msra.mxu0 0.0
      %1781 = vmatpush.msra.mxu0 0.0
      %1782 = vmatpush.msra.mxu0 0.0
      %1783 = vmatpush.msra.mxu0 0.0
      %1784 = vmatpush.msra.mxu0 0.0
      %1785 = vmatpush.msra.mxu0 0.0
      %1786 = vmatpush.msra.mxu0 0.0
      %1787 = vmatpush.msra.mxu0 0.0
      %1788 = vmatpush.msra.mxu0 0.0
      %1789 = vmatpush.msra.mxu0 0.0
      %1790 = vmatpush.msra.mxu0 0.0
      %1791 = vmatpush.msra.mxu0 0.0
      %1792 = vmatpush.msra.mxu0 %v1766
      %1793 = vmatpush.msra.mxu0 %v1765
      %1794 = vmatpush.msra.mxu0 %v1764
      %1795 = vmatpush.msra.mxu0 %v1763
      %1796 = vmatmul.f32.gmra.mxu0 %v1772
      %v1797 = vpop.f32.mrf.mxu0
      %v1798 = vadd.f32 %v1769, %v1797
      %1799 = vmatmul.f32.gmra.mxu0 %v1775
      %v1800 = vpop.f32.mrf.mxu0
      %v1801 = vadd.f32 %v1769, %v1800
      %1802 = vmatmul.f32.gmra.mxu0 %v1778
      %v1803 = vpop.f32.mrf.mxu0
      %v1804 = vadd.f32 %v1769, %v1803
      %1805 = vdwg.mxu0
      %v1806 = vmul.f32 %v1798, 0.5
      %v1807 = vmul.f32 %v1801, 0.5
      %v1808 = vmul.f32 %v1804, 0.5
      %v1809 = vmul.f32 %v1798, 0.7978846
      %v1810 = vmul.f32 %v1801, 0.7978846
      %v1811 = vmul.f32 %v1804, 0.7978846
      %v1812 = vmul.f32 %v1798, 0.044715
      %v1813 = vmul.f32 %v1801, 0.044715
      %v1814 = vmul.f32 %v1804, 0.044715
      %v1815 = vmul.f32 %v1812, %v1798
      %v1816 = vmul.f32 %v1813, %v1801
      %v1817 = vmul.f32 %v1814, %v1804
      %v1818 = vadd.f32 %v1815, 1.0
      %v1819 = vadd.f32 %v1816, 1.0
      %v1820 = vadd.f32 %v1817, 1.0
      %v1821 = vmul.f32 %v1809, %v1818
      %v1822 = vmul.f32 %v1810, %v1819
      %v1823 = vmul.f32 %v1811, %v1820
      %v1824 = vtanh.pop %v1821
      %v1825 = vtanh.pop %v1822
      %v1826 = vtanh.pop %v1823
      %v1827 = vadd.f32 %v1824, 1.0
      %v1828 = vadd.f32 %v1825, 1.0
      %v1829 = vadd.f32 %v1826, 1.0
      %v1830 = vmul.f32 %v1806, %v1827
      %v1831 = vmul.f32 %v1807, %v1828
      %v1832 = vmul.f32 %v1808, %v1829
      %v1833 = vld [vmem:[%s594] sm:$0xff]
      %v1834 = vld [vmem:[%s594 + $0x8] sm:$0xff]
      %v1835 = vld [vmem:[%s594 + $0x10] sm:$0xff]
      %v1836 = vld [vmem:[%s594 + $0x18] sm:$0xff]
      %v1837 = vld [vmem:[%s594 + $0x20] sm:$0xff]
      %v1838 = vld [vmem:[%s594 + $0x28] sm:$0xff]
      %v1839 = vld [vmem:[%s594 + $0x30] sm:$0xff]
      %v1840 = vld [vmem:[%s594 + $0x38] sm:$0xff]
      %v1841 = vld [vmem:[%s597] sm:$0x1]
      %v1843 = vperm.slane %v1841, 0
      %vm1845 = vcmask 523264
      %v1847 = vsel %vm1845, %v1830, 0
      %v1850 = vsel %vm1845, %v1831, 0
      %v1853 = vsel %vm1845, %v1832, 0
      %1855 = vmatpush.msra.mxu0 0.0
      %1856 = vmatpush.msra.mxu0 0.0
      %1857 = vmatpush.msra.mxu0 0.0
      %1858 = vmatpush.msra.mxu0 0.0
      %1859 = vmatpush.msra.mxu0 0.0
      %1860 = vmatpush.msra.mxu0 0.0
      %1861 = vmatpush.msra.mxu0 0.0
      %1862 = vmatpush.msra.mxu0 0.0
      %1863 = vmatpush.msra.mxu0 %v1840
      %1864 = vmatpush.msra.mxu0 %v1839
      %1865 = vmatpush.msra.mxu0 %v1838
      %1866 = vmatpush.msra.mxu0 %v1837
      %1867 = vmatpush.msra.mxu0 %v1836
      %1868 = vmatpush.msra.mxu0 %v1835
      %1869 = vmatpush.msra.mxu0 %v1834
      %1870 = vmatpush.msra.mxu0 %v1833
      %1871 = vmatmul.f32.gmra.mxu0 %v1847
      %v1872 = vpop.f32.mrf.mxu0
      %v1873 = vadd.f32 %v1843, %v1872
      %1874 = vmatmul.f32.gmra.mxu0 %v1850
      %v1875 = vpop.f32.mrf.mxu0
      %v1876 = vadd.f32 %v1843, %v1875
      %1877 = vmatmul.f32.gmra.mxu0 %v1853
      %v1878 = vpop.f32.mrf.mxu0
      %v1879 = vadd.f32 %v1843, %v1878
      %1880 = vdwg.mxu0
      %v1881 = vadd.f32 %v1680, %v1873
      %v1882 = vadd.f32 %v1681, %v1876
      %v1883 = vadd.f32 %v1682, %v1879
      %1884 = vst.msk [vmem:[#allocation2] sm:$0xff] %vm615, %v1881
      %1885 = vst.msk [vmem:[#allocation2 + $0x8] sm:$0xff] %vm615, %v1882
      %1886 = vst.msk [vmem:[#allocation2 + $0x10] sm:$0x3] %vm622, %v1883
      %p1887 = scmp.eq.s32.totalorder %s24, 1
      // Predicated region
      $region77: #{vivit_forward.4} parent=71 // pred_check
        %p1888 = pneg %p1887
      $region78: #{vivit_forward.4} parent=71 // pred_check_branch
        %1890 = sbr.rel (%p1888) target = $region80
      $region79: #{vivit_forward.4} parent=71 // pred_region
        %1891 = vst.msk [vmem:[%s13] sm:$0xff] %vm615, %v1881
        %1892 = vst.msk [vmem:[%s13 + $0x8] sm:$0xff] %vm615, %v1882
        %1893 = vst.msk [vmem:[%s13 + $0x10] sm:$0x3] %vm622, %v1883
      $region80: #{vivit_forward.4} parent=71 // pred_fallthru
        _
      // Predicated region
      $region81: #{vivit_forward.4} parent=71 // pred_check
        %p1894 = pneg %p370
      $region82: #{vivit_forward.4} parent=71 // pred_check_branch
        %1896 = sbr.rel (%p1894) target = $region84
      $region83: #{vivit_forward.4} parent=71 // pred_region
        _
      $region84: #{vivit_forward.4} parent=71 // pred_fallthru
        _
      // Predicated region
      $region85: #{vivit_forward.4} parent=71 // pred_check
        %p1897 = pneg %p370
      $region86: #{vivit_forward.4} parent=71 // pred_check_branch
        %1899 = sbr.rel (%p1897) target = $region88
      $region87: #{vivit_forward.4} parent=71 // pred_region
        _
      $region88: #{vivit_forward.4} parent=71 // pred_fallthru
        _
    $region72: #{vivit_forward.4} parent=5 // pred_fallthru
      _
    %p1900 = scmp.le.s32.totalorder 2, %s19
    // Predicated region
    $region89: #{vivit_forward.4} parent=5 // pred_check
      %p1901 = pneg %p1900
    $region90: #{vivit_forward.4} parent=5 // pred_check_branch
      %1903 = sbr.rel (%p1901) target = $region92
    $region91: #{vivit_forward.4} parent=5 // pred_region
      %s1904 = ssub.s32 %s19, 2
    $region92: #{vivit_forward.4} parent=5 // pred_fallthru
      _
  $region6: #{vivit_forward.4} parent=0 // loop_footer
    %s23 = sadd.s32 1, %s19
  $region7: #{vivit_forward.4} parent=0 // loop_footer_branch
    %18 = sbr.rel target = $region3
  $region8: #{vivit_forward.4} parent=0 // loop_exit
    _

// kernel: vivit_forward.5
$region0: #{vivit_forward.5}
  #allocation0 [shape = 'u32[]', space=smem, size = 0x4, offset = 0x4, fixed_abs, tag = 'smem constant byte address 0x4 - core index']
  #allocation1 [shape = 'u32[72,128]{1,0:T(1,128)}', space=vmem, size = 0x9000, scoped, tag = 'internal scratch']
  #allocation2 [shape = 'f32[1,1]{1,0:T(1,128)S(1)}', space=vmem, size = 0x200, scoped, tag = 'scoped memory for vivit_forward.5']
  %s0 = inlined_call_operand.vmem [shape: f32[2,32], index: 0, kind: input, shape index: {}]
  %s1 = inlined_call_operand.vmem [shape: f32[1,32], index: 1, kind: input, shape index: {}]
  %s2 = inlined_call_operand.vmem [shape: f32[1,32], index: 2, kind: input, shape index: {}]
  %s3 = inlined_call_operand.vmem [shape: f32[32,1], index: 3, kind: input, shape index: {}]
  %s4 = inlined_call_operand.<no memory space> [shape: f32[1,1], index: 4, kind: input, shape index: {}]
  %s5 = inlined_call_operand.vmem [shape: f32[2,1], index: 5, kind: output, shape index: {}]
  %s6 = sld [smem:[#allocation0]]
  $region30: #{vivit_forward.5} parent=0
    _
  %s8 = ssub.s32 1, %s6
  %s9 = scalar_select 0, %s8, %s6
  %v10 = vstv %s4
  %11 = vst [vmem:[#allocation2] sm:$0x1] %v10
  // Predicated region
  $region2: #{vivit_forward.5} parent=0 // pred_check
    _
  $region3: #{vivit_forward.5} parent=0 // pred_check_branch
    %13 = sbr.rel (0) target = $region5
  $region4: #{vivit_forward.5} parent=0 // pred_region
    _
  $region5: #{vivit_forward.5} parent=0 // pred_fallthru
    _
  // Predicated region
  $region6: #{vivit_forward.5} parent=0 // pred_check
    _
  $region7: #{vivit_forward.5} parent=0 // pred_check_branch
    %15 = sbr.rel (0) target = $region9
  $region8: #{vivit_forward.5} parent=0 // pred_region
    _
  $region9: #{vivit_forward.5} parent=0 // pred_fallthru
    _
  // Predicated region
  $region10: #{vivit_forward.5} parent=0 // pred_check
    _
  $region11: #{vivit_forward.5} parent=0 // pred_check_branch
    %17 = sbr.rel (0) target = $region13
  $region12: #{vivit_forward.5} parent=0 // pred_region
    _
  $region13: #{vivit_forward.5} parent=0 // pred_fallthru
    _
  // Predicated region
  $region14: #{vivit_forward.5} parent=0 // pred_check
    _
  $region15: #{vivit_forward.5} parent=0 // pred_check_branch
    %19 = sbr.rel (0) target = $region17
  $region16: #{vivit_forward.5} parent=0 // pred_region
    _
  $region17: #{vivit_forward.5} parent=0 // pred_fallthru
    _
  // Predicated region
  $region18: #{vivit_forward.5} parent=0 // pred_check
    _
  $region19: #{vivit_forward.5} parent=0 // pred_check_branch
    %21 = sbr.rel (0) target = $region21
  $region20: #{vivit_forward.5} parent=0 // pred_region
    _
  $region21: #{vivit_forward.5} parent=0 // pred_fallthru
    _
  %v22 = vld [vmem:[%s0] sm:$0x3]
  %v23 = vld [vmem:[%s1] sm:$0x1]
  %v24 = vld [vmem:[%s2] sm:$0x1]
  %vm25 = vcmask 254976
  %v26 = vsel %vm25, %v22, 0.0
  %27 = vadd.xlane.f32.xlu0 %v26
  %v28 = vpop.xlane.xlu0 %27
  %v29 = vmul.f32 %v28, 0.03125
  %v30 = vsub.f32 %v22, %v29
  %v31 = vmul.f32 %v30, %v30
  %v32 = vsel %vm25, %v31, 0.0
  %33 = vadd.xlane.f32.xlu0 %v32
  %v34 = vpop.xlane.xlu0 %33
  %v35 = vmul.f32 %v34, 0.03125
  %v36 = vadd.f32 %v35, 1e-06
  %v37 = vrsqrt.pop %v36
  %v38 = vmul.f32 %v37, %v36
  %v39 = vmul.f32 %v38, %v37
  %v40 = vmul.f32 0.5, %v39
  %v41 = vsub.f32 1.5, %v40
  %v42 = vmul.f32 %v37, %v41
  %vm43 = vweird.f32 %v36
  %vm44 = vweird.f32 %v37
  %vm45 = vmor %vm43, %vm44
  %v46 = vsel %vm45, %v37, %v42
  %v47 = vmul.f32 %v30, %v46
  %v49 = vperm.slane %v23, 0
  %v51 = vmul.f32 %v47, %v49
  %v53 = vperm.slane %v24, 0
  %v55 = vadd.f32 %v51, %v53
  %v56 = vld [vmem:[%s3] sm:$0xff]
  %v57 = vld [vmem:[%s3 + $0x8] sm:$0xff]
  %v58 = vld [vmem:[%s3 + $0x10] sm:$0xff]
  %v59 = vld [vmem:[%s3 + $0x18] sm:$0xff]
  %v60 = vld [vmem:[#allocation2] sm:$0x1]
  %v62 = vperm.slane %v60, 0
  %vm64 = vcmask 261120
  %v66 = vsel %vm64, %v55, 0
  %68 = vmatpush.msra.mxu0 0.0
  %69 = vmatpush.msra.mxu0 0.0
  %70 = vmatpush.msra.mxu0 0.0
  %71 = vmatpush.msra.mxu0 0.0
  %72 = vmatpush.msra.mxu0 0.0
  %73 = vmatpush.msra.mxu0 0.0
  %74 = vmatpush.msra.mxu0 0.0
  %75 = vmatpush.msra.mxu0 0.0
  %76 = vmatpush.msra.mxu0 0.0
  %77 = vmatpush.msra.mxu0 0.0
  %78 = vmatpush.msra.mxu0 0.0
  %79 = vmatpush.msra.mxu0 0.0
  %80 = vmatpush.msra.mxu0 %v59
  %81 = vmatpush.msra.mxu0 %v58
  %82 = vmatpush.msra.mxu0 %v57
  %83 = vmatpush.msra.mxu0 %v56
  %84 = vmatmul.f32.gmra.mxu0 %v66
  %v85 = vpop.f32.mrf.mxu0
  %v86 = vadd.f32 %v62, %v85
  %87 = vdwg.mxu0
  %vm88 = vcmask 1024
  %89 = vst.msk [vmem:[%s5] sm:$0x3] %vm88, %v86
  // Predicated region
  $region22: #{vivit_forward.5} parent=0 // pred_check
    _
  $region23: #{vivit_forward.5} parent=0 // pred_check_branch
    %91 = sbr.rel (0) target = $region25
  $region24: #{vivit_forward.5} parent=0 // pred_region
    _
  $region25: #{vivit_forward.5} parent=0 // pred_fallthru
    _
  // Predicated region
  $region26: #{vivit_forward.5} parent=0 // pred_check
    _
  $region27: #{vivit_forward.5} parent=0 // pred_check_branch
    %93 = sbr.rel (0) target = $region29
  $region28: #{vivit_forward.5} parent=0 // pred_region
    _
  $region29: #{vivit_forward.5} parent=0 // pred_fallthru
    _

</llo_original>
